<compile_context>
chip_gen: v5e
topology: v5e:2x2
jax: 0.10.0
libtpu: 0.0.40
codegen_flags: <defaults>
</compile_context>

<pallas_src>
import functools

import jax
import jax.numpy as jnp
from jax import lax
from jax.experimental import pallas as pl
from jax.experimental.pallas import tpu as pltpu

MID = 512  # hardcoded intermediate channel count in the PyTorch module


def mam_kernel(offsets, xpad_ref, w_ref, b_ref, out_ref):
    # xpad_ref : (1, Hp, Wp, Cin)  padded input, one batch element (f32)
    # w_ref    : (T, Cin, Cout)    folded weights, one (Cin, Cout) matrix per
    #                              unique shifted-window offset (compute dtype)
    # b_ref    : (1, Cout)         folded bias (f32)
    # out_ref  : (1, H, W, Cout)   output for this batch element (f32)
    _, H, W, Cout = out_ref.shape
    Cin = xpad_ref.shape[-1]
    HW = H * W
    cdtype = w_ref.dtype

    xpad = xpad_ref[0]                                      # (Hp, Wp, Cin)

    # Register-resident accumulator, initialized from the folded bias
    # (broadcast hoisted out of the tap loop).
    acc = jnp.broadcast_to(b_ref[...].astype(jnp.float32), (HW, Cout))

    # Static unroll over the unique shifted windows of the padded input; each
    # tap is a single MXU matmul accumulated into `acc` as a value -- no VMEM
    # scratch round-trips, no per-tap stores.
    for t, (oy, ox) in enumerate(offsets):
        xs = xpad[oy:oy + H, ox:ox + W, :].reshape(HW, Cin).astype(cdtype)
        acc = acc + jnp.dot(xs, w_ref[t], preferred_element_type=jnp.float32)

    # Single fused ReLU + store (lane-dense: Cout == 128 -> unmasked vst).
    out_ref[...] = jnp.maximum(acc, 0.0).astype(out_ref.dtype).reshape(
        1, H, W, Cout)


def _fold_params(params, dilations, pad, compute_dtype):
    """Fold concat + 1x1 conv into the dilated-conv weights and dedupe taps."""
    wd, bd, w1, b1 = params
    # W_eff[b, ky, kx, ci, o] = sum_m wd[b, ky, kx, ci, m] * w1[b, m, o]
    w_eff = jnp.einsum('byxcm,bmo->byxco', wd, w1)          # (B, 3, 3, Cin, Cout)
    b_eff = b1[0] + jnp.einsum('bm,bmo->o', bd, w1)         # (Cout,)

    # Group taps by their (dy, dx) offset into the shared max-dilation padding;
    # taps that read the same shifted window (e.g. every branch's center tap)
    # get their folded weights summed, so the kernel does one matmul per
    # unique offset (25 instead of 27 for distinct dilations).
    tap_map = {}
    for b, d in enumerate(dilations):
        for ky in range(3):
            for kx in range(3):
                off = (pad + (ky - 1) * d, pad + (kx - 1) * d)
                tap_map.setdefault(off, []).append((b, ky, kx))
    offsets = tuple(tap_map.keys())
    w_taps = jnp.stack(
        [sum(w_eff[b, ky, kx] for (b, ky, kx) in taps)
         for taps in tap_map.values()])                     # (T, Cin, Cout)
    return offsets, w_taps.astype(compute_dtype), b_eff.reshape(1, -1)


def multi_atrous_forward(x_nchw, params, dilations,
                         compute_dtype=jnp.bfloat16):
    """Pallas implementation.  x_nchw: (N, Cin, H, W) f32 -> (N, Cout, H, W) f32.

    `compute_dtype` is the MXU operand dtype (weights + activation windows);
    accumulation is always f32.  bf16 is the fast path on v6e/v7x.
    """
    wd, bd, w1, b1 = params
    N, Cin, H, W = x_nchw.shape
    Cout = w1.shape[-1]
    pad = max(dilations)

    offsets, w_taps, b_eff = _fold_params(params, dilations, pad, compute_dtype)
    T = w_taps.shape[0]

    x_nhwc = jnp.transpose(x_nchw, (0, 2, 3, 1))
    xpad = jnp.pad(x_nhwc, ((0, 0), (pad, pad), (pad, pad), (0, 0)))
    Hp, Wp = H + 2 * pad, W + 2 * pad

    # TODO(synk): at real DOLG shapes (Cin~1024, H=W~32-64, Cout~512-1024) add
    # a spatial grid axis (tile H with halo rows), stream bf16 activations and
    # build a per-tile (tileHW, 9*Cin) im2col slab so each matmul contracts
    # over K = 9*Cin instead of Cin; at the toy shapes below the whole image
    # fits comfortably in VMEM and the per-tap matmuls are latency-negligible.
    kernel = functools.partial(mam_kernel, offsets)
    out_nhwc = pl.pallas_call(
        kernel,
        out_shape=jax.ShapeDtypeStruct((N, H, W, Cout), jnp.float32),
        grid=(N,),
        in_specs=[
            pl.BlockSpec((1, Hp, Wp, Cin), lambda n: (n, 0, 0, 0)),
            pl.BlockSpec((T, Cin, Cout), lambda n: (0, 0, 0)),
            pl.BlockSpec((1, Cout), lambda n: (0, 0)),
        ],
        out_specs=pl.BlockSpec((1, H, W, Cout), lambda n: (n, 0, 0, 0)),
        compiler_params=pltpu.CompilerParams(
            # Batch elements are independent -> shard the grid across
            # TensorCores (2 per chip on v7x; harmless on v5e/v6e).
            dimension_semantics=("parallel",),
            vmem_limit_bytes=32 * 1024 * 1024,
        ),
    )(xpad, w_taps, b_eff)

    return jnp.transpose(out_nhwc, (0, 3, 1, 2))


def reference(x_nchw, params, dilations):
    """Pure-JAX reference (lax conv) matching the PyTorch forward semantics."""
    wd, bd, w1, b1 = params
    x = jnp.transpose(x_nchw, (0, 2, 3, 1))
    dn = ('NHWC', 'HWIO', 'NHWC')
    branches = []
    for b, d in enumerate(dilations):
        y = lax.conv_general_dilated(
            x, wd[b], window_strides=(1, 1), padding='SAME',
            rhs_dilation=(d, d), dimension_numbers=dn) + bd[b]
        branches.append(y)
    cat = jnp.concatenate(branches, axis=-1)                 # (N,H,W,3*MID)
    w1cat = jnp.concatenate([w1[b] for b in range(len(dilations))], 0)
    out = jnp.einsum('nhwc,co->nhwo', cat, w1cat) + b1[0]
    out = jnp.maximum(out, 0.0)
    return jnp.transpose(out, (0, 3, 1, 2))


if __name__ == "__main__":
    # Small, module-consistent shapes: batch=2, in_chans=4, spatial=16x16,
    # out_chans=128, dilations=(3, 6, 9) as typical for DOLG.
    N, CIN, HH, WW = 2, 4, 16, 16
    COUT = 128
    DILATIONS = (3, 6, 9)

    key = jax.random.PRNGKey(0)
    k0, k1, k2, k3, k4 = jax.random.split(key, 5)

    # Deterministic synthetic parameters (shapes per nn.Conv2d in __init__):
    #   d0/d1/d2.weight: (512, in_chans, 3, 3) -> stored HWIO per branch
    #   conv1.weight   : (out_chans, 3*512, 1, 1) -> stored split per branch
    wd = jax.random.normal(k0, (3, 3, 3, CIN, MID), jnp.float32) / jnp.sqrt(CIN * 9)
    bd = jax.random.normal(k1, (3, MID), jnp.float32) * 0.01
    w1 = jax.random.normal(k2, (3, MID, COUT), jnp.float32) / jnp.sqrt(3 * MID)
    b1 = jax.random.normal(k3, (1, COUT), jnp.float32) * 0.01
    params = (wd, bd, w1, b1)

    x = jax.random.normal(k4, (N, CIN, HH, WW), jnp.float32)  # NCHW like PyTorch

    ref = reference(x, params, DILATIONS)

    # f32 path: folding is algebraically exact -> tight tolerance.
    out_f32 = multi_atrous_forward(x, params, DILATIONS,
                                   compute_dtype=jnp.float32)
    out_f32 = jax.block_until_ready(out_f32)
    assert out_f32.shape == (N, COUT, HH, WW), out_f32.shape
    assert jnp.allclose(out_f32, ref, atol=1e-3, rtol=1e-3), \
        float(jnp.max(jnp.abs(out_f32 - ref)))

    # bf16 MXU path (recommended on v6e/v7x): f32 accumulation, conv-level
    # tolerance vs the f32 reference.
    out_bf16 = multi_atrous_forward(x, params, DILATIONS,
                                    compute_dtype=jnp.bfloat16)
    out_bf16 = jax.block_until_ready(out_bf16)
    assert out_bf16.shape == (N, COUT, HH, WW), out_bf16.shape
    assert jnp.allclose(out_bf16, ref, atol=2e-2, rtol=2e-2), \
        float(jnp.max(jnp.abs(out_bf16 - ref)))

    print("KERNEL_OK")
</pallas_src>

<mosaic_0001>
module attributes {stable_mosaic.version = 11 : i64} {
  func.func @mam_kernel(%arg0: i32, %arg1: memref<1x34x34x4xf32, #tpu.memory_space<vmem>>, %arg2: memref<25x4x128xf32, #tpu.memory_space<vmem>>, %arg3: memref<1x128xf32, #tpu.memory_space<vmem>>, %arg4: memref<1x16x16x128xf32, #tpu.memory_space<vmem>>) attributes {dimension_semantics = [#tpu.dimension_semantics<parallel>], iteration_bounds = array<i64: 2>, scalar_prefetch = 0 : i64, scratch_operands = 0 : i64, tpu.core_type = #tpu.core_type<tc>, window_params = [{transform_indices = @transform_0, window_bounds = array<i64: 1, 34, 34, 4>}, {pipeline_mode = #tpu.pipeline_mode<synchronous>, transform_indices = @transform_1, window_bounds = array<i64: 25, 4, 128>}, {pipeline_mode = #tpu.pipeline_mode<synchronous>, transform_indices = @transform_2, window_bounds = array<i64: 1, 128>}, {transform_indices = @transform_3, window_bounds = array<i64: 1, 16, 16, 128>}]} {
    %c0 = arith.constant 0 : index
    %c0_0 = arith.constant 0 : index
    %c0_1 = arith.constant 0 : index
    %c0_2 = arith.constant 0 : index
    %0 = vector.load %arg1[%c0, %c0_0, %c0_1, %c0_2] : memref<1x34x34x4xf32, #tpu.memory_space<vmem>>, vector<1x34x34x4xf32>
    %1 = vector.shape_cast %0 : vector<1x34x34x4xf32> to vector<34x34x4xf32>
    %c0_3 = arith.constant 0 : index
    %c0_4 = arith.constant 0 : index
    %2 = vector.load %arg3[%c0_3, %c0_4] : memref<1x128xf32, #tpu.memory_space<vmem>>, vector<1x128xf32>
    %3 = vector.shape_cast %2 : vector<1x128xf32> to vector<1x128xf32>
    %4 = vector.broadcast %3 : vector<1x128xf32> to vector<256x128xf32>
    %5 = vector.extract_strided_slice %1 {offsets = [6, 6, 0], sizes = [16, 16, 4], strides = [1, 1, 1]} : vector<34x34x4xf32> to vector<16x16x4xf32>
    %6 = vector.shape_cast %5 : vector<16x16x4xf32> to vector<256x4xf32>
    %c0_5 = arith.constant 0 : index
    %c0_6 = arith.constant 0 : index
    %c0_7 = arith.constant 0 : index
    %7 = vector.load %arg2[%c0_5, %c0_6, %c0_7] : memref<25x4x128xf32, #tpu.memory_space<vmem>>, vector<1x4x128xf32>
    %8 = vector.shape_cast %7 : vector<1x4x128xf32> to vector<4x128xf32>
    %cst = arith.constant dense<0.000000e+00> : vector<256x128xf32>
    %9 = tpu.matmul %6, %8, %cst {dimension_numbers = #tpu.dot_dimension_numbers<[1], [0], [0], [1], [0, 0, 1, 1], [], []>} : vector<256x4xf32>, vector<4x128xf32>, vector<256x128xf32> -> vector<256x128xf32>
    %10 = arith.addf %4, %9 : vector<256x128xf32>
    %11 = vector.extract_strided_slice %1 {offsets = [6, 9, 0], sizes = [16, 16, 4], strides = [1, 1, 1]} : vector<34x34x4xf32> to vector<16x16x4xf32>
    %12 = vector.shape_cast %11 : vector<16x16x4xf32> to vector<256x4xf32>
    %c1 = arith.constant 1 : index
    %c0_8 = arith.constant 0 : index
    %c0_9 = arith.constant 0 : index
    %13 = vector.load %arg2[%c1, %c0_8, %c0_9] : memref<25x4x128xf32, #tpu.memory_space<vmem>>, vector<1x4x128xf32>
    %14 = vector.shape_cast %13 : vector<1x4x128xf32> to vector<4x128xf32>
    %cst_10 = arith.constant dense<0.000000e+00> : vector<256x128xf32>
    %15 = tpu.matmul %12, %14, %cst_10 {dimension_numbers = #tpu.dot_dimension_numbers<[1], [0], [0], [1], [0, 0, 1, 1], [], []>} : vector<256x4xf32>, vector<4x128xf32>, vector<256x128xf32> -> vector<256x128xf32>
    %16 = arith.addf %10, %15 : vector<256x128xf32>
    %17 = vector.extract_strided_slice %1 {offsets = [6, 12, 0], sizes = [16, 16, 4], strides = [1, 1, 1]} : vector<34x34x4xf32> to vector<16x16x4xf32>
    %18 = vector.shape_cast %17 : vector<16x16x4xf32> to vector<256x4xf32>
    %c2 = arith.constant 2 : index
    %c0_11 = arith.constant 0 : index
    %c0_12 = arith.constant 0 : index
    %19 = vector.load %arg2[%c2, %c0_11, %c0_12] : memref<25x4x128xf32, #tpu.memory_space<vmem>>, vector<1x4x128xf32>
    %20 = vector.shape_cast %19 : vector<1x4x128xf32> to vector<4x128xf32>
    %cst_13 = arith.constant dense<0.000000e+00> : vector<256x128xf32>
    %21 = tpu.matmul %18, %20, %cst_13 {dimension_numbers = #tpu.dot_dimension_numbers<[1], [0], [0], [1], [0, 0, 1, 1], [], []>} : vector<256x4xf32>, vector<4x128xf32>, vector<256x128xf32> -> vector<256x128xf32>
    %22 = arith.addf %16, %21 : vector<256x128xf32>
    %23 = vector.extract_strided_slice %1 {offsets = [9, 6, 0], sizes = [16, 16, 4], strides = [1, 1, 1]} : vector<34x34x4xf32> to vector<16x16x4xf32>
    %24 = vector.shape_cast %23 : vector<16x16x4xf32> to vector<256x4xf32>
    %c3 = arith.constant 3 : index
    %c0_14 = arith.constant 0 : index
    %c0_15 = arith.constant 0 : index
    %25 = vector.load %arg2[%c3, %c0_14, %c0_15] : memref<25x4x128xf32, #tpu.memory_space<vmem>>, vector<1x4x128xf32>
    %26 = vector.shape_cast %25 : vector<1x4x128xf32> to vector<4x128xf32>
    %cst_16 = arith.constant dense<0.000000e+00> : vector<256x128xf32>
    %27 = tpu.matmul %24, %26, %cst_16 {dimension_numbers = #tpu.dot_dimension_numbers<[1], [0], [0], [1], [0, 0, 1, 1], [], []>} : vector<256x4xf32>, vector<4x128xf32>, vector<256x128xf32> -> vector<256x128xf32>
    %28 = arith.addf %22, %27 : vector<256x128xf32>
    %29 = vector.extract_strided_slice %1 {offsets = [9, 9, 0], sizes = [16, 16, 4], strides = [1, 1, 1]} : vector<34x34x4xf32> to vector<16x16x4xf32>
    %30 = vector.shape_cast %29 : vector<16x16x4xf32> to vector<256x4xf32>
    %c4 = arith.constant 4 : index
    %c0_17 = arith.constant 0 : index
    %c0_18 = arith.constant 0 : index
    %31 = vector.load %arg2[%c4, %c0_17, %c0_18] : memref<25x4x128xf32, #tpu.memory_space<vmem>>, vector<1x4x128xf32>
    %32 = vector.shape_cast %31 : vector<1x4x128xf32> to vector<4x128xf32>
    %cst_19 = arith.constant dense<0.000000e+00> : vector<256x128xf32>
    %33 = tpu.matmul %30, %32, %cst_19 {dimension_numbers = #tpu.dot_dimension_numbers<[1], [0], [0], [1], [0, 0, 1, 1], [], []>} : vector<256x4xf32>, vector<4x128xf32>, vector<256x128xf32> -> vector<256x128xf32>
    %34 = arith.addf %28, %33 : vector<256x128xf32>
    %35 = vector.extract_strided_slice %1 {offsets = [9, 12, 0], sizes = [16, 16, 4], strides = [1, 1, 1]} : vector<34x34x4xf32> to vector<16x16x4xf32>
    %36 = vector.shape_cast %35 : vector<16x16x4xf32> to vector<256x4xf32>
    %c5 = arith.constant 5 : index
    %c0_20 = arith.constant 0 : index
    %c0_21 = arith.constant 0 : index
    %37 = vector.load %arg2[%c5, %c0_20, %c0_21] : memref<25x4x128xf32, #tpu.memory_space<vmem>>, vector<1x4x128xf32>
    %38 = vector.shape_cast %37 : vector<1x4x128xf32> to vector<4x128xf32>
    %cst_22 = arith.constant dense<0.000000e+00> : vector<256x128xf32>
    %39 = tpu.matmul %36, %38, %cst_22 {dimension_numbers = #tpu.dot_dimension_numbers<[1], [0], [0], [1], [0, 0, 1, 1], [], []>} : vector<256x4xf32>, vector<4x128xf32>, vector<256x128xf32> -> vector<256x128xf32>
    %40 = arith.addf %34, %39 : vector<256x128xf32>
    %41 = vector.extract_strided_slice %1 {offsets = [12, 6, 0], sizes = [16, 16, 4], strides = [1, 1, 1]} : vector<34x34x4xf32> to vector<16x16x4xf32>
    %42 = vector.shape_cast %41 : vector<16x16x4xf32> to vector<256x4xf32>
    %c6 = arith.constant 6 : index
    %c0_23 = arith.constant 0 : index
    %c0_24 = arith.constant 0 : index
    %43 = vector.load %arg2[%c6, %c0_23, %c0_24] : memref<25x4x128xf32, #tpu.memory_space<vmem>>, vector<1x4x128xf32>
    %44 = vector.shape_cast %43 : vector<1x4x128xf32> to vector<4x128xf32>
    %cst_25 = arith.constant dense<0.000000e+00> : vector<256x128xf32>
    %45 = tpu.matmul %42, %44, %cst_25 {dimension_numbers = #tpu.dot_dimension_numbers<[1], [0], [0], [1], [0, 0, 1, 1], [], []>} : vector<256x4xf32>, vector<4x128xf32>, vector<256x128xf32> -> vector<256x128xf32>
    %46 = arith.addf %40, %45 : vector<256x128xf32>
    %47 = vector.extract_strided_slice %1 {offsets = [12, 9, 0], sizes = [16, 16, 4], strides = [1, 1, 1]} : vector<34x34x4xf32> to vector<16x16x4xf32>
    %48 = vector.shape_cast %47 : vector<16x16x4xf32> to vector<256x4xf32>
    %c7 = arith.constant 7 : index
    %c0_26 = arith.constant 0 : index
    %c0_27 = arith.constant 0 : index
    %49 = vector.load %arg2[%c7, %c0_26, %c0_27] : memref<25x4x128xf32, #tpu.memory_space<vmem>>, vector<1x4x128xf32>
    %50 = vector.shape_cast %49 : vector<1x4x128xf32> to vector<4x128xf32>
    %cst_28 = arith.constant dense<0.000000e+00> : vector<256x128xf32>
    %51 = tpu.matmul %48, %50, %cst_28 {dimension_numbers = #tpu.dot_dimension_numbers<[1], [0], [0], [1], [0, 0, 1, 1], [], []>} : vector<256x4xf32>, vector<4x128xf32>, vector<256x128xf32> -> vector<256x128xf32>
    %52 = arith.addf %46, %51 : vector<256x128xf32>
    %53 = vector.extract_strided_slice %1 {offsets = [12, 12, 0], sizes = [16, 16, 4], strides = [1, 1, 1]} : vector<34x34x4xf32> to vector<16x16x4xf32>
    %54 = vector.shape_cast %53 : vector<16x16x4xf32> to vector<256x4xf32>
    %c8 = arith.constant 8 : index
    %c0_29 = arith.constant 0 : index
    %c0_30 = arith.constant 0 : index
    %55 = vector.load %arg2[%c8, %c0_29, %c0_30] : memref<25x4x128xf32, #tpu.memory_space<vmem>>, vector<1x4x128xf32>
    %56 = vector.shape_cast %55 : vector<1x4x128xf32> to vector<4x128xf32>
    %cst_31 = arith.constant dense<0.000000e+00> : vector<256x128xf32>
    %57 = tpu.matmul %54, %56, %cst_31 {dimension_numbers = #tpu.dot_dimension_numbers<[1], [0], [0], [1], [0, 0, 1, 1], [], []>} : vector<256x4xf32>, vector<4x128xf32>, vector<256x128xf32> -> vector<256x128xf32>
    %58 = arith.addf %52, %57 : vector<256x128xf32>
    %59 = vector.extract_strided_slice %1 {offsets = [3, 3, 0], sizes = [16, 16, 4], strides = [1, 1, 1]} : vector<34x34x4xf32> to vector<16x16x4xf32>
    %60 = vector.shape_cast %59 : vector<16x16x4xf32> to vector<256x4xf32>
    %c9 = arith.constant 9 : index
    %c0_32 = arith.constant 0 : index
    %c0_33 = arith.constant 0 : index
    %61 = vector.load %arg2[%c9, %c0_32, %c0_33] : memref<25x4x128xf32, #tpu.memory_space<vmem>>, vector<1x4x128xf32>
    %62 = vector.shape_cast %61 : vector<1x4x128xf32> to vector<4x128xf32>
    %cst_34 = arith.constant dense<0.000000e+00> : vector<256x128xf32>
    %63 = tpu.matmul %60, %62, %cst_34 {dimension_numbers = #tpu.dot_dimension_numbers<[1], [0], [0], [1], [0, 0, 1, 1], [], []>} : vector<256x4xf32>, vector<4x128xf32>, vector<256x128xf32> -> vector<256x128xf32>
    %64 = arith.addf %58, %63 : vector<256x128xf32>
    %65 = vector.extract_strided_slice %1 {offsets = [3, 9, 0], sizes = [16, 16, 4], strides = [1, 1, 1]} : vector<34x34x4xf32> to vector<16x16x4xf32>
    %66 = vector.shape_cast %65 : vector<16x16x4xf32> to vector<256x4xf32>
    %c10 = arith.constant 10 : index
    %c0_35 = arith.constant 0 : index
    %c0_36 = arith.constant 0 : index
    %67 = vector.load %arg2[%c10, %c0_35, %c0_36] : memref<25x4x128xf32, #tpu.memory_space<vmem>>, vector<1x4x128xf32>
    %68 = vector.shape_cast %67 : vector<1x4x128xf32> to vector<4x128xf32>
    %cst_37 = arith.constant dense<0.000000e+00> : vector<256x128xf32>
    %69 = tpu.matmul %66, %68, %cst_37 {dimension_numbers = #tpu.dot_dimension_numbers<[1], [0], [0], [1], [0, 0, 1, 1], [], []>} : vector<256x4xf32>, vector<4x128xf32>, vector<256x128xf32> -> vector<256x128xf32>
    %70 = arith.addf %64, %69 : vector<256x128xf32>
    %71 = vector.extract_strided_slice %1 {offsets = [3, 15, 0], sizes = [16, 16, 4], strides = [1, 1, 1]} : vector<34x34x4xf32> to vector<16x16x4xf32>
    %72 = vector.shape_cast %71 : vector<16x16x4xf32> to vector<256x4xf32>
    %c11 = arith.constant 11 : index
    %c0_38 = arith.constant 0 : index
    %c0_39 = arith.constant 0 : index
    %73 = vector.load %arg2[%c11, %c0_38, %c0_39] : memref<25x4x128xf32, #tpu.memory_space<vmem>>, vector<1x4x128xf32>
    %74 = vector.shape_cast %73 : vector<1x4x128xf32> to vector<4x128xf32>
    %cst_40 = arith.constant dense<0.000000e+00> : vector<256x128xf32>
    %75 = tpu.matmul %72, %74, %cst_40 {dimension_numbers = #tpu.dot_dimension_numbers<[1], [0], [0], [1], [0, 0, 1, 1], [], []>} : vector<256x4xf32>, vector<4x128xf32>, vector<256x128xf32> -> vector<256x128xf32>
    %76 = arith.addf %70, %75 : vector<256x128xf32>
    %77 = vector.extract_strided_slice %1 {offsets = [9, 3, 0], sizes = [16, 16, 4], strides = [1, 1, 1]} : vector<34x34x4xf32> to vector<16x16x4xf32>
    %78 = vector.shape_cast %77 : vector<16x16x4xf32> to vector<256x4xf32>
    %c12 = arith.constant 12 : index
    %c0_41 = arith.constant 0 : index
    %c0_42 = arith.constant 0 : index
    %79 = vector.load %arg2[%c12, %c0_41, %c0_42] : memref<25x4x128xf32, #tpu.memory_space<vmem>>, vector<1x4x128xf32>
    %80 = vector.shape_cast %79 : vector<1x4x128xf32> to vector<4x128xf32>
    %cst_43 = arith.constant dense<0.000000e+00> : vector<256x128xf32>
    %81 = tpu.matmul %78, %80, %cst_43 {dimension_numbers = #tpu.dot_dimension_numbers<[1], [0], [0], [1], [0, 0, 1, 1], [], []>} : vector<256x4xf32>, vector<4x128xf32>, vector<256x128xf32> -> vector<256x128xf32>
    %82 = arith.addf %76, %81 : vector<256x128xf32>
    %83 = vector.extract_strided_slice %1 {offsets = [9, 15, 0], sizes = [16, 16, 4], strides = [1, 1, 1]} : vector<34x34x4xf32> to vector<16x16x4xf32>
    %84 = vector.shape_cast %83 : vector<16x16x4xf32> to vector<256x4xf32>
    %c13 = arith.constant 13 : index
    %c0_44 = arith.constant 0 : index
    %c0_45 = arith.constant 0 : index
    %85 = vector.load %arg2[%c13, %c0_44, %c0_45] : memref<25x4x128xf32, #tpu.memory_space<vmem>>, vector<1x4x128xf32>
    %86 = vector.shape_cast %85 : vector<1x4x128xf32> to vector<4x128xf32>
    %cst_46 = arith.constant dense<0.000000e+00> : vector<256x128xf32>
    %87 = tpu.matmul %84, %86, %cst_46 {dimension_numbers = #tpu.dot_dimension_numbers<[1], [0], [0], [1], [0, 0, 1, 1], [], []>} : vector<256x4xf32>, vector<4x128xf32>, vector<256x128xf32> -> vector<256x128xf32>
    %88 = arith.addf %82, %87 : vector<256x128xf32>
    %89 = vector.extract_strided_slice %1 {offsets = [15, 3, 0], sizes = [16, 16, 4], strides = [1, 1, 1]} : vector<34x34x4xf32> to vector<16x16x4xf32>
    %90 = vector.shape_cast %89 : vector<16x16x4xf32> to vector<256x4xf32>
    %c14 = arith.constant 14 : index
    %c0_47 = arith.constant 0 : index
    %c0_48 = arith.constant 0 : index
    %91 = vector.load %arg2[%c14, %c0_47, %c0_48] : memref<25x4x128xf32, #tpu.memory_space<vmem>>, vector<1x4x128xf32>
    %92 = vector.shape_cast %91 : vector<1x4x128xf32> to vector<4x128xf32>
    %cst_49 = arith.constant dense<0.000000e+00> : vector<256x128xf32>
    %93 = tpu.matmul %90, %92, %cst_49 {dimension_numbers = #tpu.dot_dimension_numbers<[1], [0], [0], [1], [0, 0, 1, 1], [], []>} : vector<256x4xf32>, vector<4x128xf32>, vector<256x128xf32> -> vector<256x128xf32>
    %94 = arith.addf %88, %93 : vector<256x128xf32>
    %95 = vector.extract_strided_slice %1 {offsets = [15, 9, 0], sizes = [16, 16, 4], strides = [1, 1, 1]} : vector<34x34x4xf32> to vector<16x16x4xf32>
    %96 = vector.shape_cast %95 : vector<16x16x4xf32> to vector<256x4xf32>
    %c15 = arith.constant 15 : index
    %c0_50 = arith.constant 0 : index
    %c0_51 = arith.constant 0 : index
    %97 = vector.load %arg2[%c15, %c0_50, %c0_51] : memref<25x4x128xf32, #tpu.memory_space<vmem>>, vector<1x4x128xf32>
    %98 = vector.shape_cast %97 : vector<1x4x128xf32> to vector<4x128xf32>
    %cst_52 = arith.constant dense<0.000000e+00> : vector<256x128xf32>
    %99 = tpu.matmul %96, %98, %cst_52 {dimension_numbers = #tpu.dot_dimension_numbers<[1], [0], [0], [1], [0, 0, 1, 1], [], []>} : vector<256x4xf32>, vector<4x128xf32>, vector<256x128xf32> -> vector<256x128xf32>
    %100 = arith.addf %94, %99 : vector<256x128xf32>
    %101 = vector.extract_strided_slice %1 {offsets = [15, 15, 0], sizes = [16, 16, 4], strides = [1, 1, 1]} : vector<34x34x4xf32> to vector<16x16x4xf32>
    %102 = vector.shape_cast %101 : vector<16x16x4xf32> to vector<256x4xf32>
    %c16 = arith.constant 16 : index
    %c0_53 = arith.constant 0 : index
    %c0_54 = arith.constant 0 : index
    %103 = vector.load %arg2[%c16, %c0_53, %c0_54] : memref<25x4x128xf32, #tpu.memory_space<vmem>>, vector<1x4x128xf32>
    %104 = vector.shape_cast %103 : vector<1x4x128xf32> to vector<4x128xf32>
    %cst_55 = arith.constant dense<0.000000e+00> : vector<256x128xf32>
    %105 = tpu.matmul %102, %104, %cst_55 {dimension_numbers = #tpu.dot_dimension_numbers<[1], [0], [0], [1], [0, 0, 1, 1], [], []>} : vector<256x4xf32>, vector<4x128xf32>, vector<256x128xf32> -> vector<256x128xf32>
    %106 = arith.addf %100, %105 : vector<256x128xf32>
    %107 = vector.extract_strided_slice %1 {offsets = [0, 0, 0], sizes = [16, 16, 4], strides = [1, 1, 1]} : vector<34x34x4xf32> to vector<16x16x4xf32>
    %108 = vector.shape_cast %107 : vector<16x16x4xf32> to vector<256x4xf32>
    %c17 = arith.constant 17 : index
    %c0_56 = arith.constant 0 : index
    %c0_57 = arith.constant 0 : index
    %109 = vector.load %arg2[%c17, %c0_56, %c0_57] : memref<25x4x128xf32, #tpu.memory_space<vmem>>, vector<1x4x128xf32>
    %110 = vector.shape_cast %109 : vector<1x4x128xf32> to vector<4x128xf32>
    %cst_58 = arith.constant dense<0.000000e+00> : vector<256x128xf32>
    %111 = tpu.matmul %108, %110, %cst_58 {dimension_numbers = #tpu.dot_dimension_numbers<[1], [0], [0], [1], [0, 0, 1, 1], [], []>} : vector<256x4xf32>, vector<4x128xf32>, vector<256x128xf32> -> vector<256x128xf32>
    %112 = arith.addf %106, %111 : vector<256x128xf32>
    %113 = vector.extract_strided_slice %1 {offsets = [0, 9, 0], sizes = [16, 16, 4], strides = [1, 1, 1]} : vector<34x34x4xf32> to vector<16x16x4xf32>
    %114 = vector.shape_cast %113 : vector<16x16x4xf32> to vector<256x4xf32>
    %c18 = arith.constant 18 : index
    %c0_59 = arith.constant 0 : index
    %c0_60 = arith.constant 0 : index
    %115 = vector.load %arg2[%c18, %c0_59, %c0_60] : memref<25x4x128xf32, #tpu.memory_space<vmem>>, vector<1x4x128xf32>
    %116 = vector.shape_cast %115 : vector<1x4x128xf32> to vector<4x128xf32>
    %cst_61 = arith.constant dense<0.000000e+00> : vector<256x128xf32>
    %117 = tpu.matmul %114, %116, %cst_61 {dimension_numbers = #tpu.dot_dimension_numbers<[1], [0], [0], [1], [0, 0, 1, 1], [], []>} : vector<256x4xf32>, vector<4x128xf32>, vector<256x128xf32> -> vector<256x128xf32>
    %118 = arith.addf %112, %117 : vector<256x128xf32>
    %119 = vector.extract_strided_slice %1 {offsets = [0, 18, 0], sizes = [16, 16, 4], strides = [1, 1, 1]} : vector<34x34x4xf32> to vector<16x16x4xf32>
    %120 = vector.shape_cast %119 : vector<16x16x4xf32> to vector<256x4xf32>
    %c19 = arith.constant 19 : index
    %c0_62 = arith.constant 0 : index
    %c0_63 = arith.constant 0 : index
    %121 = vector.load %arg2[%c19, %c0_62, %c0_63] : memref<25x4x128xf32, #tpu.memory_space<vmem>>, vector<1x4x128xf32>
    %122 = vector.shape_cast %121 : vector<1x4x128xf32> to vector<4x128xf32>
    %cst_64 = arith.constant dense<0.000000e+00> : vector<256x128xf32>
    %123 = tpu.matmul %120, %122, %cst_64 {dimension_numbers = #tpu.dot_dimension_numbers<[1], [0], [0], [1], [0, 0, 1, 1], [], []>} : vector<256x4xf32>, vector<4x128xf32>, vector<256x128xf32> -> vector<256x128xf32>
    %124 = arith.addf %118, %123 : vector<256x128xf32>
    %125 = vector.extract_strided_slice %1 {offsets = [9, 0, 0], sizes = [16, 16, 4], strides = [1, 1, 1]} : vector<34x34x4xf32> to vector<16x16x4xf32>
    %126 = vector.shape_cast %125 : vector<16x16x4xf32> to vector<256x4xf32>
    %c20 = arith.constant 20 : index
    %c0_65 = arith.constant 0 : index
    %c0_66 = arith.constant 0 : index
    %127 = vector.load %arg2[%c20, %c0_65, %c0_66] : memref<25x4x128xf32, #tpu.memory_space<vmem>>, vector<1x4x128xf32>
    %128 = vector.shape_cast %127 : vector<1x4x128xf32> to vector<4x128xf32>
    %cst_67 = arith.constant dense<0.000000e+00> : vector<256x128xf32>
    %129 = tpu.matmul %126, %128, %cst_67 {dimension_numbers = #tpu.dot_dimension_numbers<[1], [0], [0], [1], [0, 0, 1, 1], [], []>} : vector<256x4xf32>, vector<4x128xf32>, vector<256x128xf32> -> vector<256x128xf32>
    %130 = arith.addf %124, %129 : vector<256x128xf32>
    %131 = vector.extract_strided_slice %1 {offsets = [9, 18, 0], sizes = [16, 16, 4], strides = [1, 1, 1]} : vector<34x34x4xf32> to vector<16x16x4xf32>
    %132 = vector.shape_cast %131 : vector<16x16x4xf32> to vector<256x4xf32>
    %c21 = arith.constant 21 : index
    %c0_68 = arith.constant 0 : index
    %c0_69 = arith.constant 0 : index
    %133 = vector.load %arg2[%c21, %c0_68, %c0_69] : memref<25x4x128xf32, #tpu.memory_space<vmem>>, vector<1x4x128xf32>
    %134 = vector.shape_cast %133 : vector<1x4x128xf32> to vector<4x128xf32>
    %cst_70 = arith.constant dense<0.000000e+00> : vector<256x128xf32>
    %135 = tpu.matmul %132, %134, %cst_70 {dimension_numbers = #tpu.dot_dimension_numbers<[1], [0], [0], [1], [0, 0, 1, 1], [], []>} : vector<256x4xf32>, vector<4x128xf32>, vector<256x128xf32> -> vector<256x128xf32>
    %136 = arith.addf %130, %135 : vector<256x128xf32>
    %137 = vector.extract_strided_slice %1 {offsets = [18, 0, 0], sizes = [16, 16, 4], strides = [1, 1, 1]} : vector<34x34x4xf32> to vector<16x16x4xf32>
    %138 = vector.shape_cast %137 : vector<16x16x4xf32> to vector<256x4xf32>
    %c22 = arith.constant 22 : index
    %c0_71 = arith.constant 0 : index
    %c0_72 = arith.constant 0 : index
    %139 = vector.load %arg2[%c22, %c0_71, %c0_72] : memref<25x4x128xf32, #tpu.memory_space<vmem>>, vector<1x4x128xf32>
    %140 = vector.shape_cast %139 : vector<1x4x128xf32> to vector<4x128xf32>
    %cst_73 = arith.constant dense<0.000000e+00> : vector<256x128xf32>
    %141 = tpu.matmul %138, %140, %cst_73 {dimension_numbers = #tpu.dot_dimension_numbers<[1], [0], [0], [1], [0, 0, 1, 1], [], []>} : vector<256x4xf32>, vector<4x128xf32>, vector<256x128xf32> -> vector<256x128xf32>
    %142 = arith.addf %136, %141 : vector<256x128xf32>
    %143 = vector.extract_strided_slice %1 {offsets = [18, 9, 0], sizes = [16, 16, 4], strides = [1, 1, 1]} : vector<34x34x4xf32> to vector<16x16x4xf32>
    %144 = vector.shape_cast %143 : vector<16x16x4xf32> to vector<256x4xf32>
    %c23 = arith.constant 23 : index
    %c0_74 = arith.constant 0 : index
    %c0_75 = arith.constant 0 : index
    %145 = vector.load %arg2[%c23, %c0_74, %c0_75] : memref<25x4x128xf32, #tpu.memory_space<vmem>>, vector<1x4x128xf32>
    %146 = vector.shape_cast %145 : vector<1x4x128xf32> to vector<4x128xf32>
    %cst_76 = arith.constant dense<0.000000e+00> : vector<256x128xf32>
    %147 = tpu.matmul %144, %146, %cst_76 {dimension_numbers = #tpu.dot_dimension_numbers<[1], [0], [0], [1], [0, 0, 1, 1], [], []>} : vector<256x4xf32>, vector<4x128xf32>, vector<256x128xf32> -> vector<256x128xf32>
    %148 = arith.addf %142, %147 : vector<256x128xf32>
    %149 = vector.extract_strided_slice %1 {offsets = [18, 18, 0], sizes = [16, 16, 4], strides = [1, 1, 1]} : vector<34x34x4xf32> to vector<16x16x4xf32>
    %150 = vector.shape_cast %149 : vector<16x16x4xf32> to vector<256x4xf32>
    %c24 = arith.constant 24 : index
    %c0_77 = arith.constant 0 : index
    %c0_78 = arith.constant 0 : index
    %151 = vector.load %arg2[%c24, %c0_77, %c0_78] : memref<25x4x128xf32, #tpu.memory_space<vmem>>, vector<1x4x128xf32>
    %152 = vector.shape_cast %151 : vector<1x4x128xf32> to vector<4x128xf32>
    %cst_79 = arith.constant dense<0.000000e+00> : vector<256x128xf32>
    %153 = tpu.matmul %150, %152, %cst_79 {dimension_numbers = #tpu.dot_dimension_numbers<[1], [0], [0], [1], [0, 0, 1, 1], [], []>} : vector<256x4xf32>, vector<4x128xf32>, vector<256x128xf32> -> vector<256x128xf32>
    %154 = arith.addf %148, %153 : vector<256x128xf32>
    %cst_80 = arith.constant 0.000000e+00 : f32
    %155 = vector.broadcast %cst_80 : f32 to vector<256x128xf32>
    %156 = arith.maximumf %154, %155 : vector<256x128xf32>
    %157 = vector.shape_cast %156 : vector<256x128xf32> to vector<1x16x16x128xf32>
    %c0_81 = arith.constant 0 : index
    %c0_82 = arith.constant 0 : index
    %c0_83 = arith.constant 0 : index
    %c0_84 = arith.constant 0 : index
    %158 = vector.load %arg4[%c0_81, %c0_82, %c0_83, %c0_84] : memref<1x16x16x128xf32, #tpu.memory_space<vmem>>, vector<1x16x16x128xf32>
    tpu.vector_store %arg4[%c0_81, %c0_82, %c0_83, %c0_84], %157 {strides = array<i32>} : memref<1x16x16x128xf32, #tpu.memory_space<vmem>>, vector<1x16x16x128xf32>,
    return
  }
  func.func @transform_0(%arg0: i32) -> (i32, i32, i32, i32) {
    %c0_i32 = arith.constant 0 : i32
    %c0_i32_0 = arith.constant 0 : i32
    %c0_i32_1 = arith.constant 0 : i32
    %c0_i32_2 = arith.constant 0 : i32
    return %arg0, %c0_i32, %c0_i32_0, %c0_i32_1 : i32, i32, i32, i32
  }
  func.func @transform_1(%arg0: i32) -> (i32, i32, i32) {
    %c0_i32 = arith.constant 0 : i32
    %c0_i32_0 = arith.constant 0 : i32
    %c0_i32_1 = arith.constant 0 : i32
    %c0_i32_2 = arith.constant 0 : i32
    return %c0_i32, %c0_i32_0, %c0_i32_1 : i32, i32, i32
  }
  func.func @transform_2(%arg0: i32) -> (i32, i32) {
    %c0_i32 = arith.constant 0 : i32
    %c0_i32_0 = arith.constant 0 : i32
    %c0_i32_1 = arith.constant 0 : i32
    return %c0_i32, %c0_i32_0 : i32, i32
  }
  func.func @transform_3(%arg0: i32) -> (i32, i32, i32, i32) {
    %c0_i32 = arith.constant 0 : i32
    %c0_i32_0 = arith.constant 0 : i32
    %c0_i32_1 = arith.constant 0 : i32
    %c0_i32_2 = arith.constant 0 : i32
    return %arg0, %c0_i32, %c0_i32_0, %c0_i32_1 : i32, i32, i32, i32
  }
}

</mosaic_0001>

<llo_original>
// kernel: tpu_custom_call.1
$region0: #{tpu_custom_call.1}
  #allocation0 [shape = 'u32[]', space=smem, size = 0x4, offset = 0x4, fixed_abs, tag = 'smem constant byte address 0x4 - core index']
  #allocation1 [shape = 'u32[72,128]{1,0:T(1,128)}', space=vmem, size = 0x9000, scoped, tag = 'internal scratch']
  %s0 = inlined_call_operand.vmem [shape: f32[2,34,34,4], index: 0, kind: input, shape index: {}]
  %s1 = inlined_call_operand.vmem [shape: f32[25,4,128], index: 1, kind: input, shape index: {}]
  %s2 = inlined_call_operand.vmem [shape: f32[1,128], index: 2, kind: input, shape index: {}]
  %s3 = inlined_call_operand.hbm [shape: f32[2,16,16,128], index: 3, kind: output, shape index: {}]
  %s4 = sld [smem:[#allocation0]]
  $region45: #{tpu_custom_call.1} parent=0
    _
  %s6 = ssub.s32 1, %s4
  %s7 = scalar_select 0, %s6, %s4
  $region1: #{tpu_custom_call.1} parent=0
    #allocation2 [shape = 'u8[262144]{0}', space=vmem, size = 0x40000, scoped, tag = 'output window, operand 0']
    #allocation3 [shape = 's32[2]{0}', space=sflag, size = 0x8, scoped, tag = 'scoped memory for tpu_custom_call.1']
    %8 = vsyncpa [#allocation3], 0
    %s9 = scalar_lea.sflag [#allocation3], 1
    %10 = vsyncpa %s9, 0
    loop: start=0, step=1, limit=4
    $region2: #{tpu_custom_call.1} parent=1 // loop_pre_header
      _
    $region3: #{tpu_custom_call.1} parent=1 // loop_header
      %s12 = sphi 0, %s16
      %p13 = scmp.ge.s32.totalorder %s12, 4
      %s22 = sphi 0, %s24
      %s25 = sphi 0, %s22
      %s26 = sphi 0, %s25
      %s42 = sphi 0, %s26
      %s46 = sphi 0, %s46
      %s48 = sphi 0, %s46
      %s49 = sphi 0, %s48
      %s63 = sphi 0, %s49
      %s67 = sphi 0, %s67
      %s69 = sphi 0, %s67
      %s70 = sphi 0, %s69
      %s84 = sphi 0, %s70
      %s90 = sphi 0, %s92
      %s93 = sphi 0, %s90
      %s94 = sphi 0, %s93
      %s110 = sphi 0, %s94
    $region4: #{tpu_custom_call.1} parent=1 // loop_header_branch
      %15 = sbr.rel (%p13) target = $region8
    $region5: #{tpu_custom_call.1} parent=1 // loop_body
      %s17 = ssub.s32 %s12, 1
      %s18 = ssub.s32 %s12, 2
      %s19 = sadd.s32 %s12, 1
      %s20 = ssub.s32 %s12, %s19
      %p21 = scmp.eq.s32.totalorder %s20, 0
      %s23 = sadd.s32 %s22, 1
      %s24 = scalar_select %p21, %s22, %s23
      %p27 = pneg %p21
      %p28 = scmp.eq.s32.totalorder %s12, 1
      %p29 = por %p27, %p28
      %p30 = scmp.ne.s32.totalorder %s22, %s25
      %p31 = scmp.eq.s32.totalorder %s12, 0
      %p32 = por %p30, %p31
      %p33 = scmp.ne.s32.totalorder %s22, %s25
      %p34 = scmp.eq.s32.totalorder %s17, 1
      %p35 = por %p33, %p34
      %p36 = scmp.ne.s32.totalorder %s25, %s26
      %p37 = scmp.eq.s32.totalorder %s17, 0
      %p38 = por %p36, %p37
      %p39 = scmp.ne.s32.totalorder %s25, %s26
      %p40 = scmp.eq.s32.totalorder %s18, 1
      %p41 = por %p39, %p40
      %p43 = scmp.ne.s32.totalorder %s26, %s42
      %p44 = scmp.eq.s32.totalorder %s18, 0
      %p45 = por %p43, %p44
      %s47 = sadd.s32 %s46, 1
      %p50 = scmp.eq.s32.totalorder %s12, 1
      %p51 = scmp.ne.s32.totalorder %s46, %s48
      %p52 = scmp.eq.s32.totalorder %s12, 0
      %p53 = por %p51, %p52
      %p54 = scmp.ne.s32.totalorder %s46, %s48
      %p55 = scmp.eq.s32.totalorder %s17, 1
      %p56 = por %p54, %p55
      %p57 = scmp.ne.s32.totalorder %s48, %s49
      %p58 = scmp.eq.s32.totalorder %s17, 0
      %p59 = por %p57, %p58
      %p60 = scmp.ne.s32.totalorder %s48, %s49
      %p61 = scmp.eq.s32.totalorder %s18, 1
      %p62 = por %p60, %p61
      %p64 = scmp.ne.s32.totalorder %s49, %s63
      %p65 = scmp.eq.s32.totalorder %s18, 0
      %p66 = por %p64, %p65
      %s68 = sadd.s32 %s67, 1
      %p71 = scmp.eq.s32.totalorder %s12, 1
      %p72 = scmp.ne.s32.totalorder %s67, %s69
      %p73 = scmp.eq.s32.totalorder %s12, 0
      %p74 = por %p72, %p73
      %p75 = scmp.ne.s32.totalorder %s67, %s69
      %p76 = scmp.eq.s32.totalorder %s17, 1
      %p77 = por %p75, %p76
      %p78 = scmp.ne.s32.totalorder %s69, %s70
      %p79 = scmp.eq.s32.totalorder %s17, 0
      %p80 = por %p78, %p79
      %p81 = scmp.ne.s32.totalorder %s69, %s70
      %p82 = scmp.eq.s32.totalorder %s18, 1
      %p83 = por %p81, %p82
      %p85 = scmp.ne.s32.totalorder %s70, %s84
      %p86 = scmp.eq.s32.totalorder %s18, 0
      %p87 = por %p85, %p86
      %s88 = ssub.s32 %s12, %s19
      %p89 = scmp.eq.s32.totalorder %s88, 0
      %s91 = sadd.s32 %s90, 1
      %s92 = scalar_select %p89, %s90, %s91
      %p95 = pneg %p89
      %p96 = scmp.eq.s32.totalorder %s12, 1
      %p97 = por %p95, %p96
      %p98 = scmp.ne.s32.totalorder %s90, %s93
      %p99 = scmp.eq.s32.totalorder %s12, 0
      %p100 = por %p98, %p99
      %p101 = scmp.ne.s32.totalorder %s90, %s93
      %p102 = scmp.eq.s32.totalorder %s17, 1
      %p103 = por %p101, %p102
      %p104 = scmp.ne.s32.totalorder %s93, %s94
      %p105 = scmp.eq.s32.totalorder %s17, 0
      %p106 = por %p104, %p105
      %p107 = scmp.ne.s32.totalorder %s93, %s94
      %p108 = scmp.eq.s32.totalorder %s18, 1
      %p109 = por %p107, %p108
      %p111 = scmp.ne.s32.totalorder %s94, %s110
      %p112 = scmp.eq.s32.totalorder %s18, 0
      %p113 = por %p111, %p112
      %p114 = scmp.le.s32.totalorder 1, %s12
      %p115 = scmp.lt.s32.totalorder %s12, 3
      %p116 = pnand %p114, %p115
      %p117 = pneg %p116
      // Predicated region
      $region9: #{tpu_custom_call.1} parent=5 // pred_check
        _
      $region10: #{tpu_custom_call.1} parent=5 // pred_check_branch
        %119 = sbr.rel (%p116) target = $region12
      $region11: #{tpu_custom_call.1} parent=5 // pred_region
        %s120 = ssub.s32 %s12, 1
        // Predicated region
        $region13: #{tpu_custom_call.1} parent=11 // pred_check
          %p121 = pneg %p59
        $region14: #{tpu_custom_call.1} parent=11 // pred_check_branch
          %123 = sbr.rel (%p121) target = $region16
        $region15: #{tpu_custom_call.1} parent=11 // pred_region
          _
        $region16: #{tpu_custom_call.1} parent=11 // pred_fallthru
          _
        // Predicated region
        $region17: #{tpu_custom_call.1} parent=11 // pred_check
          %p124 = pneg %p80
        $region18: #{tpu_custom_call.1} parent=11 // pred_check_branch
          %126 = sbr.rel (%p124) target = $region20
        $region19: #{tpu_custom_call.1} parent=11 // pred_region
          _
        $region20: #{tpu_custom_call.1} parent=11 // pred_fallthru
          _
      $region12: #{tpu_custom_call.1} parent=5 // pred_fallthru
        _
      %p127 = scmp.lt.s32.totalorder %s12, 2
      // Predicated region
      $region21: #{tpu_custom_call.1} parent=5 // pred_check
        %p128 = pneg %p127
      $region22: #{tpu_custom_call.1} parent=5 // pred_check_branch
        %130 = sbr.rel (%p128) target = $region24
      $region23: #{tpu_custom_call.1} parent=5 // pred_region
        // Predicated region
        $region25: #{tpu_custom_call.1} parent=23 // pred_check
          %p131 = pneg %p32
        $region26: #{tpu_custom_call.1} parent=23 // pred_check_branch
          %133 = sbr.rel (%p131) target = $region28
        $region27: #{tpu_custom_call.1} parent=23 // pred_region
          %p134 = scmp.lt.s32.totalorder %s12, 1
          %s135 = scalar_select %p134, %s12, 1
          %s136 = smul.addr %s135, 170
          %s137 = smul.addr %s136, 8
          %s138 = scalar_lea.vmem %s0, %s137
        $region28: #{tpu_custom_call.1} parent=23 // pred_fallthru
          _
      $region24: #{tpu_custom_call.1} parent=5 // pred_fallthru
        _
      %p139 = scmp.le.s32.totalorder 1, %s12
      %p140 = scmp.lt.s32.totalorder %s12, 3
      %p141 = pnand %p139, %p140
      %p142 = pneg %p141
      // Predicated region
      $region29: #{tpu_custom_call.1} parent=5 // pred_check
        _
      $region30: #{tpu_custom_call.1} parent=5 // pred_check_branch
        %144 = sbr.rel (%p141) target = $region32
      $region31: #{tpu_custom_call.1} parent=5 // pred_region
        %s145 = ssub.s32 %s12, 1
        %p146 = scmp.lt.s32.totalorder %s17, 1
        %s147 = scalar_select %p146, %s17, 1
        %s148 = smul.addr %s147, 170
        %s149 = smul.addr %s148, 8
        %s150 = scalar_lea.vmem %s0, %s149
        %p151 = pneg %p38
        %p152 = pneg %p35
        %p153 = pneg %p59
        %p154 = pneg %p56
        %p155 = pneg %p80
        %p156 = pneg %p77
        %p157 = pneg %p106
        %p158 = pneg %p103
        %s159 = sand.u32 %s93, 1
        %s160 = scalar_lea.sflag [#allocation3], %s159
        %s161 = sand.u32 %s93, 1
        %s162 = smul.addr %s161, 256
        %s163 = scalar_lea.vmem [#allocation2], %s162
        %p164 = scmp.lt.s32.totalorder %s17, 1
        %s165 = scalar_select %p164, %s17, 1
        %s166 = smul.addr %s165, 170
        %s167 = smul.addr %s166, 8
        %s168 = scalar_lea.vmem %s0, %s167
        %v169 = vld [vmem:[%s168] sm:$0xff]
        %v170 = vld [vmem:[%s168 + $0x8] sm:$0xff]
        %v171 = vld [vmem:[%s168 + $0x10] sm:$0xff]
        %v172 = vld [vmem:[%s168 + $0x18] sm:$0xff]
        %v173 = vld [vmem:[%s168 + $0x20] sm:$0x3]
        %v174 = vld [vmem:[%s168 + $0x28] sm:$0xff]
        %v175 = vld [vmem:[%s168 + $0x30] sm:$0xff]
        %v176 = vld [vmem:[%s168 + $0x38] sm:$0xff]
        %v177 = vld [vmem:[%s168 + $0x40] sm:$0xff]
        %v178 = vld [vmem:[%s168 + $0x48] sm:$0x3]
        %v179 = vld [vmem:[%s168 + $0x50] sm:$0xff]
        %v180 = vld [vmem:[%s168 + $0x58] sm:$0xff]
        %v181 = vld [vmem:[%s168 + $0x60] sm:$0xff]
        %v182 = vld [vmem:[%s168 + $0x68] sm:$0xff]
        %v183 = vld [vmem:[%s168 + $0x70] sm:$0x3]
        %v184 = vld [vmem:[%s168 + $0x78] sm:$0xff]
        %v185 = vld [vmem:[%s168 + $0x80] sm:$0xff]
        %v186 = vld [vmem:[%s168 + $0x88] sm:$0xff]
        %v187 = vld [vmem:[%s168 + $0x90] sm:$0xff]
        %v188 = vld [vmem:[%s168 + $0x98] sm:$0x3]
        %v189 = vld [vmem:[%s168 + $0xa0] sm:$0xff]
        %v190 = vld [vmem:[%s168 + $0xa8] sm:$0xff]
        %v191 = vld [vmem:[%s168 + $0xb0] sm:$0xff]
        %v192 = vld [vmem:[%s168 + $0xb8] sm:$0xff]
        %v193 = vld [vmem:[%s168 + $0xc0] sm:$0x3]
        %v194 = vld [vmem:[%s168 + $0xc8] sm:$0xff]
        %v195 = vld [vmem:[%s168 + $0xd0] sm:$0xff]
        %v196 = vld [vmem:[%s168 + $0xd8] sm:$0xff]
        %v197 = vld [vmem:[%s168 + $0xe0] sm:$0xff]
        %v198 = vld [vmem:[%s168 + $0xe8] sm:$0x3]
        %v199 = vld [vmem:[%s168 + $0xf0] sm:$0xff]
        %v200 = vld [vmem:[%s168 + $0xf8] sm:$0xff]
        %v201 = vld [vmem:[%s168 + $0x100] sm:$0xff]
        %v202 = vld [vmem:[%s168 + $0x108] sm:$0xff]
        %v203 = vld [vmem:[%s168 + $0x110] sm:$0x3]
        %v204 = vld [vmem:[%s168 + $0x118] sm:$0xff]
        %v205 = vld [vmem:[%s168 + $0x120] sm:$0xff]
        %v206 = vld [vmem:[%s168 + $0x128] sm:$0xff]
        %v207 = vld [vmem:[%s168 + $0x130] sm:$0xff]
        %v208 = vld [vmem:[%s168 + $0x138] sm:$0x3]
        %v209 = vld [vmem:[%s168 + $0x140] sm:$0xff]
        %v210 = vld [vmem:[%s168 + $0x148] sm:$0xff]
        %v211 = vld [vmem:[%s168 + $0x150] sm:$0xff]
        %v212 = vld [vmem:[%s168 + $0x158] sm:$0xff]
        %v213 = vld [vmem:[%s168 + $0x160] sm:$0x3]
        %v214 = vld [vmem:[%s168 + $0x168] sm:$0xff]
        %v215 = vld [vmem:[%s168 + $0x170] sm:$0xff]
        %v216 = vld [vmem:[%s168 + $0x178] sm:$0xff]
        %v217 = vld [vmem:[%s168 + $0x180] sm:$0xff]
        %v218 = vld [vmem:[%s168 + $0x188] sm:$0x3]
        %v219 = vld [vmem:[%s168 + $0x190] sm:$0xff]
        %v220 = vld [vmem:[%s168 + $0x198] sm:$0xff]
        %v221 = vld [vmem:[%s168 + $0x1a0] sm:$0xff]
        %v222 = vld [vmem:[%s168 + $0x1a8] sm:$0xff]
        %v223 = vld [vmem:[%s168 + $0x1b0] sm:$0x3]
        %v224 = vld [vmem:[%s168 + $0x1b8] sm:$0xff]
        %v225 = vld [vmem:[%s168 + $0x1c0] sm:$0xff]
        %v226 = vld [vmem:[%s168 + $0x1c8] sm:$0xff]
        %v227 = vld [vmem:[%s168 + $0x1d0] sm:$0xff]
        %v228 = vld [vmem:[%s168 + $0x1d8] sm:$0x3]
        %v229 = vld [vmem:[%s168 + $0x1e0] sm:$0xff]
        %v230 = vld [vmem:[%s168 + $0x1e8] sm:$0xff]
        %v231 = vld [vmem:[%s168 + $0x1f0] sm:$0xff]
        %v232 = vld [vmem:[%s168 + $0x1f8] sm:$0xff]
        %v233 = vld [vmem:[%s168 + $0x200] sm:$0x3]
        %v234 = vld [vmem:[%s168 + $0x208] sm:$0xff]
        %v235 = vld [vmem:[%s168 + $0x210] sm:$0xff]
        %v236 = vld [vmem:[%s168 + $0x218] sm:$0xff]
        %v237 = vld [vmem:[%s168 + $0x220] sm:$0xff]
        %v238 = vld [vmem:[%s168 + $0x228] sm:$0x3]
        %v239 = vld [vmem:[%s168 + $0x230] sm:$0xff]
        %v240 = vld [vmem:[%s168 + $0x238] sm:$0xff]
        %v241 = vld [vmem:[%s168 + $0x240] sm:$0xff]
        %v242 = vld [vmem:[%s168 + $0x248] sm:$0xff]
        %v243 = vld [vmem:[%s168 + $0x250] sm:$0x3]
        %v244 = vld [vmem:[%s168 + $0x258] sm:$0xff]
        %v245 = vld [vmem:[%s168 + $0x260] sm:$0xff]
        %v246 = vld [vmem:[%s168 + $0x268] sm:$0xff]
        %v247 = vld [vmem:[%s168 + $0x270] sm:$0xff]
        %v248 = vld [vmem:[%s168 + $0x278] sm:$0x3]
        %v249 = vld [vmem:[%s168 + $0x280] sm:$0xff]
        %v250 = vld [vmem:[%s168 + $0x288] sm:$0xff]
        %v251 = vld [vmem:[%s168 + $0x290] sm:$0xff]
        %v252 = vld [vmem:[%s168 + $0x298] sm:$0xff]
        %v253 = vld [vmem:[%s168 + $0x2a0] sm:$0x3]
        %v254 = vld [vmem:[%s168 + $0x2a8] sm:$0xff]
        %v255 = vld [vmem:[%s168 + $0x2b0] sm:$0xff]
        %v256 = vld [vmem:[%s168 + $0x2b8] sm:$0xff]
        %v257 = vld [vmem:[%s168 + $0x2c0] sm:$0xff]
        %v258 = vld [vmem:[%s168 + $0x2c8] sm:$0x3]
        %v259 = vld [vmem:[%s168 + $0x2d0] sm:$0xff]
        %v260 = vld [vmem:[%s168 + $0x2d8] sm:$0xff]
        %v261 = vld [vmem:[%s168 + $0x2e0] sm:$0xff]
        %v262 = vld [vmem:[%s168 + $0x2e8] sm:$0xff]
        %v263 = vld [vmem:[%s168 + $0x2f0] sm:$0x3]
        %v264 = vld [vmem:[%s168 + $0x2f8] sm:$0xff]
        %v265 = vld [vmem:[%s168 + $0x300] sm:$0xff]
        %v266 = vld [vmem:[%s168 + $0x308] sm:$0xff]
        %v267 = vld [vmem:[%s168 + $0x310] sm:$0xff]
        %v268 = vld [vmem:[%s168 + $0x318] sm:$0x3]
        %v269 = vld [vmem:[%s168 + $0x320] sm:$0xff]
        %v270 = vld [vmem:[%s168 + $0x328] sm:$0xff]
        %v271 = vld [vmem:[%s168 + $0x330] sm:$0xff]
        %v272 = vld [vmem:[%s168 + $0x338] sm:$0xff]
        %v273 = vld [vmem:[%s168 + $0x340] sm:$0x3]
        %v274 = vld [vmem:[%s168 + $0x348] sm:$0xff]
        %v275 = vld [vmem:[%s168 + $0x350] sm:$0xff]
        %v276 = vld [vmem:[%s168 + $0x358] sm:$0xff]
        %v277 = vld [vmem:[%s168 + $0x360] sm:$0xff]
        %v278 = vld [vmem:[%s168 + $0x368] sm:$0x3]
        %v279 = vld [vmem:[%s168 + $0x370] sm:$0xff]
        %v280 = vld [vmem:[%s168 + $0x378] sm:$0xff]
        %v281 = vld [vmem:[%s168 + $0x380] sm:$0xff]
        %v282 = vld [vmem:[%s168 + $0x388] sm:$0xff]
        %v283 = vld [vmem:[%s168 + $0x390] sm:$0x3]
        %v284 = vld [vmem:[%s168 + $0x398] sm:$0xff]
        %v285 = vld [vmem:[%s168 + $0x3a0] sm:$0xff]
        %v286 = vld [vmem:[%s168 + $0x3a8] sm:$0xff]
        %v287 = vld [vmem:[%s168 + $0x3b0] sm:$0xff]
        %v288 = vld [vmem:[%s168 + $0x3b8] sm:$0x3]
        %v289 = vld [vmem:[%s168 + $0x3c0] sm:$0xff]
        %v290 = vld [vmem:[%s168 + $0x3c8] sm:$0xff]
        %v291 = vld [vmem:[%s168 + $0x3d0] sm:$0xff]
        %v292 = vld [vmem:[%s168 + $0x3d8] sm:$0xff]
        %v293 = vld [vmem:[%s168 + $0x3e0] sm:$0x3]
        %v294 = vld [vmem:[%s168 + $0x3e8] sm:$0xff]
        %v295 = vld [vmem:[%s168 + $0x3f0] sm:$0xff]
        %v296 = vld [vmem:[%s168 + $0x3f8] sm:$0xff]
        %v297 = vld [vmem:[%s168 + $0x400] sm:$0xff]
        %v298 = vld [vmem:[%s168 + $0x408] sm:$0x3]
        %v299 = vld [vmem:[%s168 + $0x410] sm:$0xff]
        %v300 = vld [vmem:[%s168 + $0x418] sm:$0xff]
        %v301 = vld [vmem:[%s168 + $0x420] sm:$0xff]
        %v302 = vld [vmem:[%s168 + $0x428] sm:$0xff]
        %v303 = vld [vmem:[%s168 + $0x430] sm:$0x3]
        %v304 = vld [vmem:[%s168 + $0x438] sm:$0xff]
        %v305 = vld [vmem:[%s168 + $0x440] sm:$0xff]
        %v306 = vld [vmem:[%s168 + $0x448] sm:$0xff]
        %v307 = vld [vmem:[%s168 + $0x450] sm:$0xff]
        %v308 = vld [vmem:[%s168 + $0x458] sm:$0x3]
        %v309 = vld [vmem:[%s168 + $0x460] sm:$0xff]
        %v310 = vld [vmem:[%s168 + $0x468] sm:$0xff]
        %v311 = vld [vmem:[%s168 + $0x470] sm:$0xff]
        %v312 = vld [vmem:[%s168 + $0x478] sm:$0xff]
        %v313 = vld [vmem:[%s168 + $0x480] sm:$0x3]
        %v314 = vld [vmem:[%s168 + $0x488] sm:$0xff]
        %v315 = vld [vmem:[%s168 + $0x490] sm:$0xff]
        %v316 = vld [vmem:[%s168 + $0x498] sm:$0xff]
        %v317 = vld [vmem:[%s168 + $0x4a0] sm:$0xff]
        %v318 = vld [vmem:[%s168 + $0x4a8] sm:$0x3]
        %v319 = vld [vmem:[%s168 + $0x4b0] sm:$0xff]
        %v320 = vld [vmem:[%s168 + $0x4b8] sm:$0xff]
        %v321 = vld [vmem:[%s168 + $0x4c0] sm:$0xff]
        %v322 = vld [vmem:[%s168 + $0x4c8] sm:$0xff]
        %v323 = vld [vmem:[%s168 + $0x4d0] sm:$0x3]
        %v324 = vld [vmem:[%s168 + $0x4d8] sm:$0xff]
        %v325 = vld [vmem:[%s168 + $0x4e0] sm:$0xff]
        %v326 = vld [vmem:[%s168 + $0x4e8] sm:$0xff]
        %v327 = vld [vmem:[%s168 + $0x4f0] sm:$0xff]
        %v328 = vld [vmem:[%s168 + $0x4f8] sm:$0x3]
        %v329 = vld [vmem:[%s168 + $0x500] sm:$0xff]
        %v330 = vld [vmem:[%s168 + $0x508] sm:$0xff]
        %v331 = vld [vmem:[%s168 + $0x510] sm:$0xff]
        %v332 = vld [vmem:[%s168 + $0x518] sm:$0xff]
        %v333 = vld [vmem:[%s168 + $0x520] sm:$0x3]
        %v334 = vld [vmem:[%s168 + $0x528] sm:$0xff]
        %v335 = vld [vmem:[%s168 + $0x530] sm:$0xff]
        %v336 = vld [vmem:[%s168 + $0x538] sm:$0xff]
        %v337 = vld [vmem:[%s168 + $0x540] sm:$0xff]
        %v338 = vld [vmem:[%s168 + $0x548] sm:$0x3]
        %v339 = vld [vmem:[%s2] sm:$0x1]
        %v341 = vperm.slane %v339, 0
        %vm391 = vcmask 1041408
        %v392 = vrot.slane %v199, 6
        %v393 = vrot.slane %v200, 6
        %v394 = vsel %vm391, %v392, %v393
        %v395 = vrot.slane %v201, 6
        %v396 = vsel %vm391, %v393, %v395
        %v397 = vrot.slane %v204, 6
        %v398 = vrot.slane %v205, 6
        %v399 = vsel %vm391, %v397, %v398
        %v400 = vrot.slane %v206, 6
        %v401 = vsel %vm391, %v398, %v400
        %v402 = vrot.slane %v209, 6
        %v403 = vrot.slane %v210, 6
        %v404 = vsel %vm391, %v402, %v403
        %v405 = vrot.slane %v211, 6
        %v406 = vsel %vm391, %v403, %v405
        %v407 = vrot.slane %v214, 6
        %v408 = vrot.slane %v215, 6
        %v409 = vsel %vm391, %v407, %v408
        %v410 = vrot.slane %v216, 6
        %v411 = vsel %vm391, %v408, %v410
        %v412 = vrot.slane %v219, 6
        %v413 = vrot.slane %v220, 6
        %v414 = vsel %vm391, %v412, %v413
        %v415 = vrot.slane %v221, 6
        %v416 = vsel %vm391, %v413, %v415
        %v417 = vrot.slane %v224, 6
        %v418 = vrot.slane %v225, 6
        %v419 = vsel %vm391, %v417, %v418
        %v420 = vrot.slane %v226, 6
        %v421 = vsel %vm391, %v418, %v420
        %v422 = vrot.slane %v229, 6
        %v423 = vrot.slane %v230, 6
        %v424 = vsel %vm391, %v422, %v423
        %v425 = vrot.slane %v231, 6
        %v426 = vsel %vm391, %v423, %v425
        %v427 = vrot.slane %v234, 6
        %v428 = vrot.slane %v235, 6
        %v429 = vsel %vm391, %v427, %v428
        %v430 = vrot.slane %v236, 6
        %v431 = vsel %vm391, %v428, %v430
        %v432 = vrot.slane %v239, 6
        %v433 = vrot.slane %v240, 6
        %v434 = vsel %vm391, %v432, %v433
        %v435 = vrot.slane %v241, 6
        %v436 = vsel %vm391, %v433, %v435
        %v437 = vrot.slane %v244, 6
        %v438 = vrot.slane %v245, 6
        %v439 = vsel %vm391, %v437, %v438
        %v440 = vrot.slane %v246, 6
        %v441 = vsel %vm391, %v438, %v440
        %v442 = vrot.slane %v249, 6
        %v443 = vrot.slane %v250, 6
        %v444 = vsel %vm391, %v442, %v443
        %v445 = vrot.slane %v251, 6
        %v446 = vsel %vm391, %v443, %v445
        %v447 = vrot.slane %v254, 6
        %v448 = vrot.slane %v255, 6
        %v449 = vsel %vm391, %v447, %v448
        %v450 = vrot.slane %v256, 6
        %v451 = vsel %vm391, %v448, %v450
        %v452 = vrot.slane %v259, 6
        %v453 = vrot.slane %v260, 6
        %v454 = vsel %vm391, %v452, %v453
        %v455 = vrot.slane %v261, 6
        %v456 = vsel %vm391, %v453, %v455
        %v457 = vrot.slane %v264, 6
        %v458 = vrot.slane %v265, 6
        %v459 = vsel %vm391, %v457, %v458
        %v460 = vrot.slane %v266, 6
        %v461 = vsel %vm391, %v458, %v460
        %v462 = vrot.slane %v269, 6
        %v463 = vrot.slane %v270, 6
        %v464 = vsel %vm391, %v462, %v463
        %v465 = vrot.slane %v271, 6
        %v466 = vsel %vm391, %v463, %v465
        %v467 = vrot.slane %v274, 6
        %v468 = vrot.slane %v275, 6
        %v469 = vsel %vm391, %v467, %v468
        %v470 = vrot.slane %v276, 6
        %v471 = vsel %vm391, %v468, %v470
        %v472 = vld [vmem:[%s1] sm:$0xf]
        %vm473 = vcmask 31744
        %v474 = vsel %vm473, %v394, 0
        %v476 = vsel %vm473, %v396, 0
        %v478 = vsel %vm473, %v399, 0
        %v480 = vsel %vm473, %v401, 0
        %v482 = vsel %vm473, %v404, 0
        %v484 = vsel %vm473, %v406, 0
        %v486 = vsel %vm473, %v409, 0
        %v488 = vsel %vm473, %v411, 0
        %v490 = vsel %vm473, %v414, 0
        %v492 = vsel %vm473, %v416, 0
        %v494 = vsel %vm473, %v419, 0
        %v496 = vsel %vm473, %v421, 0
        %v498 = vsel %vm473, %v424, 0
        %v500 = vsel %vm473, %v426, 0
        %v502 = vsel %vm473, %v429, 0
        %v504 = vsel %vm473, %v431, 0
        %v506 = vsel %vm473, %v434, 0
        %v508 = vsel %vm473, %v436, 0
        %v510 = vsel %vm473, %v439, 0
        %v512 = vsel %vm473, %v441, 0
        %v514 = vsel %vm473, %v444, 0
        %v516 = vsel %vm473, %v446, 0
        %v518 = vsel %vm473, %v449, 0
        %v520 = vsel %vm473, %v451, 0
        %v522 = vsel %vm473, %v454, 0
        %v524 = vsel %vm473, %v456, 0
        %v526 = vsel %vm473, %v459, 0
        %v528 = vsel %vm473, %v461, 0
        %v530 = vsel %vm473, %v464, 0
        %v532 = vsel %vm473, %v466, 0
        %v534 = vsel %vm473, %v469, 0
        %v536 = vsel %vm473, %v471, 0
        %vm538 = vcmask 1043456
        %v540 = vsel %vm538, %v472, 0
        %542 = vmatpush.msra.mxu0 0.0
        %543 = vmatpush.msra.mxu0 0.0
        %544 = vmatpush.msra.mxu0 0.0
        %545 = vmatpush.msra.mxu0 0.0
        %546 = vmatpush.msra.mxu0 0.0
        %547 = vmatpush.msra.mxu0 0.0
        %548 = vmatpush.msra.mxu0 0.0
        %549 = vmatpush.msra.mxu0 0.0
        %550 = vmatpush.msra.mxu0 0.0
        %551 = vmatpush.msra.mxu0 0.0
        %552 = vmatpush.msra.mxu0 0.0
        %553 = vmatpush.msra.mxu0 0.0
        %554 = vmatpush.msra.mxu0 0.0
        %555 = vmatpush.msra.mxu0 0.0
        %556 = vmatpush.msra.mxu0 0.0
        %557 = vmatpush.msra.mxu0 %v540
        %558 = vmatmul.f32.gmra.mxu0 %v474
        %v559 = vpop.f32.mrf.mxu0
        %v560 = vadd.f32 0.0, %v559
        %561 = vmatmul.f32.gmra.mxu0 %v476
        %v562 = vpop.f32.mrf.mxu0
        %v563 = vadd.f32 0.0, %v562
        %564 = vmatmul.f32.gmra.mxu0 %v478
        %v565 = vpop.f32.mrf.mxu0
        %v566 = vadd.f32 0.0, %v565
        %567 = vmatmul.f32.gmra.mxu0 %v480
        %v568 = vpop.f32.mrf.mxu0
        %v569 = vadd.f32 0.0, %v568
        %570 = vmatmul.f32.gmra.mxu0 %v482
        %v571 = vpop.f32.mrf.mxu0
        %v572 = vadd.f32 0.0, %v571
        %573 = vmatmul.f32.gmra.mxu0 %v484
        %v574 = vpop.f32.mrf.mxu0
        %v575 = vadd.f32 0.0, %v574
        %576 = vmatmul.f32.gmra.mxu0 %v486
        %v577 = vpop.f32.mrf.mxu0
        %v578 = vadd.f32 0.0, %v577
        %579 = vmatmul.f32.gmra.mxu0 %v488
        %v580 = vpop.f32.mrf.mxu0
        %v581 = vadd.f32 0.0, %v580
        %582 = vmatmul.f32.gmra.mxu0 %v490
        %v583 = vpop.f32.mrf.mxu0
        %v584 = vadd.f32 0.0, %v583
        %585 = vmatmul.f32.gmra.mxu0 %v492
        %v586 = vpop.f32.mrf.mxu0
        %v587 = vadd.f32 0.0, %v586
        %588 = vmatmul.f32.gmra.mxu0 %v494
        %v589 = vpop.f32.mrf.mxu0
        %v590 = vadd.f32 0.0, %v589
        %591 = vmatmul.f32.gmra.mxu0 %v496
        %v592 = vpop.f32.mrf.mxu0
        %v593 = vadd.f32 0.0, %v592
        %594 = vmatmul.f32.gmra.mxu0 %v498
        %v595 = vpop.f32.mrf.mxu0
        %v596 = vadd.f32 0.0, %v595
        %597 = vmatmul.f32.gmra.mxu0 %v500
        %v598 = vpop.f32.mrf.mxu0
        %v599 = vadd.f32 0.0, %v598
        %600 = vmatmul.f32.gmra.mxu0 %v502
        %v601 = vpop.f32.mrf.mxu0
        %v602 = vadd.f32 0.0, %v601
        %603 = vmatmul.f32.gmra.mxu0 %v504
        %v604 = vpop.f32.mrf.mxu0
        %v605 = vadd.f32 0.0, %v604
        %606 = vmatmul.f32.gmra.mxu0 %v506
        %v607 = vpop.f32.mrf.mxu0
        %v608 = vadd.f32 0.0, %v607
        %609 = vmatmul.f32.gmra.mxu0 %v508
        %v610 = vpop.f32.mrf.mxu0
        %v611 = vadd.f32 0.0, %v610
        %612 = vmatmul.f32.gmra.mxu0 %v510
        %v613 = vpop.f32.mrf.mxu0
        %v614 = vadd.f32 0.0, %v613
        %615 = vmatmul.f32.gmra.mxu0 %v512
        %v616 = vpop.f32.mrf.mxu0
        %v617 = vadd.f32 0.0, %v616
        %618 = vmatmul.f32.gmra.mxu0 %v514
        %v619 = vpop.f32.mrf.mxu0
        %v620 = vadd.f32 0.0, %v619
        %621 = vmatmul.f32.gmra.mxu0 %v516
        %v622 = vpop.f32.mrf.mxu0
        %v623 = vadd.f32 0.0, %v622
        %624 = vmatmul.f32.gmra.mxu0 %v518
        %v625 = vpop.f32.mrf.mxu0
        %v626 = vadd.f32 0.0, %v625
        %627 = vmatmul.f32.gmra.mxu0 %v520
        %v628 = vpop.f32.mrf.mxu0
        %v629 = vadd.f32 0.0, %v628
        %630 = vmatmul.f32.gmra.mxu0 %v522
        %v631 = vpop.f32.mrf.mxu0
        %v632 = vadd.f32 0.0, %v631
        %633 = vmatmul.f32.gmra.mxu0 %v524
        %v634 = vpop.f32.mrf.mxu0
        %v635 = vadd.f32 0.0, %v634
        %636 = vmatmul.f32.gmra.mxu0 %v526
        %v637 = vpop.f32.mrf.mxu0
        %v638 = vadd.f32 0.0, %v637
        %639 = vmatmul.f32.gmra.mxu0 %v528
        %v640 = vpop.f32.mrf.mxu0
        %v641 = vadd.f32 0.0, %v640
        %642 = vmatmul.f32.gmra.mxu0 %v530
        %v643 = vpop.f32.mrf.mxu0
        %v644 = vadd.f32 0.0, %v643
        %645 = vmatmul.f32.gmra.mxu0 %v532
        %v646 = vpop.f32.mrf.mxu0
        %v647 = vadd.f32 0.0, %v646
        %648 = vmatmul.f32.gmra.mxu0 %v534
        %v649 = vpop.f32.mrf.mxu0
        %v650 = vadd.f32 0.0, %v649
        %651 = vmatmul.f32.gmra.mxu0 %v536
        %v652 = vpop.f32.mrf.mxu0
        %v653 = vadd.f32 0.0, %v652
        %654 = vdwg.mxu0
        %v655 = vadd.f32 %v341, %v560
        %v656 = vadd.f32 %v341, %v563
        %v657 = vadd.f32 %v341, %v566
        %v658 = vadd.f32 %v341, %v569
        %v659 = vadd.f32 %v341, %v572
        %v660 = vadd.f32 %v341, %v575
        %v661 = vadd.f32 %v341, %v578
        %v662 = vadd.f32 %v341, %v581
        %v663 = vadd.f32 %v341, %v584
        %v664 = vadd.f32 %v341, %v587
        %v665 = vadd.f32 %v341, %v590
        %v666 = vadd.f32 %v341, %v593
        %v667 = vadd.f32 %v341, %v596
        %v668 = vadd.f32 %v341, %v599
        %v669 = vadd.f32 %v341, %v602
        %v670 = vadd.f32 %v341, %v605
        %v671 = vadd.f32 %v341, %v608
        %v672 = vadd.f32 %v341, %v611
        %v673 = vadd.f32 %v341, %v614
        %v674 = vadd.f32 %v341, %v617
        %v675 = vadd.f32 %v341, %v620
        %v676 = vadd.f32 %v341, %v623
        %v677 = vadd.f32 %v341, %v626
        %v678 = vadd.f32 %v341, %v629
        %v679 = vadd.f32 %v341, %v632
        %v680 = vadd.f32 %v341, %v635
        %v681 = vadd.f32 %v341, %v638
        %v682 = vadd.f32 %v341, %v641
        %v683 = vadd.f32 %v341, %v644
        %v684 = vadd.f32 %v341, %v647
        %v685 = vadd.f32 %v341, %v650
        %v686 = vadd.f32 %v341, %v653
        %vm703 = vcmask 1046528
        %v704 = vrot.slane %v200, 1
        %v705 = vrot.slane %v201, 1
        %v706 = vsel %vm703, %v704, %v705
        %v707 = vrot.slane %v202, 1
        %v708 = vsel %vm703, %v705, %v707
        %v709 = vrot.slane %v205, 1
        %v710 = vrot.slane %v206, 1
        %v711 = vsel %vm703, %v709, %v710
        %v712 = vrot.slane %v207, 1
        %v713 = vsel %vm703, %v710, %v712
        %v714 = vrot.slane %v210, 1
        %v715 = vrot.slane %v211, 1
        %v716 = vsel %vm703, %v714, %v715
        %v717 = vrot.slane %v212, 1
        %v718 = vsel %vm703, %v715, %v717
        %v719 = vrot.slane %v215, 1
        %v720 = vrot.slane %v216, 1
        %v721 = vsel %vm703, %v719, %v720
        %v722 = vrot.slane %v217, 1
        %v723 = vsel %vm703, %v720, %v722
        %v724 = vrot.slane %v220, 1
        %v725 = vrot.slane %v221, 1
        %v726 = vsel %vm703, %v724, %v725
        %v727 = vrot.slane %v222, 1
        %v728 = vsel %vm703, %v725, %v727
        %v729 = vrot.slane %v225, 1
        %v730 = vrot.slane %v226, 1
        %v731 = vsel %vm703, %v729, %v730
        %v732 = vrot.slane %v227, 1
        %v733 = vsel %vm703, %v730, %v732
        %v734 = vrot.slane %v230, 1
        %v735 = vrot.slane %v231, 1
        %v736 = vsel %vm703, %v734, %v735
        %v737 = vrot.slane %v232, 1
        %v738 = vsel %vm703, %v735, %v737
        %v739 = vrot.slane %v235, 1
        %v740 = vrot.slane %v236, 1
        %v741 = vsel %vm703, %v739, %v740
        %v742 = vrot.slane %v237, 1
        %v743 = vsel %vm703, %v740, %v742
        %v744 = vrot.slane %v240, 1
        %v745 = vrot.slane %v241, 1
        %v746 = vsel %vm703, %v744, %v745
        %v747 = vrot.slane %v242, 1
        %v748 = vsel %vm703, %v745, %v747
        %v749 = vrot.slane %v245, 1
        %v750 = vrot.slane %v246, 1
        %v751 = vsel %vm703, %v749, %v750
        %v752 = vrot.slane %v247, 1
        %v753 = vsel %vm703, %v750, %v752
        %v754 = vrot.slane %v250, 1
        %v755 = vrot.slane %v251, 1
        %v756 = vsel %vm703, %v754, %v755
        %v757 = vrot.slane %v252, 1
        %v758 = vsel %vm703, %v755, %v757
        %v759 = vrot.slane %v255, 1
        %v760 = vrot.slane %v256, 1
        %v761 = vsel %vm703, %v759, %v760
        %v762 = vrot.slane %v257, 1
        %v763 = vsel %vm703, %v760, %v762
        %v764 = vrot.slane %v260, 1
        %v765 = vrot.slane %v261, 1
        %v766 = vsel %vm703, %v764, %v765
        %v767 = vrot.slane %v262, 1
        %v768 = vsel %vm703, %v765, %v767
        %v769 = vrot.slane %v265, 1
        %v770 = vrot.slane %v266, 1
        %v771 = vsel %vm703, %v769, %v770
        %v772 = vrot.slane %v267, 1
        %v773 = vsel %vm703, %v770, %v772
        %v774 = vrot.slane %v270, 1
        %v775 = vrot.slane %v271, 1
        %v776 = vsel %vm703, %v774, %v775
        %v777 = vrot.slane %v272, 1
        %v778 = vsel %vm703, %v775, %v777
        %v779 = vrot.slane %v275, 1
        %v780 = vrot.slane %v276, 1
        %v781 = vsel %vm703, %v779, %v780
        %v782 = vrot.slane %v277, 1
        %v783 = vsel %vm703, %v780, %v782
        %s784 = scalar_lea.vmem %s1, 4
        %v785 = vld [vmem:[%s784] sm:$0xf]
        %v786 = vsel %vm473, %v706, 0
        %v788 = vsel %vm473, %v708, 0
        %v790 = vsel %vm473, %v711, 0
        %v792 = vsel %vm473, %v713, 0
        %v794 = vsel %vm473, %v716, 0
        %v796 = vsel %vm473, %v718, 0
        %v798 = vsel %vm473, %v721, 0
        %v800 = vsel %vm473, %v723, 0
        %v802 = vsel %vm473, %v726, 0
        %v804 = vsel %vm473, %v728, 0
        %v806 = vsel %vm473, %v731, 0
        %v808 = vsel %vm473, %v733, 0
        %v810 = vsel %vm473, %v736, 0
        %v812 = vsel %vm473, %v738, 0
        %v814 = vsel %vm473, %v741, 0
        %v816 = vsel %vm473, %v743, 0
        %v818 = vsel %vm473, %v746, 0
        %v820 = vsel %vm473, %v748, 0
        %v822 = vsel %vm473, %v751, 0
        %v824 = vsel %vm473, %v753, 0
        %v826 = vsel %vm473, %v756, 0
        %v828 = vsel %vm473, %v758, 0
        %v830 = vsel %vm473, %v761, 0
        %v832 = vsel %vm473, %v763, 0
        %v834 = vsel %vm473, %v766, 0
        %v836 = vsel %vm473, %v768, 0
        %v838 = vsel %vm473, %v771, 0
        %v840 = vsel %vm473, %v773, 0
        %v842 = vsel %vm473, %v776, 0
        %v844 = vsel %vm473, %v778, 0
        %v846 = vsel %vm473, %v781, 0
        %v848 = vsel %vm473, %v783, 0
        %v851 = vsel %vm538, %v785, 0
        %853 = vmatpush.msra.mxu0 0.0
        %854 = vmatpush.msra.mxu0 0.0
        %855 = vmatpush.msra.mxu0 0.0
        %856 = vmatpush.msra.mxu0 0.0
        %857 = vmatpush.msra.mxu0 0.0
        %858 = vmatpush.msra.mxu0 0.0
        %859 = vmatpush.msra.mxu0 0.0
        %860 = vmatpush.msra.mxu0 0.0
        %861 = vmatpush.msra.mxu0 0.0
        %862 = vmatpush.msra.mxu0 0.0
        %863 = vmatpush.msra.mxu0 0.0
        %864 = vmatpush.msra.mxu0 0.0
        %865 = vmatpush.msra.mxu0 0.0
        %866 = vmatpush.msra.mxu0 0.0
        %867 = vmatpush.msra.mxu0 0.0
        %868 = vmatpush.msra.mxu0 %v851
        %869 = vmatmul.f32.gmra.mxu0 %v786
        %v870 = vpop.f32.mrf.mxu0
        %v871 = vadd.f32 0.0, %v870
        %872 = vmatmul.f32.gmra.mxu0 %v788
        %v873 = vpop.f32.mrf.mxu0
        %v874 = vadd.f32 0.0, %v873
        %875 = vmatmul.f32.gmra.mxu0 %v790
        %v876 = vpop.f32.mrf.mxu0
        %v877 = vadd.f32 0.0, %v876
        %878 = vmatmul.f32.gmra.mxu0 %v792
        %v879 = vpop.f32.mrf.mxu0
        %v880 = vadd.f32 0.0, %v879
        %881 = vmatmul.f32.gmra.mxu0 %v794
        %v882 = vpop.f32.mrf.mxu0
        %v883 = vadd.f32 0.0, %v882
        %884 = vmatmul.f32.gmra.mxu0 %v796
        %v885 = vpop.f32.mrf.mxu0
        %v886 = vadd.f32 0.0, %v885
        %887 = vmatmul.f32.gmra.mxu0 %v798
        %v888 = vpop.f32.mrf.mxu0
        %v889 = vadd.f32 0.0, %v888
        %890 = vmatmul.f32.gmra.mxu0 %v800
        %v891 = vpop.f32.mrf.mxu0
        %v892 = vadd.f32 0.0, %v891
        %893 = vmatmul.f32.gmra.mxu0 %v802
        %v894 = vpop.f32.mrf.mxu0
        %v895 = vadd.f32 0.0, %v894
        %896 = vmatmul.f32.gmra.mxu0 %v804
        %v897 = vpop.f32.mrf.mxu0
        %v898 = vadd.f32 0.0, %v897
        %899 = vmatmul.f32.gmra.mxu0 %v806
        %v900 = vpop.f32.mrf.mxu0
        %v901 = vadd.f32 0.0, %v900
        %902 = vmatmul.f32.gmra.mxu0 %v808
        %v903 = vpop.f32.mrf.mxu0
        %v904 = vadd.f32 0.0, %v903
        %905 = vmatmul.f32.gmra.mxu0 %v810
        %v906 = vpop.f32.mrf.mxu0
        %v907 = vadd.f32 0.0, %v906
        %908 = vmatmul.f32.gmra.mxu0 %v812
        %v909 = vpop.f32.mrf.mxu0
        %v910 = vadd.f32 0.0, %v909
        %911 = vmatmul.f32.gmra.mxu0 %v814
        %v912 = vpop.f32.mrf.mxu0
        %v913 = vadd.f32 0.0, %v912
        %914 = vmatmul.f32.gmra.mxu0 %v816
        %v915 = vpop.f32.mrf.mxu0
        %v916 = vadd.f32 0.0, %v915
        %917 = vmatmul.f32.gmra.mxu0 %v818
        %v918 = vpop.f32.mrf.mxu0
        %v919 = vadd.f32 0.0, %v918
        %920 = vmatmul.f32.gmra.mxu0 %v820
        %v921 = vpop.f32.mrf.mxu0
        %v922 = vadd.f32 0.0, %v921
        %923 = vmatmul.f32.gmra.mxu0 %v822
        %v924 = vpop.f32.mrf.mxu0
        %v925 = vadd.f32 0.0, %v924
        %926 = vmatmul.f32.gmra.mxu0 %v824
        %v927 = vpop.f32.mrf.mxu0
        %v928 = vadd.f32 0.0, %v927
        %929 = vmatmul.f32.gmra.mxu0 %v826
        %v930 = vpop.f32.mrf.mxu0
        %v931 = vadd.f32 0.0, %v930
        %932 = vmatmul.f32.gmra.mxu0 %v828
        %v933 = vpop.f32.mrf.mxu0
        %v934 = vadd.f32 0.0, %v933
        %935 = vmatmul.f32.gmra.mxu0 %v830
        %v936 = vpop.f32.mrf.mxu0
        %v937 = vadd.f32 0.0, %v936
        %938 = vmatmul.f32.gmra.mxu0 %v832
        %v939 = vpop.f32.mrf.mxu0
        %v940 = vadd.f32 0.0, %v939
        %941 = vmatmul.f32.gmra.mxu0 %v834
        %v942 = vpop.f32.mrf.mxu0
        %v943 = vadd.f32 0.0, %v942
        %944 = vmatmul.f32.gmra.mxu0 %v836
        %v945 = vpop.f32.mrf.mxu0
        %v946 = vadd.f32 0.0, %v945
        %947 = vmatmul.f32.gmra.mxu0 %v838
        %v948 = vpop.f32.mrf.mxu0
        %v949 = vadd.f32 0.0, %v948
        %950 = vmatmul.f32.gmra.mxu0 %v840
        %v951 = vpop.f32.mrf.mxu0
        %v952 = vadd.f32 0.0, %v951
        %953 = vmatmul.f32.gmra.mxu0 %v842
        %v954 = vpop.f32.mrf.mxu0
        %v955 = vadd.f32 0.0, %v954
        %956 = vmatmul.f32.gmra.mxu0 %v844
        %v957 = vpop.f32.mrf.mxu0
        %v958 = vadd.f32 0.0, %v957
        %959 = vmatmul.f32.gmra.mxu0 %v846
        %v960 = vpop.f32.mrf.mxu0
        %v961 = vadd.f32 0.0, %v960
        %962 = vmatmul.f32.gmra.mxu0 %v848
        %v963 = vpop.f32.mrf.mxu0
        %v964 = vadd.f32 0.0, %v963
        %965 = vdwg.mxu0
        %v966 = vadd.f32 %v655, %v871
        %v967 = vadd.f32 %v656, %v874
        %v968 = vadd.f32 %v657, %v877
        %v969 = vadd.f32 %v658, %v880
        %v970 = vadd.f32 %v659, %v883
        %v971 = vadd.f32 %v660, %v886
        %v972 = vadd.f32 %v661, %v889
        %v973 = vadd.f32 %v662, %v892
        %v974 = vadd.f32 %v663, %v895
        %v975 = vadd.f32 %v664, %v898
        %v976 = vadd.f32 %v665, %v901
        %v977 = vadd.f32 %v666, %v904
        %v978 = vadd.f32 %v667, %v907
        %v979 = vadd.f32 %v668, %v910
        %v980 = vadd.f32 %v669, %v913
        %v981 = vadd.f32 %v670, %v916
        %v982 = vadd.f32 %v671, %v919
        %v983 = vadd.f32 %v672, %v922
        %v984 = vadd.f32 %v673, %v925
        %v985 = vadd.f32 %v674, %v928
        %v986 = vadd.f32 %v675, %v931
        %v987 = vadd.f32 %v676, %v934
        %v988 = vadd.f32 %v677, %v937
        %v989 = vadd.f32 %v678, %v940
        %v990 = vadd.f32 %v679, %v943
        %v991 = vadd.f32 %v680, %v946
        %v992 = vadd.f32 %v681, %v949
        %v993 = vadd.f32 %v682, %v952
        %v994 = vadd.f32 %v683, %v955
        %v995 = vadd.f32 %v684, %v958
        %v996 = vadd.f32 %v685, %v961
        %v997 = vadd.f32 %v686, %v964
        %v998 = vrot.slane %v200, 4
        %v999 = vrot.slane %v201, 4
        %v1000 = vsel %vm538, %v998, %v999
        %v1001 = vrot.slane %v202, 4
        %v1002 = vsel %vm538, %v999, %v1001
        %v1003 = vrot.slane %v205, 4
        %v1004 = vrot.slane %v206, 4
        %v1005 = vsel %vm538, %v1003, %v1004
        %v1006 = vrot.slane %v207, 4
        %v1007 = vsel %vm538, %v1004, %v1006
        %v1008 = vrot.slane %v210, 4
        %v1009 = vrot.slane %v211, 4
        %v1010 = vsel %vm538, %v1008, %v1009
        %v1011 = vrot.slane %v212, 4
        %v1012 = vsel %vm538, %v1009, %v1011
        %v1013 = vrot.slane %v215, 4
        %v1014 = vrot.slane %v216, 4
        %v1015 = vsel %vm538, %v1013, %v1014
        %v1016 = vrot.slane %v217, 4
        %v1017 = vsel %vm538, %v1014, %v1016
        %v1018 = vrot.slane %v220, 4
        %v1019 = vrot.slane %v221, 4
        %v1020 = vsel %vm538, %v1018, %v1019
        %v1021 = vrot.slane %v222, 4
        %v1022 = vsel %vm538, %v1019, %v1021
        %v1023 = vrot.slane %v225, 4
        %v1024 = vrot.slane %v226, 4
        %v1025 = vsel %vm538, %v1023, %v1024
        %v1026 = vrot.slane %v227, 4
        %v1027 = vsel %vm538, %v1024, %v1026
        %v1028 = vrot.slane %v230, 4
        %v1029 = vrot.slane %v231, 4
        %v1030 = vsel %vm538, %v1028, %v1029
        %v1031 = vrot.slane %v232, 4
        %v1032 = vsel %vm538, %v1029, %v1031
        %v1033 = vrot.slane %v235, 4
        %v1034 = vrot.slane %v236, 4
        %v1035 = vsel %vm538, %v1033, %v1034
        %v1036 = vrot.slane %v237, 4
        %v1037 = vsel %vm538, %v1034, %v1036
        %v1038 = vrot.slane %v240, 4
        %v1039 = vrot.slane %v241, 4
        %v1040 = vsel %vm538, %v1038, %v1039
        %v1041 = vrot.slane %v242, 4
        %v1042 = vsel %vm538, %v1039, %v1041
        %v1043 = vrot.slane %v245, 4
        %v1044 = vrot.slane %v246, 4
        %v1045 = vsel %vm538, %v1043, %v1044
        %v1046 = vrot.slane %v247, 4
        %v1047 = vsel %vm538, %v1044, %v1046
        %v1048 = vrot.slane %v250, 4
        %v1049 = vrot.slane %v251, 4
        %v1050 = vsel %vm538, %v1048, %v1049
        %v1051 = vrot.slane %v252, 4
        %v1052 = vsel %vm538, %v1049, %v1051
        %v1053 = vrot.slane %v255, 4
        %v1054 = vrot.slane %v256, 4
        %v1055 = vsel %vm538, %v1053, %v1054
        %v1056 = vrot.slane %v257, 4
        %v1057 = vsel %vm538, %v1054, %v1056
        %v1058 = vrot.slane %v260, 4
        %v1059 = vrot.slane %v261, 4
        %v1060 = vsel %vm538, %v1058, %v1059
        %v1061 = vrot.slane %v262, 4
        %v1062 = vsel %vm538, %v1059, %v1061
        %v1063 = vrot.slane %v265, 4
        %v1064 = vrot.slane %v266, 4
        %v1065 = vsel %vm538, %v1063, %v1064
        %v1066 = vrot.slane %v267, 4
        %v1067 = vsel %vm538, %v1064, %v1066
        %v1068 = vrot.slane %v270, 4
        %v1069 = vrot.slane %v271, 4
        %v1070 = vsel %vm538, %v1068, %v1069
        %v1071 = vrot.slane %v272, 4
        %v1072 = vsel %vm538, %v1069, %v1071
        %v1073 = vrot.slane %v275, 4
        %v1074 = vrot.slane %v276, 4
        %v1075 = vsel %vm538, %v1073, %v1074
        %v1076 = vrot.slane %v277, 4
        %v1077 = vsel %vm538, %v1074, %v1076
        %s1078 = scalar_lea.vmem %s1, 8
        %v1079 = vld [vmem:[%s1078] sm:$0xf]
        %v1080 = vsel %vm473, %v1000, 0
        %v1082 = vsel %vm473, %v1002, 0
        %v1084 = vsel %vm473, %v1005, 0
        %v1086 = vsel %vm473, %v1007, 0
        %v1088 = vsel %vm473, %v1010, 0
        %v1090 = vsel %vm473, %v1012, 0
        %v1092 = vsel %vm473, %v1015, 0
        %v1094 = vsel %vm473, %v1017, 0
        %v1096 = vsel %vm473, %v1020, 0
        %v1098 = vsel %vm473, %v1022, 0
        %v1100 = vsel %vm473, %v1025, 0
        %v1102 = vsel %vm473, %v1027, 0
        %v1104 = vsel %vm473, %v1030, 0
        %v1106 = vsel %vm473, %v1032, 0
        %v1108 = vsel %vm473, %v1035, 0
        %v1110 = vsel %vm473, %v1037, 0
        %v1112 = vsel %vm473, %v1040, 0
        %v1114 = vsel %vm473, %v1042, 0
        %v1116 = vsel %vm473, %v1045, 0
        %v1118 = vsel %vm473, %v1047, 0
        %v1120 = vsel %vm473, %v1050, 0
        %v1122 = vsel %vm473, %v1052, 0
        %v1124 = vsel %vm473, %v1055, 0
        %v1126 = vsel %vm473, %v1057, 0
        %v1128 = vsel %vm473, %v1060, 0
        %v1130 = vsel %vm473, %v1062, 0
        %v1132 = vsel %vm473, %v1065, 0
        %v1134 = vsel %vm473, %v1067, 0
        %v1136 = vsel %vm473, %v1070, 0
        %v1138 = vsel %vm473, %v1072, 0
        %v1140 = vsel %vm473, %v1075, 0
        %v1142 = vsel %vm473, %v1077, 0
        %v1145 = vsel %vm538, %v1079, 0
        %1147 = vmatpush.msra.mxu0 0.0
        %1148 = vmatpush.msra.mxu0 0.0
        %1149 = vmatpush.msra.mxu0 0.0
        %1150 = vmatpush.msra.mxu0 0.0
        %1151 = vmatpush.msra.mxu0 0.0
        %1152 = vmatpush.msra.mxu0 0.0
        %1153 = vmatpush.msra.mxu0 0.0
        %1154 = vmatpush.msra.mxu0 0.0
        %1155 = vmatpush.msra.mxu0 0.0
        %1156 = vmatpush.msra.mxu0 0.0
        %1157 = vmatpush.msra.mxu0 0.0
        %1158 = vmatpush.msra.mxu0 0.0
        %1159 = vmatpush.msra.mxu0 0.0
        %1160 = vmatpush.msra.mxu0 0.0
        %1161 = vmatpush.msra.mxu0 0.0
        %1162 = vmatpush.msra.mxu0 %v1145
        %1163 = vmatmul.f32.gmra.mxu0 %v1080
        %v1164 = vpop.f32.mrf.mxu0
        %v1165 = vadd.f32 0.0, %v1164
        %1166 = vmatmul.f32.gmra.mxu0 %v1082
        %v1167 = vpop.f32.mrf.mxu0
        %v1168 = vadd.f32 0.0, %v1167
        %1169 = vmatmul.f32.gmra.mxu0 %v1084
        %v1170 = vpop.f32.mrf.mxu0
        %v1171 = vadd.f32 0.0, %v1170
        %1172 = vmatmul.f32.gmra.mxu0 %v1086
        %v1173 = vpop.f32.mrf.mxu0
        %v1174 = vadd.f32 0.0, %v1173
        %1175 = vmatmul.f32.gmra.mxu0 %v1088
        %v1176 = vpop.f32.mrf.mxu0
        %v1177 = vadd.f32 0.0, %v1176
        %1178 = vmatmul.f32.gmra.mxu0 %v1090
        %v1179 = vpop.f32.mrf.mxu0
        %v1180 = vadd.f32 0.0, %v1179
        %1181 = vmatmul.f32.gmra.mxu0 %v1092
        %v1182 = vpop.f32.mrf.mxu0
        %v1183 = vadd.f32 0.0, %v1182
        %1184 = vmatmul.f32.gmra.mxu0 %v1094
        %v1185 = vpop.f32.mrf.mxu0
        %v1186 = vadd.f32 0.0, %v1185
        %1187 = vmatmul.f32.gmra.mxu0 %v1096
        %v1188 = vpop.f32.mrf.mxu0
        %v1189 = vadd.f32 0.0, %v1188
        %1190 = vmatmul.f32.gmra.mxu0 %v1098
        %v1191 = vpop.f32.mrf.mxu0
        %v1192 = vadd.f32 0.0, %v1191
        %1193 = vmatmul.f32.gmra.mxu0 %v1100
        %v1194 = vpop.f32.mrf.mxu0
        %v1195 = vadd.f32 0.0, %v1194
        %1196 = vmatmul.f32.gmra.mxu0 %v1102
        %v1197 = vpop.f32.mrf.mxu0
        %v1198 = vadd.f32 0.0, %v1197
        %1199 = vmatmul.f32.gmra.mxu0 %v1104
        %v1200 = vpop.f32.mrf.mxu0
        %v1201 = vadd.f32 0.0, %v1200
        %1202 = vmatmul.f32.gmra.mxu0 %v1106
        %v1203 = vpop.f32.mrf.mxu0
        %v1204 = vadd.f32 0.0, %v1203
        %1205 = vmatmul.f32.gmra.mxu0 %v1108
        %v1206 = vpop.f32.mrf.mxu0
        %v1207 = vadd.f32 0.0, %v1206
        %1208 = vmatmul.f32.gmra.mxu0 %v1110
        %v1209 = vpop.f32.mrf.mxu0
        %v1210 = vadd.f32 0.0, %v1209
        %1211 = vmatmul.f32.gmra.mxu0 %v1112
        %v1212 = vpop.f32.mrf.mxu0
        %v1213 = vadd.f32 0.0, %v1212
        %1214 = vmatmul.f32.gmra.mxu0 %v1114
        %v1215 = vpop.f32.mrf.mxu0
        %v1216 = vadd.f32 0.0, %v1215
        %1217 = vmatmul.f32.gmra.mxu0 %v1116
        %v1218 = vpop.f32.mrf.mxu0
        %v1219 = vadd.f32 0.0, %v1218
        %1220 = vmatmul.f32.gmra.mxu0 %v1118
        %v1221 = vpop.f32.mrf.mxu0
        %v1222 = vadd.f32 0.0, %v1221
        %1223 = vmatmul.f32.gmra.mxu0 %v1120
        %v1224 = vpop.f32.mrf.mxu0
        %v1225 = vadd.f32 0.0, %v1224
        %1226 = vmatmul.f32.gmra.mxu0 %v1122
        %v1227 = vpop.f32.mrf.mxu0
        %v1228 = vadd.f32 0.0, %v1227
        %1229 = vmatmul.f32.gmra.mxu0 %v1124
        %v1230 = vpop.f32.mrf.mxu0
        %v1231 = vadd.f32 0.0, %v1230
        %1232 = vmatmul.f32.gmra.mxu0 %v1126
        %v1233 = vpop.f32.mrf.mxu0
        %v1234 = vadd.f32 0.0, %v1233
        %1235 = vmatmul.f32.gmra.mxu0 %v1128
        %v1236 = vpop.f32.mrf.mxu0
        %v1237 = vadd.f32 0.0, %v1236
        %1238 = vmatmul.f32.gmra.mxu0 %v1130
        %v1239 = vpop.f32.mrf.mxu0
        %v1240 = vadd.f32 0.0, %v1239
        %1241 = vmatmul.f32.gmra.mxu0 %v1132
        %v1242 = vpop.f32.mrf.mxu0
        %v1243 = vadd.f32 0.0, %v1242
        %1244 = vmatmul.f32.gmra.mxu0 %v1134
        %v1245 = vpop.f32.mrf.mxu0
        %v1246 = vadd.f32 0.0, %v1245
        %1247 = vmatmul.f32.gmra.mxu0 %v1136
        %v1248 = vpop.f32.mrf.mxu0
        %v1249 = vadd.f32 0.0, %v1248
        %1250 = vmatmul.f32.gmra.mxu0 %v1138
        %v1251 = vpop.f32.mrf.mxu0
        %v1252 = vadd.f32 0.0, %v1251
        %1253 = vmatmul.f32.gmra.mxu0 %v1140
        %v1254 = vpop.f32.mrf.mxu0
        %v1255 = vadd.f32 0.0, %v1254
        %1256 = vmatmul.f32.gmra.mxu0 %v1142
        %v1257 = vpop.f32.mrf.mxu0
        %v1258 = vadd.f32 0.0, %v1257
        %1259 = vdwg.mxu0
        %v1260 = vadd.f32 %v966, %v1165
        %v1261 = vadd.f32 %v967, %v1168
        %v1262 = vadd.f32 %v968, %v1171
        %v1263 = vadd.f32 %v969, %v1174
        %v1264 = vadd.f32 %v970, %v1177
        %v1265 = vadd.f32 %v971, %v1180
        %v1266 = vadd.f32 %v972, %v1183
        %v1267 = vadd.f32 %v973, %v1186
        %v1268 = vadd.f32 %v974, %v1189
        %v1269 = vadd.f32 %v975, %v1192
        %v1270 = vadd.f32 %v976, %v1195
        %v1271 = vadd.f32 %v977, %v1198
        %v1272 = vadd.f32 %v978, %v1201
        %v1273 = vadd.f32 %v979, %v1204
        %v1274 = vadd.f32 %v980, %v1207
        %v1275 = vadd.f32 %v981, %v1210
        %v1276 = vadd.f32 %v982, %v1213
        %v1277 = vadd.f32 %v983, %v1216
        %v1278 = vadd.f32 %v984, %v1219
        %v1279 = vadd.f32 %v985, %v1222
        %v1280 = vadd.f32 %v986, %v1225
        %v1281 = vadd.f32 %v987, %v1228
        %v1282 = vadd.f32 %v988, %v1231
        %v1283 = vadd.f32 %v989, %v1234
        %v1284 = vadd.f32 %v990, %v1237
        %v1285 = vadd.f32 %v991, %v1240
        %v1286 = vadd.f32 %v992, %v1243
        %v1287 = vadd.f32 %v993, %v1246
        %v1288 = vadd.f32 %v994, %v1249
        %v1289 = vadd.f32 %v995, %v1252
        %v1290 = vadd.f32 %v996, %v1255
        %v1291 = vadd.f32 %v997, %v1258
        %v1301 = vrot.slane %v279, 6
        %v1302 = vrot.slane %v280, 6
        %v1303 = vsel %vm391, %v1301, %v1302
        %v1304 = vrot.slane %v281, 6
        %v1305 = vsel %vm391, %v1302, %v1304
        %v1306 = vrot.slane %v284, 6
        %v1307 = vrot.slane %v285, 6
        %v1308 = vsel %vm391, %v1306, %v1307
        %v1309 = vrot.slane %v286, 6
        %v1310 = vsel %vm391, %v1307, %v1309
        %v1311 = vrot.slane %v289, 6
        %v1312 = vrot.slane %v290, 6
        %v1313 = vsel %vm391, %v1311, %v1312
        %v1314 = vrot.slane %v291, 6
        %v1315 = vsel %vm391, %v1312, %v1314
        %s1316 = scalar_lea.vmem %s1, 12
        %v1317 = vld [vmem:[%s1316] sm:$0xf]
        %v1318 = vsel %vm473, %v1303, 0
        %v1320 = vsel %vm473, %v1305, 0
        %v1322 = vsel %vm473, %v1308, 0
        %v1324 = vsel %vm473, %v1310, 0
        %v1326 = vsel %vm473, %v1313, 0
        %v1328 = vsel %vm473, %v1315, 0
        %v1331 = vsel %vm538, %v1317, 0
        %1333 = vmatpush.msra.mxu0 0.0
        %1334 = vmatpush.msra.mxu0 0.0
        %1335 = vmatpush.msra.mxu0 0.0
        %1336 = vmatpush.msra.mxu0 0.0
        %1337 = vmatpush.msra.mxu0 0.0
        %1338 = vmatpush.msra.mxu0 0.0
        %1339 = vmatpush.msra.mxu0 0.0
        %1340 = vmatpush.msra.mxu0 0.0
        %1341 = vmatpush.msra.mxu0 0.0
        %1342 = vmatpush.msra.mxu0 0.0
        %1343 = vmatpush.msra.mxu0 0.0
        %1344 = vmatpush.msra.mxu0 0.0
        %1345 = vmatpush.msra.mxu0 0.0
        %1346 = vmatpush.msra.mxu0 0.0
        %1347 = vmatpush.msra.mxu0 0.0
        %1348 = vmatpush.msra.mxu0 %v1331
        %1349 = vmatmul.f32.gmra.mxu0 %v486
        %v1350 = vpop.f32.mrf.mxu0
        %v1351 = vadd.f32 0.0, %v1350
        %1352 = vmatmul.f32.gmra.mxu0 %v488
        %v1353 = vpop.f32.mrf.mxu0
        %v1354 = vadd.f32 0.0, %v1353
        %1355 = vmatmul.f32.gmra.mxu0 %v490
        %v1356 = vpop.f32.mrf.mxu0
        %v1357 = vadd.f32 0.0, %v1356
        %1358 = vmatmul.f32.gmra.mxu0 %v492
        %v1359 = vpop.f32.mrf.mxu0
        %v1360 = vadd.f32 0.0, %v1359
        %1361 = vmatmul.f32.gmra.mxu0 %v494
        %v1362 = vpop.f32.mrf.mxu0
        %v1363 = vadd.f32 0.0, %v1362
        %1364 = vmatmul.f32.gmra.mxu0 %v496
        %v1365 = vpop.f32.mrf.mxu0
        %v1366 = vadd.f32 0.0, %v1365
        %1367 = vmatmul.f32.gmra.mxu0 %v498
        %v1368 = vpop.f32.mrf.mxu0
        %v1369 = vadd.f32 0.0, %v1368
        %1370 = vmatmul.f32.gmra.mxu0 %v500
        %v1371 = vpop.f32.mrf.mxu0
        %v1372 = vadd.f32 0.0, %v1371
        %1373 = vmatmul.f32.gmra.mxu0 %v502
        %v1374 = vpop.f32.mrf.mxu0
        %v1375 = vadd.f32 0.0, %v1374
        %1376 = vmatmul.f32.gmra.mxu0 %v504
        %v1377 = vpop.f32.mrf.mxu0
        %v1378 = vadd.f32 0.0, %v1377
        %1379 = vmatmul.f32.gmra.mxu0 %v506
        %v1380 = vpop.f32.mrf.mxu0
        %v1381 = vadd.f32 0.0, %v1380
        %1382 = vmatmul.f32.gmra.mxu0 %v508
        %v1383 = vpop.f32.mrf.mxu0
        %v1384 = vadd.f32 0.0, %v1383
        %1385 = vmatmul.f32.gmra.mxu0 %v510
        %v1386 = vpop.f32.mrf.mxu0
        %v1387 = vadd.f32 0.0, %v1386
        %1388 = vmatmul.f32.gmra.mxu0 %v512
        %v1389 = vpop.f32.mrf.mxu0
        %v1390 = vadd.f32 0.0, %v1389
        %1391 = vmatmul.f32.gmra.mxu0 %v514
        %v1392 = vpop.f32.mrf.mxu0
        %v1393 = vadd.f32 0.0, %v1392
        %1394 = vmatmul.f32.gmra.mxu0 %v516
        %v1395 = vpop.f32.mrf.mxu0
        %v1396 = vadd.f32 0.0, %v1395
        %1397 = vmatmul.f32.gmra.mxu0 %v518
        %v1398 = vpop.f32.mrf.mxu0
        %v1399 = vadd.f32 0.0, %v1398
        %1400 = vmatmul.f32.gmra.mxu0 %v520
        %v1401 = vpop.f32.mrf.mxu0
        %v1402 = vadd.f32 0.0, %v1401
        %1403 = vmatmul.f32.gmra.mxu0 %v522
        %v1404 = vpop.f32.mrf.mxu0
        %v1405 = vadd.f32 0.0, %v1404
        %1406 = vmatmul.f32.gmra.mxu0 %v524
        %v1407 = vpop.f32.mrf.mxu0
        %v1408 = vadd.f32 0.0, %v1407
        %1409 = vmatmul.f32.gmra.mxu0 %v526
        %v1410 = vpop.f32.mrf.mxu0
        %v1411 = vadd.f32 0.0, %v1410
        %1412 = vmatmul.f32.gmra.mxu0 %v528
        %v1413 = vpop.f32.mrf.mxu0
        %v1414 = vadd.f32 0.0, %v1413
        %1415 = vmatmul.f32.gmra.mxu0 %v530
        %v1416 = vpop.f32.mrf.mxu0
        %v1417 = vadd.f32 0.0, %v1416
        %1418 = vmatmul.f32.gmra.mxu0 %v532
        %v1419 = vpop.f32.mrf.mxu0
        %v1420 = vadd.f32 0.0, %v1419
        %1421 = vmatmul.f32.gmra.mxu0 %v534
        %v1422 = vpop.f32.mrf.mxu0
        %v1423 = vadd.f32 0.0, %v1422
        %1424 = vmatmul.f32.gmra.mxu0 %v536
        %v1425 = vpop.f32.mrf.mxu0
        %v1426 = vadd.f32 0.0, %v1425
        %1427 = vmatmul.f32.gmra.mxu0 %v1318
        %v1428 = vpop.f32.mrf.mxu0
        %v1429 = vadd.f32 0.0, %v1428
        %1430 = vmatmul.f32.gmra.mxu0 %v1320
        %v1431 = vpop.f32.mrf.mxu0
        %v1432 = vadd.f32 0.0, %v1431
        %1433 = vmatmul.f32.gmra.mxu0 %v1322
        %v1434 = vpop.f32.mrf.mxu0
        %v1435 = vadd.f32 0.0, %v1434
        %1436 = vmatmul.f32.gmra.mxu0 %v1324
        %v1437 = vpop.f32.mrf.mxu0
        %v1438 = vadd.f32 0.0, %v1437
        %1439 = vmatmul.f32.gmra.mxu0 %v1326
        %v1440 = vpop.f32.mrf.mxu0
        %v1441 = vadd.f32 0.0, %v1440
        %1442 = vmatmul.f32.gmra.mxu0 %v1328
        %v1443 = vpop.f32.mrf.mxu0
        %v1444 = vadd.f32 0.0, %v1443
        %1445 = vdwg.mxu0
        %v1446 = vadd.f32 %v1260, %v1351
        %v1447 = vadd.f32 %v1261, %v1354
        %v1448 = vadd.f32 %v1262, %v1357
        %v1449 = vadd.f32 %v1263, %v1360
        %v1450 = vadd.f32 %v1264, %v1363
        %v1451 = vadd.f32 %v1265, %v1366
        %v1452 = vadd.f32 %v1266, %v1369
        %v1453 = vadd.f32 %v1267, %v1372
        %v1454 = vadd.f32 %v1268, %v1375
        %v1455 = vadd.f32 %v1269, %v1378
        %v1456 = vadd.f32 %v1270, %v1381
        %v1457 = vadd.f32 %v1271, %v1384
        %v1458 = vadd.f32 %v1272, %v1387
        %v1459 = vadd.f32 %v1273, %v1390
        %v1460 = vadd.f32 %v1274, %v1393
        %v1461 = vadd.f32 %v1275, %v1396
        %v1462 = vadd.f32 %v1276, %v1399
        %v1463 = vadd.f32 %v1277, %v1402
        %v1464 = vadd.f32 %v1278, %v1405
        %v1465 = vadd.f32 %v1279, %v1408
        %v1466 = vadd.f32 %v1280, %v1411
        %v1467 = vadd.f32 %v1281, %v1414
        %v1468 = vadd.f32 %v1282, %v1417
        %v1469 = vadd.f32 %v1283, %v1420
        %v1470 = vadd.f32 %v1284, %v1423
        %v1471 = vadd.f32 %v1285, %v1426
        %v1472 = vadd.f32 %v1286, %v1429
        %v1473 = vadd.f32 %v1287, %v1432
        %v1474 = vadd.f32 %v1288, %v1435
        %v1475 = vadd.f32 %v1289, %v1438
        %v1476 = vadd.f32 %v1290, %v1441
        %v1477 = vadd.f32 %v1291, %v1444
        %v1481 = vrot.slane %v280, 1
        %v1482 = vrot.slane %v281, 1
        %v1483 = vsel %vm703, %v1481, %v1482
        %v1484 = vrot.slane %v282, 1
        %v1485 = vsel %vm703, %v1482, %v1484
        %v1486 = vrot.slane %v285, 1
        %v1487 = vrot.slane %v286, 1
        %v1488 = vsel %vm703, %v1486, %v1487
        %v1489 = vrot.slane %v287, 1
        %v1490 = vsel %vm703, %v1487, %v1489
        %v1491 = vrot.slane %v290, 1
        %v1492 = vrot.slane %v291, 1
        %v1493 = vsel %vm703, %v1491, %v1492
        %v1494 = vrot.slane %v292, 1
        %v1495 = vsel %vm703, %v1492, %v1494
        %s1496 = scalar_lea.vmem %s1, 16
        %v1497 = vld [vmem:[%s1496] sm:$0xf]
        %v1498 = vsel %vm473, %v1483, 0
        %v1500 = vsel %vm473, %v1485, 0
        %v1502 = vsel %vm473, %v1488, 0
        %v1504 = vsel %vm473, %v1490, 0
        %v1506 = vsel %vm473, %v1493, 0
        %v1508 = vsel %vm473, %v1495, 0
        %v1511 = vsel %vm538, %v1497, 0
        %1513 = vmatpush.msra.mxu0 0.0
        %1514 = vmatpush.msra.mxu0 0.0
        %1515 = vmatpush.msra.mxu0 0.0
        %1516 = vmatpush.msra.mxu0 0.0
        %1517 = vmatpush.msra.mxu0 0.0
        %1518 = vmatpush.msra.mxu0 0.0
        %1519 = vmatpush.msra.mxu0 0.0
        %1520 = vmatpush.msra.mxu0 0.0
        %1521 = vmatpush.msra.mxu0 0.0
        %1522 = vmatpush.msra.mxu0 0.0
        %1523 = vmatpush.msra.mxu0 0.0
        %1524 = vmatpush.msra.mxu0 0.0
        %1525 = vmatpush.msra.mxu0 0.0
        %1526 = vmatpush.msra.mxu0 0.0
        %1527 = vmatpush.msra.mxu0 0.0
        %1528 = vmatpush.msra.mxu0 %v1511
        %1529 = vmatmul.f32.gmra.mxu0 %v798
        %v1530 = vpop.f32.mrf.mxu0
        %v1531 = vadd.f32 0.0, %v1530
        %1532 = vmatmul.f32.gmra.mxu0 %v800
        %v1533 = vpop.f32.mrf.mxu0
        %v1534 = vadd.f32 0.0, %v1533
        %1535 = vmatmul.f32.gmra.mxu0 %v802
        %v1536 = vpop.f32.mrf.mxu0
        %v1537 = vadd.f32 0.0, %v1536
        %1538 = vmatmul.f32.gmra.mxu0 %v804
        %v1539 = vpop.f32.mrf.mxu0
        %v1540 = vadd.f32 0.0, %v1539
        %1541 = vmatmul.f32.gmra.mxu0 %v806
        %v1542 = vpop.f32.mrf.mxu0
        %v1543 = vadd.f32 0.0, %v1542
        %1544 = vmatmul.f32.gmra.mxu0 %v808
        %v1545 = vpop.f32.mrf.mxu0
        %v1546 = vadd.f32 0.0, %v1545
        %1547 = vmatmul.f32.gmra.mxu0 %v810
        %v1548 = vpop.f32.mrf.mxu0
        %v1549 = vadd.f32 0.0, %v1548
        %1550 = vmatmul.f32.gmra.mxu0 %v812
        %v1551 = vpop.f32.mrf.mxu0
        %v1552 = vadd.f32 0.0, %v1551
        %1553 = vmatmul.f32.gmra.mxu0 %v814
        %v1554 = vpop.f32.mrf.mxu0
        %v1555 = vadd.f32 0.0, %v1554
        %1556 = vmatmul.f32.gmra.mxu0 %v816
        %v1557 = vpop.f32.mrf.mxu0
        %v1558 = vadd.f32 0.0, %v1557
        %1559 = vmatmul.f32.gmra.mxu0 %v818
        %v1560 = vpop.f32.mrf.mxu0
        %v1561 = vadd.f32 0.0, %v1560
        %1562 = vmatmul.f32.gmra.mxu0 %v820
        %v1563 = vpop.f32.mrf.mxu0
        %v1564 = vadd.f32 0.0, %v1563
        %1565 = vmatmul.f32.gmra.mxu0 %v822
        %v1566 = vpop.f32.mrf.mxu0
        %v1567 = vadd.f32 0.0, %v1566
        %1568 = vmatmul.f32.gmra.mxu0 %v824
        %v1569 = vpop.f32.mrf.mxu0
        %v1570 = vadd.f32 0.0, %v1569
        %1571 = vmatmul.f32.gmra.mxu0 %v826
        %v1572 = vpop.f32.mrf.mxu0
        %v1573 = vadd.f32 0.0, %v1572
        %1574 = vmatmul.f32.gmra.mxu0 %v828
        %v1575 = vpop.f32.mrf.mxu0
        %v1576 = vadd.f32 0.0, %v1575
        %1577 = vmatmul.f32.gmra.mxu0 %v830
        %v1578 = vpop.f32.mrf.mxu0
        %v1579 = vadd.f32 0.0, %v1578
        %1580 = vmatmul.f32.gmra.mxu0 %v832
        %v1581 = vpop.f32.mrf.mxu0
        %v1582 = vadd.f32 0.0, %v1581
        %1583 = vmatmul.f32.gmra.mxu0 %v834
        %v1584 = vpop.f32.mrf.mxu0
        %v1585 = vadd.f32 0.0, %v1584
        %1586 = vmatmul.f32.gmra.mxu0 %v836
        %v1587 = vpop.f32.mrf.mxu0
        %v1588 = vadd.f32 0.0, %v1587
        %1589 = vmatmul.f32.gmra.mxu0 %v838
        %v1590 = vpop.f32.mrf.mxu0
        %v1591 = vadd.f32 0.0, %v1590
        %1592 = vmatmul.f32.gmra.mxu0 %v840
        %v1593 = vpop.f32.mrf.mxu0
        %v1594 = vadd.f32 0.0, %v1593
        %1595 = vmatmul.f32.gmra.mxu0 %v842
        %v1596 = vpop.f32.mrf.mxu0
        %v1597 = vadd.f32 0.0, %v1596
        %1598 = vmatmul.f32.gmra.mxu0 %v844
        %v1599 = vpop.f32.mrf.mxu0
        %v1600 = vadd.f32 0.0, %v1599
        %1601 = vmatmul.f32.gmra.mxu0 %v846
        %v1602 = vpop.f32.mrf.mxu0
        %v1603 = vadd.f32 0.0, %v1602
        %1604 = vmatmul.f32.gmra.mxu0 %v848
        %v1605 = vpop.f32.mrf.mxu0
        %v1606 = vadd.f32 0.0, %v1605
        %1607 = vmatmul.f32.gmra.mxu0 %v1498
        %v1608 = vpop.f32.mrf.mxu0
        %v1609 = vadd.f32 0.0, %v1608
        %1610 = vmatmul.f32.gmra.mxu0 %v1500
        %v1611 = vpop.f32.mrf.mxu0
        %v1612 = vadd.f32 0.0, %v1611
        %1613 = vmatmul.f32.gmra.mxu0 %v1502
        %v1614 = vpop.f32.mrf.mxu0
        %v1615 = vadd.f32 0.0, %v1614
        %1616 = vmatmul.f32.gmra.mxu0 %v1504
        %v1617 = vpop.f32.mrf.mxu0
        %v1618 = vadd.f32 0.0, %v1617
        %1619 = vmatmul.f32.gmra.mxu0 %v1506
        %v1620 = vpop.f32.mrf.mxu0
        %v1621 = vadd.f32 0.0, %v1620
        %1622 = vmatmul.f32.gmra.mxu0 %v1508
        %v1623 = vpop.f32.mrf.mxu0
        %v1624 = vadd.f32 0.0, %v1623
        %1625 = vdwg.mxu0
        %v1626 = vadd.f32 %v1446, %v1531
        %v1627 = vadd.f32 %v1447, %v1534
        %v1628 = vadd.f32 %v1448, %v1537
        %v1629 = vadd.f32 %v1449, %v1540
        %v1630 = vadd.f32 %v1450, %v1543
        %v1631 = vadd.f32 %v1451, %v1546
        %v1632 = vadd.f32 %v1452, %v1549
        %v1633 = vadd.f32 %v1453, %v1552
        %v1634 = vadd.f32 %v1454, %v1555
        %v1635 = vadd.f32 %v1455, %v1558
        %v1636 = vadd.f32 %v1456, %v1561
        %v1637 = vadd.f32 %v1457, %v1564
        %v1638 = vadd.f32 %v1458, %v1567
        %v1639 = vadd.f32 %v1459, %v1570
        %v1640 = vadd.f32 %v1460, %v1573
        %v1641 = vadd.f32 %v1461, %v1576
        %v1642 = vadd.f32 %v1462, %v1579
        %v1643 = vadd.f32 %v1463, %v1582
        %v1644 = vadd.f32 %v1464, %v1585
        %v1645 = vadd.f32 %v1465, %v1588
        %v1646 = vadd.f32 %v1466, %v1591
        %v1647 = vadd.f32 %v1467, %v1594
        %v1648 = vadd.f32 %v1468, %v1597
        %v1649 = vadd.f32 %v1469, %v1600
        %v1650 = vadd.f32 %v1470, %v1603
        %v1651 = vadd.f32 %v1471, %v1606
        %v1652 = vadd.f32 %v1472, %v1609
        %v1653 = vadd.f32 %v1473, %v1612
        %v1654 = vadd.f32 %v1474, %v1615
        %v1655 = vadd.f32 %v1475, %v1618
        %v1656 = vadd.f32 %v1476, %v1621
        %v1657 = vadd.f32 %v1477, %v1624
        %v1658 = vrot.slane %v280, 4
        %v1659 = vrot.slane %v281, 4
        %v1660 = vsel %vm538, %v1658, %v1659
        %v1661 = vrot.slane %v282, 4
        %v1662 = vsel %vm538, %v1659, %v1661
        %v1663 = vrot.slane %v285, 4
        %v1664 = vrot.slane %v286, 4
        %v1665 = vsel %vm538, %v1663, %v1664
        %v1666 = vrot.slane %v287, 4
        %v1667 = vsel %vm538, %v1664, %v1666
        %v1668 = vrot.slane %v290, 4
        %v1669 = vrot.slane %v291, 4
        %v1670 = vsel %vm538, %v1668, %v1669
        %v1671 = vrot.slane %v292, 4
        %v1672 = vsel %vm538, %v1669, %v1671
        %s1673 = scalar_lea.vmem %s1, 20
        %v1674 = vld [vmem:[%s1673] sm:$0xf]
        %v1675 = vsel %vm473, %v1660, 0
        %v1677 = vsel %vm473, %v1662, 0
        %v1679 = vsel %vm473, %v1665, 0
        %v1681 = vsel %vm473, %v1667, 0
        %v1683 = vsel %vm473, %v1670, 0
        %v1685 = vsel %vm473, %v1672, 0
        %v1688 = vsel %vm538, %v1674, 0
        %1690 = vmatpush.msra.mxu0 0.0
        %1691 = vmatpush.msra.mxu0 0.0
        %1692 = vmatpush.msra.mxu0 0.0
        %1693 = vmatpush.msra.mxu0 0.0
        %1694 = vmatpush.msra.mxu0 0.0
        %1695 = vmatpush.msra.mxu0 0.0
        %1696 = vmatpush.msra.mxu0 0.0
        %1697 = vmatpush.msra.mxu0 0.0
        %1698 = vmatpush.msra.mxu0 0.0
        %1699 = vmatpush.msra.mxu0 0.0
        %1700 = vmatpush.msra.mxu0 0.0
        %1701 = vmatpush.msra.mxu0 0.0
        %1702 = vmatpush.msra.mxu0 0.0
        %1703 = vmatpush.msra.mxu0 0.0
        %1704 = vmatpush.msra.mxu0 0.0
        %1705 = vmatpush.msra.mxu0 %v1688
        %1706 = vmatmul.f32.gmra.mxu0 %v1092
        %v1707 = vpop.f32.mrf.mxu0
        %v1708 = vadd.f32 0.0, %v1707
        %1709 = vmatmul.f32.gmra.mxu0 %v1094
        %v1710 = vpop.f32.mrf.mxu0
        %v1711 = vadd.f32 0.0, %v1710
        %1712 = vmatmul.f32.gmra.mxu0 %v1096
        %v1713 = vpop.f32.mrf.mxu0
        %v1714 = vadd.f32 0.0, %v1713
        %1715 = vmatmul.f32.gmra.mxu0 %v1098
        %v1716 = vpop.f32.mrf.mxu0
        %v1717 = vadd.f32 0.0, %v1716
        %1718 = vmatmul.f32.gmra.mxu0 %v1100
        %v1719 = vpop.f32.mrf.mxu0
        %v1720 = vadd.f32 0.0, %v1719
        %1721 = vmatmul.f32.gmra.mxu0 %v1102
        %v1722 = vpop.f32.mrf.mxu0
        %v1723 = vadd.f32 0.0, %v1722
        %1724 = vmatmul.f32.gmra.mxu0 %v1104
        %v1725 = vpop.f32.mrf.mxu0
        %v1726 = vadd.f32 0.0, %v1725
        %1727 = vmatmul.f32.gmra.mxu0 %v1106
        %v1728 = vpop.f32.mrf.mxu0
        %v1729 = vadd.f32 0.0, %v1728
        %1730 = vmatmul.f32.gmra.mxu0 %v1108
        %v1731 = vpop.f32.mrf.mxu0
        %v1732 = vadd.f32 0.0, %v1731
        %1733 = vmatmul.f32.gmra.mxu0 %v1110
        %v1734 = vpop.f32.mrf.mxu0
        %v1735 = vadd.f32 0.0, %v1734
        %1736 = vmatmul.f32.gmra.mxu0 %v1112
        %v1737 = vpop.f32.mrf.mxu0
        %v1738 = vadd.f32 0.0, %v1737
        %1739 = vmatmul.f32.gmra.mxu0 %v1114
        %v1740 = vpop.f32.mrf.mxu0
        %v1741 = vadd.f32 0.0, %v1740
        %1742 = vmatmul.f32.gmra.mxu0 %v1116
        %v1743 = vpop.f32.mrf.mxu0
        %v1744 = vadd.f32 0.0, %v1743
        %1745 = vmatmul.f32.gmra.mxu0 %v1118
        %v1746 = vpop.f32.mrf.mxu0
        %v1747 = vadd.f32 0.0, %v1746
        %1748 = vmatmul.f32.gmra.mxu0 %v1120
        %v1749 = vpop.f32.mrf.mxu0
        %v1750 = vadd.f32 0.0, %v1749
        %1751 = vmatmul.f32.gmra.mxu0 %v1122
        %v1752 = vpop.f32.mrf.mxu0
        %v1753 = vadd.f32 0.0, %v1752
        %1754 = vmatmul.f32.gmra.mxu0 %v1124
        %v1755 = vpop.f32.mrf.mxu0
        %v1756 = vadd.f32 0.0, %v1755
        %1757 = vmatmul.f32.gmra.mxu0 %v1126
        %v1758 = vpop.f32.mrf.mxu0
        %v1759 = vadd.f32 0.0, %v1758
        %1760 = vmatmul.f32.gmra.mxu0 %v1128
        %v1761 = vpop.f32.mrf.mxu0
        %v1762 = vadd.f32 0.0, %v1761
        %1763 = vmatmul.f32.gmra.mxu0 %v1130
        %v1764 = vpop.f32.mrf.mxu0
        %v1765 = vadd.f32 0.0, %v1764
        %1766 = vmatmul.f32.gmra.mxu0 %v1132
        %v1767 = vpop.f32.mrf.mxu0
        %v1768 = vadd.f32 0.0, %v1767
        %1769 = vmatmul.f32.gmra.mxu0 %v1134
        %v1770 = vpop.f32.mrf.mxu0
        %v1771 = vadd.f32 0.0, %v1770
        %1772 = vmatmul.f32.gmra.mxu0 %v1136
        %v1773 = vpop.f32.mrf.mxu0
        %v1774 = vadd.f32 0.0, %v1773
        %1775 = vmatmul.f32.gmra.mxu0 %v1138
        %v1776 = vpop.f32.mrf.mxu0
        %v1777 = vadd.f32 0.0, %v1776
        %1778 = vmatmul.f32.gmra.mxu0 %v1140
        %v1779 = vpop.f32.mrf.mxu0
        %v1780 = vadd.f32 0.0, %v1779
        %1781 = vmatmul.f32.gmra.mxu0 %v1142
        %v1782 = vpop.f32.mrf.mxu0
        %v1783 = vadd.f32 0.0, %v1782
        %1784 = vmatmul.f32.gmra.mxu0 %v1675
        %v1785 = vpop.f32.mrf.mxu0
        %v1786 = vadd.f32 0.0, %v1785
        %1787 = vmatmul.f32.gmra.mxu0 %v1677
        %v1788 = vpop.f32.mrf.mxu0
        %v1789 = vadd.f32 0.0, %v1788
        %1790 = vmatmul.f32.gmra.mxu0 %v1679
        %v1791 = vpop.f32.mrf.mxu0
        %v1792 = vadd.f32 0.0, %v1791
        %1793 = vmatmul.f32.gmra.mxu0 %v1681
        %v1794 = vpop.f32.mrf.mxu0
        %v1795 = vadd.f32 0.0, %v1794
        %1796 = vmatmul.f32.gmra.mxu0 %v1683
        %v1797 = vpop.f32.mrf.mxu0
        %v1798 = vadd.f32 0.0, %v1797
        %1799 = vmatmul.f32.gmra.mxu0 %v1685
        %v1800 = vpop.f32.mrf.mxu0
        %v1801 = vadd.f32 0.0, %v1800
        %1802 = vdwg.mxu0
        %v1803 = vadd.f32 %v1626, %v1708
        %v1804 = vadd.f32 %v1627, %v1711
        %v1805 = vadd.f32 %v1628, %v1714
        %v1806 = vadd.f32 %v1629, %v1717
        %v1807 = vadd.f32 %v1630, %v1720
        %v1808 = vadd.f32 %v1631, %v1723
        %v1809 = vadd.f32 %v1632, %v1726
        %v1810 = vadd.f32 %v1633, %v1729
        %v1811 = vadd.f32 %v1634, %v1732
        %v1812 = vadd.f32 %v1635, %v1735
        %v1813 = vadd.f32 %v1636, %v1738
        %v1814 = vadd.f32 %v1637, %v1741
        %v1815 = vadd.f32 %v1638, %v1744
        %v1816 = vadd.f32 %v1639, %v1747
        %v1817 = vadd.f32 %v1640, %v1750
        %v1818 = vadd.f32 %v1641, %v1753
        %v1819 = vadd.f32 %v1642, %v1756
        %v1820 = vadd.f32 %v1643, %v1759
        %v1821 = vadd.f32 %v1644, %v1762
        %v1822 = vadd.f32 %v1645, %v1765
        %v1823 = vadd.f32 %v1646, %v1768
        %v1824 = vadd.f32 %v1647, %v1771
        %v1825 = vadd.f32 %v1648, %v1774
        %v1826 = vadd.f32 %v1649, %v1777
        %v1827 = vadd.f32 %v1650, %v1780
        %v1828 = vadd.f32 %v1651, %v1783
        %v1829 = vadd.f32 %v1652, %v1786
        %v1830 = vadd.f32 %v1653, %v1789
        %v1831 = vadd.f32 %v1654, %v1792
        %v1832 = vadd.f32 %v1655, %v1795
        %v1833 = vadd.f32 %v1656, %v1798
        %v1834 = vadd.f32 %v1657, %v1801
        %v1844 = vrot.slane %v294, 6
        %v1845 = vrot.slane %v295, 6
        %v1846 = vsel %vm391, %v1844, %v1845
        %v1847 = vrot.slane %v296, 6
        %v1848 = vsel %vm391, %v1845, %v1847
        %v1849 = vrot.slane %v299, 6
        %v1850 = vrot.slane %v300, 6
        %v1851 = vsel %vm391, %v1849, %v1850
        %v1852 = vrot.slane %v301, 6
        %v1853 = vsel %vm391, %v1850, %v1852
        %v1854 = vrot.slane %v304, 6
        %v1855 = vrot.slane %v305, 6
        %v1856 = vsel %vm391, %v1854, %v1855
        %v1857 = vrot.slane %v306, 6
        %v1858 = vsel %vm391, %v1855, %v1857
        %s1859 = scalar_lea.vmem %s1, 24
        %v1860 = vld [vmem:[%s1859] sm:$0xf]
        %v1861 = vsel %vm473, %v1846, 0
        %v1863 = vsel %vm473, %v1848, 0
        %v1865 = vsel %vm473, %v1851, 0
        %v1867 = vsel %vm473, %v1853, 0
        %v1869 = vsel %vm473, %v1856, 0
        %v1871 = vsel %vm473, %v1858, 0
        %v1874 = vsel %vm538, %v1860, 0
        %1876 = vmatpush.msra.mxu0 0.0
        %1877 = vmatpush.msra.mxu0 0.0
        %1878 = vmatpush.msra.mxu0 0.0
        %1879 = vmatpush.msra.mxu0 0.0
        %1880 = vmatpush.msra.mxu0 0.0
        %1881 = vmatpush.msra.mxu0 0.0
        %1882 = vmatpush.msra.mxu0 0.0
        %1883 = vmatpush.msra.mxu0 0.0
        %1884 = vmatpush.msra.mxu0 0.0
        %1885 = vmatpush.msra.mxu0 0.0
        %1886 = vmatpush.msra.mxu0 0.0
        %1887 = vmatpush.msra.mxu0 0.0
        %1888 = vmatpush.msra.mxu0 0.0
        %1889 = vmatpush.msra.mxu0 0.0
        %1890 = vmatpush.msra.mxu0 0.0
        %1891 = vmatpush.msra.mxu0 %v1874
        %1892 = vmatmul.f32.gmra.mxu0 %v498
        %v1893 = vpop.f32.mrf.mxu0
        %v1894 = vadd.f32 0.0, %v1893
        %1895 = vmatmul.f32.gmra.mxu0 %v500
        %v1896 = vpop.f32.mrf.mxu0
        %v1897 = vadd.f32 0.0, %v1896
        %1898 = vmatmul.f32.gmra.mxu0 %v502
        %v1899 = vpop.f32.mrf.mxu0
        %v1900 = vadd.f32 0.0, %v1899
        %1901 = vmatmul.f32.gmra.mxu0 %v504
        %v1902 = vpop.f32.mrf.mxu0
        %v1903 = vadd.f32 0.0, %v1902
        %1904 = vmatmul.f32.gmra.mxu0 %v506
        %v1905 = vpop.f32.mrf.mxu0
        %v1906 = vadd.f32 0.0, %v1905
        %1907 = vmatmul.f32.gmra.mxu0 %v508
        %v1908 = vpop.f32.mrf.mxu0
        %v1909 = vadd.f32 0.0, %v1908
        %1910 = vmatmul.f32.gmra.mxu0 %v510
        %v1911 = vpop.f32.mrf.mxu0
        %v1912 = vadd.f32 0.0, %v1911
        %1913 = vmatmul.f32.gmra.mxu0 %v512
        %v1914 = vpop.f32.mrf.mxu0
        %v1915 = vadd.f32 0.0, %v1914
        %1916 = vmatmul.f32.gmra.mxu0 %v514
        %v1917 = vpop.f32.mrf.mxu0
        %v1918 = vadd.f32 0.0, %v1917
        %1919 = vmatmul.f32.gmra.mxu0 %v516
        %v1920 = vpop.f32.mrf.mxu0
        %v1921 = vadd.f32 0.0, %v1920
        %1922 = vmatmul.f32.gmra.mxu0 %v518
        %v1923 = vpop.f32.mrf.mxu0
        %v1924 = vadd.f32 0.0, %v1923
        %1925 = vmatmul.f32.gmra.mxu0 %v520
        %v1926 = vpop.f32.mrf.mxu0
        %v1927 = vadd.f32 0.0, %v1926
        %1928 = vmatmul.f32.gmra.mxu0 %v522
        %v1929 = vpop.f32.mrf.mxu0
        %v1930 = vadd.f32 0.0, %v1929
        %1931 = vmatmul.f32.gmra.mxu0 %v524
        %v1932 = vpop.f32.mrf.mxu0
        %v1933 = vadd.f32 0.0, %v1932
        %1934 = vmatmul.f32.gmra.mxu0 %v526
        %v1935 = vpop.f32.mrf.mxu0
        %v1936 = vadd.f32 0.0, %v1935
        %1937 = vmatmul.f32.gmra.mxu0 %v528
        %v1938 = vpop.f32.mrf.mxu0
        %v1939 = vadd.f32 0.0, %v1938
        %1940 = vmatmul.f32.gmra.mxu0 %v530
        %v1941 = vpop.f32.mrf.mxu0
        %v1942 = vadd.f32 0.0, %v1941
        %1943 = vmatmul.f32.gmra.mxu0 %v532
        %v1944 = vpop.f32.mrf.mxu0
        %v1945 = vadd.f32 0.0, %v1944
        %1946 = vmatmul.f32.gmra.mxu0 %v534
        %v1947 = vpop.f32.mrf.mxu0
        %v1948 = vadd.f32 0.0, %v1947
        %1949 = vmatmul.f32.gmra.mxu0 %v536
        %v1950 = vpop.f32.mrf.mxu0
        %v1951 = vadd.f32 0.0, %v1950
        %1952 = vmatmul.f32.gmra.mxu0 %v1318
        %v1953 = vpop.f32.mrf.mxu0
        %v1954 = vadd.f32 0.0, %v1953
        %1955 = vmatmul.f32.gmra.mxu0 %v1320
        %v1956 = vpop.f32.mrf.mxu0
        %v1957 = vadd.f32 0.0, %v1956
        %1958 = vmatmul.f32.gmra.mxu0 %v1322
        %v1959 = vpop.f32.mrf.mxu0
        %v1960 = vadd.f32 0.0, %v1959
        %1961 = vmatmul.f32.gmra.mxu0 %v1324
        %v1962 = vpop.f32.mrf.mxu0
        %v1963 = vadd.f32 0.0, %v1962
        %1964 = vmatmul.f32.gmra.mxu0 %v1326
        %v1965 = vpop.f32.mrf.mxu0
        %v1966 = vadd.f32 0.0, %v1965
        %1967 = vmatmul.f32.gmra.mxu0 %v1328
        %v1968 = vpop.f32.mrf.mxu0
        %v1969 = vadd.f32 0.0, %v1968
        %1970 = vmatmul.f32.gmra.mxu0 %v1861
        %v1971 = vpop.f32.mrf.mxu0
        %v1972 = vadd.f32 0.0, %v1971
        %1973 = vmatmul.f32.gmra.mxu0 %v1863
        %v1974 = vpop.f32.mrf.mxu0
        %v1975 = vadd.f32 0.0, %v1974
        %1976 = vmatmul.f32.gmra.mxu0 %v1865
        %v1977 = vpop.f32.mrf.mxu0
        %v1978 = vadd.f32 0.0, %v1977
        %1979 = vmatmul.f32.gmra.mxu0 %v1867
        %v1980 = vpop.f32.mrf.mxu0
        %v1981 = vadd.f32 0.0, %v1980
        %1982 = vmatmul.f32.gmra.mxu0 %v1869
        %v1983 = vpop.f32.mrf.mxu0
        %v1984 = vadd.f32 0.0, %v1983
        %1985 = vmatmul.f32.gmra.mxu0 %v1871
        %v1986 = vpop.f32.mrf.mxu0
        %v1987 = vadd.f32 0.0, %v1986
        %1988 = vdwg.mxu0
        %v1989 = vadd.f32 %v1803, %v1894
        %v1990 = vadd.f32 %v1804, %v1897
        %v1991 = vadd.f32 %v1805, %v1900
        %v1992 = vadd.f32 %v1806, %v1903
        %v1993 = vadd.f32 %v1807, %v1906
        %v1994 = vadd.f32 %v1808, %v1909
        %v1995 = vadd.f32 %v1809, %v1912
        %v1996 = vadd.f32 %v1810, %v1915
        %v1997 = vadd.f32 %v1811, %v1918
        %v1998 = vadd.f32 %v1812, %v1921
        %v1999 = vadd.f32 %v1813, %v1924
        %v2000 = vadd.f32 %v1814, %v1927
        %v2001 = vadd.f32 %v1815, %v1930
        %v2002 = vadd.f32 %v1816, %v1933
        %v2003 = vadd.f32 %v1817, %v1936
        %v2004 = vadd.f32 %v1818, %v1939
        %v2005 = vadd.f32 %v1819, %v1942
        %v2006 = vadd.f32 %v1820, %v1945
        %v2007 = vadd.f32 %v1821, %v1948
        %v2008 = vadd.f32 %v1822, %v1951
        %v2009 = vadd.f32 %v1823, %v1954
        %v2010 = vadd.f32 %v1824, %v1957
        %v2011 = vadd.f32 %v1825, %v1960
        %v2012 = vadd.f32 %v1826, %v1963
        %v2013 = vadd.f32 %v1827, %v1966
        %v2014 = vadd.f32 %v1828, %v1969
        %v2015 = vadd.f32 %v1829, %v1972
        %v2016 = vadd.f32 %v1830, %v1975
        %v2017 = vadd.f32 %v1831, %v1978
        %v2018 = vadd.f32 %v1832, %v1981
        %v2019 = vadd.f32 %v1833, %v1984
        %v2020 = vadd.f32 %v1834, %v1987
        %v2024 = vrot.slane %v295, 1
        %v2025 = vrot.slane %v296, 1
        %v2026 = vsel %vm703, %v2024, %v2025
        %v2027 = vrot.slane %v297, 1
        %v2028 = vsel %vm703, %v2025, %v2027
        %v2029 = vrot.slane %v300, 1
        %v2030 = vrot.slane %v301, 1
        %v2031 = vsel %vm703, %v2029, %v2030
        %v2032 = vrot.slane %v302, 1
        %v2033 = vsel %vm703, %v2030, %v2032
        %v2034 = vrot.slane %v305, 1
        %v2035 = vrot.slane %v306, 1
        %v2036 = vsel %vm703, %v2034, %v2035
        %v2037 = vrot.slane %v307, 1
        %v2038 = vsel %vm703, %v2035, %v2037
        %s2039 = scalar_lea.vmem %s1, 28
        %v2040 = vld [vmem:[%s2039] sm:$0xf]
        %v2041 = vsel %vm473, %v2026, 0
        %v2043 = vsel %vm473, %v2028, 0
        %v2045 = vsel %vm473, %v2031, 0
        %v2047 = vsel %vm473, %v2033, 0
        %v2049 = vsel %vm473, %v2036, 0
        %v2051 = vsel %vm473, %v2038, 0
        %v2054 = vsel %vm538, %v2040, 0
        %2056 = vmatpush.msra.mxu0 0.0
        %2057 = vmatpush.msra.mxu0 0.0
        %2058 = vmatpush.msra.mxu0 0.0
        %2059 = vmatpush.msra.mxu0 0.0
        %2060 = vmatpush.msra.mxu0 0.0
        %2061 = vmatpush.msra.mxu0 0.0
        %2062 = vmatpush.msra.mxu0 0.0
        %2063 = vmatpush.msra.mxu0 0.0
        %2064 = vmatpush.msra.mxu0 0.0
        %2065 = vmatpush.msra.mxu0 0.0
        %2066 = vmatpush.msra.mxu0 0.0
        %2067 = vmatpush.msra.mxu0 0.0
        %2068 = vmatpush.msra.mxu0 0.0
        %2069 = vmatpush.msra.mxu0 0.0
        %2070 = vmatpush.msra.mxu0 0.0
        %2071 = vmatpush.msra.mxu0 %v2054
        %2072 = vmatmul.f32.gmra.mxu0 %v810
        %v2073 = vpop.f32.mrf.mxu0
        %v2074 = vadd.f32 0.0, %v2073
        %2075 = vmatmul.f32.gmra.mxu0 %v812
        %v2076 = vpop.f32.mrf.mxu0
        %v2077 = vadd.f32 0.0, %v2076
        %2078 = vmatmul.f32.gmra.mxu0 %v814
        %v2079 = vpop.f32.mrf.mxu0
        %v2080 = vadd.f32 0.0, %v2079
        %2081 = vmatmul.f32.gmra.mxu0 %v816
        %v2082 = vpop.f32.mrf.mxu0
        %v2083 = vadd.f32 0.0, %v2082
        %2084 = vmatmul.f32.gmra.mxu0 %v818
        %v2085 = vpop.f32.mrf.mxu0
        %v2086 = vadd.f32 0.0, %v2085
        %2087 = vmatmul.f32.gmra.mxu0 %v820
        %v2088 = vpop.f32.mrf.mxu0
        %v2089 = vadd.f32 0.0, %v2088
        %2090 = vmatmul.f32.gmra.mxu0 %v822
        %v2091 = vpop.f32.mrf.mxu0
        %v2092 = vadd.f32 0.0, %v2091
        %2093 = vmatmul.f32.gmra.mxu0 %v824
        %v2094 = vpop.f32.mrf.mxu0
        %v2095 = vadd.f32 0.0, %v2094
        %2096 = vmatmul.f32.gmra.mxu0 %v826
        %v2097 = vpop.f32.mrf.mxu0
        %v2098 = vadd.f32 0.0, %v2097
        %2099 = vmatmul.f32.gmra.mxu0 %v828
        %v2100 = vpop.f32.mrf.mxu0
        %v2101 = vadd.f32 0.0, %v2100
        %2102 = vmatmul.f32.gmra.mxu0 %v830
        %v2103 = vpop.f32.mrf.mxu0
        %v2104 = vadd.f32 0.0, %v2103
        %2105 = vmatmul.f32.gmra.mxu0 %v832
        %v2106 = vpop.f32.mrf.mxu0
        %v2107 = vadd.f32 0.0, %v2106
        %2108 = vmatmul.f32.gmra.mxu0 %v834
        %v2109 = vpop.f32.mrf.mxu0
        %v2110 = vadd.f32 0.0, %v2109
        %2111 = vmatmul.f32.gmra.mxu0 %v836
        %v2112 = vpop.f32.mrf.mxu0
        %v2113 = vadd.f32 0.0, %v2112
        %2114 = vmatmul.f32.gmra.mxu0 %v838
        %v2115 = vpop.f32.mrf.mxu0
        %v2116 = vadd.f32 0.0, %v2115
        %2117 = vmatmul.f32.gmra.mxu0 %v840
        %v2118 = vpop.f32.mrf.mxu0
        %v2119 = vadd.f32 0.0, %v2118
        %2120 = vmatmul.f32.gmra.mxu0 %v842
        %v2121 = vpop.f32.mrf.mxu0
        %v2122 = vadd.f32 0.0, %v2121
        %2123 = vmatmul.f32.gmra.mxu0 %v844
        %v2124 = vpop.f32.mrf.mxu0
        %v2125 = vadd.f32 0.0, %v2124
        %2126 = vmatmul.f32.gmra.mxu0 %v846
        %v2127 = vpop.f32.mrf.mxu0
        %v2128 = vadd.f32 0.0, %v2127
        %2129 = vmatmul.f32.gmra.mxu0 %v848
        %v2130 = vpop.f32.mrf.mxu0
        %v2131 = vadd.f32 0.0, %v2130
        %2132 = vmatmul.f32.gmra.mxu0 %v1498
        %v2133 = vpop.f32.mrf.mxu0
        %v2134 = vadd.f32 0.0, %v2133
        %2135 = vmatmul.f32.gmra.mxu0 %v1500
        %v2136 = vpop.f32.mrf.mxu0
        %v2137 = vadd.f32 0.0, %v2136
        %2138 = vmatmul.f32.gmra.mxu0 %v1502
        %v2139 = vpop.f32.mrf.mxu0
        %v2140 = vadd.f32 0.0, %v2139
        %2141 = vmatmul.f32.gmra.mxu0 %v1504
        %v2142 = vpop.f32.mrf.mxu0
        %v2143 = vadd.f32 0.0, %v2142
        %2144 = vmatmul.f32.gmra.mxu0 %v1506
        %v2145 = vpop.f32.mrf.mxu0
        %v2146 = vadd.f32 0.0, %v2145
        %2147 = vmatmul.f32.gmra.mxu0 %v1508
        %v2148 = vpop.f32.mrf.mxu0
        %v2149 = vadd.f32 0.0, %v2148
        %2150 = vmatmul.f32.gmra.mxu0 %v2041
        %v2151 = vpop.f32.mrf.mxu0
        %v2152 = vadd.f32 0.0, %v2151
        %2153 = vmatmul.f32.gmra.mxu0 %v2043
        %v2154 = vpop.f32.mrf.mxu0
        %v2155 = vadd.f32 0.0, %v2154
        %2156 = vmatmul.f32.gmra.mxu0 %v2045
        %v2157 = vpop.f32.mrf.mxu0
        %v2158 = vadd.f32 0.0, %v2157
        %2159 = vmatmul.f32.gmra.mxu0 %v2047
        %v2160 = vpop.f32.mrf.mxu0
        %v2161 = vadd.f32 0.0, %v2160
        %2162 = vmatmul.f32.gmra.mxu0 %v2049
        %v2163 = vpop.f32.mrf.mxu0
        %v2164 = vadd.f32 0.0, %v2163
        %2165 = vmatmul.f32.gmra.mxu0 %v2051
        %v2166 = vpop.f32.mrf.mxu0
        %v2167 = vadd.f32 0.0, %v2166
        %2168 = vdwg.mxu0
        %v2169 = vadd.f32 %v1989, %v2074
        %v2170 = vadd.f32 %v1990, %v2077
        %v2171 = vadd.f32 %v1991, %v2080
        %v2172 = vadd.f32 %v1992, %v2083
        %v2173 = vadd.f32 %v1993, %v2086
        %v2174 = vadd.f32 %v1994, %v2089
        %v2175 = vadd.f32 %v1995, %v2092
        %v2176 = vadd.f32 %v1996, %v2095
        %v2177 = vadd.f32 %v1997, %v2098
        %v2178 = vadd.f32 %v1998, %v2101
        %v2179 = vadd.f32 %v1999, %v2104
        %v2180 = vadd.f32 %v2000, %v2107
        %v2181 = vadd.f32 %v2001, %v2110
        %v2182 = vadd.f32 %v2002, %v2113
        %v2183 = vadd.f32 %v2003, %v2116
        %v2184 = vadd.f32 %v2004, %v2119
        %v2185 = vadd.f32 %v2005, %v2122
        %v2186 = vadd.f32 %v2006, %v2125
        %v2187 = vadd.f32 %v2007, %v2128
        %v2188 = vadd.f32 %v2008, %v2131
        %v2189 = vadd.f32 %v2009, %v2134
        %v2190 = vadd.f32 %v2010, %v2137
        %v2191 = vadd.f32 %v2011, %v2140
        %v2192 = vadd.f32 %v2012, %v2143
        %v2193 = vadd.f32 %v2013, %v2146
        %v2194 = vadd.f32 %v2014, %v2149
        %v2195 = vadd.f32 %v2015, %v2152
        %v2196 = vadd.f32 %v2016, %v2155
        %v2197 = vadd.f32 %v2017, %v2158
        %v2198 = vadd.f32 %v2018, %v2161
        %v2199 = vadd.f32 %v2019, %v2164
        %v2200 = vadd.f32 %v2020, %v2167
        %v2201 = vrot.slane %v295, 4
        %v2202 = vrot.slane %v296, 4
        %v2203 = vsel %vm538, %v2201, %v2202
        %v2204 = vrot.slane %v297, 4
        %v2205 = vsel %vm538, %v2202, %v2204
        %v2206 = vrot.slane %v300, 4
        %v2207 = vrot.slane %v301, 4
        %v2208 = vsel %vm538, %v2206, %v2207
        %v2209 = vrot.slane %v302, 4
        %v2210 = vsel %vm538, %v2207, %v2209
        %v2211 = vrot.slane %v305, 4
        %v2212 = vrot.slane %v306, 4
        %v2213 = vsel %vm538, %v2211, %v2212
        %v2214 = vrot.slane %v307, 4
        %v2215 = vsel %vm538, %v2212, %v2214
        %s2216 = scalar_lea.vmem %s1, 32
        %v2217 = vld [vmem:[%s2216] sm:$0xf]
        %v2218 = vsel %vm473, %v2203, 0
        %v2220 = vsel %vm473, %v2205, 0
        %v2222 = vsel %vm473, %v2208, 0
        %v2224 = vsel %vm473, %v2210, 0
        %v2226 = vsel %vm473, %v2213, 0
        %v2228 = vsel %vm473, %v2215, 0
        %v2231 = vsel %vm538, %v2217, 0
        %2233 = vmatpush.msra.mxu0 0.0
        %2234 = vmatpush.msra.mxu0 0.0
        %2235 = vmatpush.msra.mxu0 0.0
        %2236 = vmatpush.msra.mxu0 0.0
        %2237 = vmatpush.msra.mxu0 0.0
        %2238 = vmatpush.msra.mxu0 0.0
        %2239 = vmatpush.msra.mxu0 0.0
        %2240 = vmatpush.msra.mxu0 0.0
        %2241 = vmatpush.msra.mxu0 0.0
        %2242 = vmatpush.msra.mxu0 0.0
        %2243 = vmatpush.msra.mxu0 0.0
        %2244 = vmatpush.msra.mxu0 0.0
        %2245 = vmatpush.msra.mxu0 0.0
        %2246 = vmatpush.msra.mxu0 0.0
        %2247 = vmatpush.msra.mxu0 0.0
        %2248 = vmatpush.msra.mxu0 %v2231
        %2249 = vmatmul.f32.gmra.mxu0 %v1104
        %v2250 = vpop.f32.mrf.mxu0
        %v2251 = vadd.f32 0.0, %v2250
        %2252 = vmatmul.f32.gmra.mxu0 %v1106
        %v2253 = vpop.f32.mrf.mxu0
        %v2254 = vadd.f32 0.0, %v2253
        %2255 = vmatmul.f32.gmra.mxu0 %v1108
        %v2256 = vpop.f32.mrf.mxu0
        %v2257 = vadd.f32 0.0, %v2256
        %2258 = vmatmul.f32.gmra.mxu0 %v1110
        %v2259 = vpop.f32.mrf.mxu0
        %v2260 = vadd.f32 0.0, %v2259
        %2261 = vmatmul.f32.gmra.mxu0 %v1112
        %v2262 = vpop.f32.mrf.mxu0
        %v2263 = vadd.f32 0.0, %v2262
        %2264 = vmatmul.f32.gmra.mxu0 %v1114
        %v2265 = vpop.f32.mrf.mxu0
        %v2266 = vadd.f32 0.0, %v2265
        %2267 = vmatmul.f32.gmra.mxu0 %v1116
        %v2268 = vpop.f32.mrf.mxu0
        %v2269 = vadd.f32 0.0, %v2268
        %2270 = vmatmul.f32.gmra.mxu0 %v1118
        %v2271 = vpop.f32.mrf.mxu0
        %v2272 = vadd.f32 0.0, %v2271
        %2273 = vmatmul.f32.gmra.mxu0 %v1120
        %v2274 = vpop.f32.mrf.mxu0
        %v2275 = vadd.f32 0.0, %v2274
        %2276 = vmatmul.f32.gmra.mxu0 %v1122
        %v2277 = vpop.f32.mrf.mxu0
        %v2278 = vadd.f32 0.0, %v2277
        %2279 = vmatmul.f32.gmra.mxu0 %v1124
        %v2280 = vpop.f32.mrf.mxu0
        %v2281 = vadd.f32 0.0, %v2280
        %2282 = vmatmul.f32.gmra.mxu0 %v1126
        %v2283 = vpop.f32.mrf.mxu0
        %v2284 = vadd.f32 0.0, %v2283
        %2285 = vmatmul.f32.gmra.mxu0 %v1128
        %v2286 = vpop.f32.mrf.mxu0
        %v2287 = vadd.f32 0.0, %v2286
        %2288 = vmatmul.f32.gmra.mxu0 %v1130
        %v2289 = vpop.f32.mrf.mxu0
        %v2290 = vadd.f32 0.0, %v2289
        %2291 = vmatmul.f32.gmra.mxu0 %v1132
        %v2292 = vpop.f32.mrf.mxu0
        %v2293 = vadd.f32 0.0, %v2292
        %2294 = vmatmul.f32.gmra.mxu0 %v1134
        %v2295 = vpop.f32.mrf.mxu0
        %v2296 = vadd.f32 0.0, %v2295
        %2297 = vmatmul.f32.gmra.mxu0 %v1136
        %v2298 = vpop.f32.mrf.mxu0
        %v2299 = vadd.f32 0.0, %v2298
        %2300 = vmatmul.f32.gmra.mxu0 %v1138
        %v2301 = vpop.f32.mrf.mxu0
        %v2302 = vadd.f32 0.0, %v2301
        %2303 = vmatmul.f32.gmra.mxu0 %v1140
        %v2304 = vpop.f32.mrf.mxu0
        %v2305 = vadd.f32 0.0, %v2304
        %2306 = vmatmul.f32.gmra.mxu0 %v1142
        %v2307 = vpop.f32.mrf.mxu0
        %v2308 = vadd.f32 0.0, %v2307
        %2309 = vmatmul.f32.gmra.mxu0 %v1675
        %v2310 = vpop.f32.mrf.mxu0
        %v2311 = vadd.f32 0.0, %v2310
        %2312 = vmatmul.f32.gmra.mxu0 %v1677
        %v2313 = vpop.f32.mrf.mxu0
        %v2314 = vadd.f32 0.0, %v2313
        %2315 = vmatmul.f32.gmra.mxu0 %v1679
        %v2316 = vpop.f32.mrf.mxu0
        %v2317 = vadd.f32 0.0, %v2316
        %2318 = vmatmul.f32.gmra.mxu0 %v1681
        %v2319 = vpop.f32.mrf.mxu0
        %v2320 = vadd.f32 0.0, %v2319
        %2321 = vmatmul.f32.gmra.mxu0 %v1683
        %v2322 = vpop.f32.mrf.mxu0
        %v2323 = vadd.f32 0.0, %v2322
        %2324 = vmatmul.f32.gmra.mxu0 %v1685
        %v2325 = vpop.f32.mrf.mxu0
        %v2326 = vadd.f32 0.0, %v2325
        %2327 = vmatmul.f32.gmra.mxu0 %v2218
        %v2328 = vpop.f32.mrf.mxu0
        %v2329 = vadd.f32 0.0, %v2328
        %2330 = vmatmul.f32.gmra.mxu0 %v2220
        %v2331 = vpop.f32.mrf.mxu0
        %v2332 = vadd.f32 0.0, %v2331
        %2333 = vmatmul.f32.gmra.mxu0 %v2222
        %v2334 = vpop.f32.mrf.mxu0
        %v2335 = vadd.f32 0.0, %v2334
        %2336 = vmatmul.f32.gmra.mxu0 %v2224
        %v2337 = vpop.f32.mrf.mxu0
        %v2338 = vadd.f32 0.0, %v2337
        %2339 = vmatmul.f32.gmra.mxu0 %v2226
        %v2340 = vpop.f32.mrf.mxu0
        %v2341 = vadd.f32 0.0, %v2340
        %2342 = vmatmul.f32.gmra.mxu0 %v2228
        %v2343 = vpop.f32.mrf.mxu0
        %v2344 = vadd.f32 0.0, %v2343
        %2345 = vdwg.mxu0
        %v2346 = vadd.f32 %v2169, %v2251
        %v2347 = vadd.f32 %v2170, %v2254
        %v2348 = vadd.f32 %v2171, %v2257
        %v2349 = vadd.f32 %v2172, %v2260
        %v2350 = vadd.f32 %v2173, %v2263
        %v2351 = vadd.f32 %v2174, %v2266
        %v2352 = vadd.f32 %v2175, %v2269
        %v2353 = vadd.f32 %v2176, %v2272
        %v2354 = vadd.f32 %v2177, %v2275
        %v2355 = vadd.f32 %v2178, %v2278
        %v2356 = vadd.f32 %v2179, %v2281
        %v2357 = vadd.f32 %v2180, %v2284
        %v2358 = vadd.f32 %v2181, %v2287
        %v2359 = vadd.f32 %v2182, %v2290
        %v2360 = vadd.f32 %v2183, %v2293
        %v2361 = vadd.f32 %v2184, %v2296
        %v2362 = vadd.f32 %v2185, %v2299
        %v2363 = vadd.f32 %v2186, %v2302
        %v2364 = vadd.f32 %v2187, %v2305
        %v2365 = vadd.f32 %v2188, %v2308
        %v2366 = vadd.f32 %v2189, %v2311
        %v2367 = vadd.f32 %v2190, %v2314
        %v2368 = vadd.f32 %v2191, %v2317
        %v2369 = vadd.f32 %v2192, %v2320
        %v2370 = vadd.f32 %v2193, %v2323
        %v2371 = vadd.f32 %v2194, %v2326
        %v2372 = vadd.f32 %v2195, %v2329
        %v2373 = vadd.f32 %v2196, %v2332
        %v2374 = vadd.f32 %v2197, %v2335
        %v2375 = vadd.f32 %v2198, %v2338
        %v2376 = vadd.f32 %v2199, %v2341
        %v2377 = vadd.f32 %v2200, %v2344
        %vm2387 = vcmask 1044480
        %v2388 = vrot.slane %v184, 3
        %v2389 = vrot.slane %v185, 3
        %v2390 = vsel %vm2387, %v2388, %v2389
        %v2391 = vrot.slane %v186, 3
        %v2392 = vsel %vm2387, %v2389, %v2391
        %v2393 = vrot.slane %v189, 3
        %v2394 = vrot.slane %v190, 3
        %v2395 = vsel %vm2387, %v2393, %v2394
        %v2396 = vrot.slane %v191, 3
        %v2397 = vsel %vm2387, %v2394, %v2396
        %v2398 = vrot.slane %v194, 3
        %v2399 = vrot.slane %v195, 3
        %v2400 = vsel %vm2387, %v2398, %v2399
        %v2401 = vrot.slane %v196, 3
        %v2402 = vsel %vm2387, %v2399, %v2401
        %v2403 = vrot.slane %v199, 3
        %v2404 = vrot.slane %v200, 3
        %v2405 = vsel %vm2387, %v2403, %v2404
        %v2406 = vrot.slane %v201, 3
        %v2407 = vsel %vm2387, %v2404, %v2406
        %v2408 = vrot.slane %v204, 3
        %v2409 = vrot.slane %v205, 3
        %v2410 = vsel %vm2387, %v2408, %v2409
        %v2411 = vrot.slane %v206, 3
        %v2412 = vsel %vm2387, %v2409, %v2411
        %v2413 = vrot.slane %v209, 3
        %v2414 = vrot.slane %v210, 3
        %v2415 = vsel %vm2387, %v2413, %v2414
        %v2416 = vrot.slane %v211, 3
        %v2417 = vsel %vm2387, %v2414, %v2416
        %v2418 = vrot.slane %v214, 3
        %v2419 = vrot.slane %v215, 3
        %v2420 = vsel %vm2387, %v2418, %v2419
        %v2421 = vrot.slane %v216, 3
        %v2422 = vsel %vm2387, %v2419, %v2421
        %v2423 = vrot.slane %v219, 3
        %v2424 = vrot.slane %v220, 3
        %v2425 = vsel %vm2387, %v2423, %v2424
        %v2426 = vrot.slane %v221, 3
        %v2427 = vsel %vm2387, %v2424, %v2426
        %v2428 = vrot.slane %v224, 3
        %v2429 = vrot.slane %v225, 3
        %v2430 = vsel %vm2387, %v2428, %v2429
        %v2431 = vrot.slane %v226, 3
        %v2432 = vsel %vm2387, %v2429, %v2431
        %v2433 = vrot.slane %v229, 3
        %v2434 = vrot.slane %v230, 3
        %v2435 = vsel %vm2387, %v2433, %v2434
        %v2436 = vrot.slane %v231, 3
        %v2437 = vsel %vm2387, %v2434, %v2436
        %v2438 = vrot.slane %v234, 3
        %v2439 = vrot.slane %v235, 3
        %v2440 = vsel %vm2387, %v2438, %v2439
        %v2441 = vrot.slane %v236, 3
        %v2442 = vsel %vm2387, %v2439, %v2441
        %v2443 = vrot.slane %v239, 3
        %v2444 = vrot.slane %v240, 3
        %v2445 = vsel %vm2387, %v2443, %v2444
        %v2446 = vrot.slane %v241, 3
        %v2447 = vsel %vm2387, %v2444, %v2446
        %v2448 = vrot.slane %v244, 3
        %v2449 = vrot.slane %v245, 3
        %v2450 = vsel %vm2387, %v2448, %v2449
        %v2451 = vrot.slane %v246, 3
        %v2452 = vsel %vm2387, %v2449, %v2451
        %v2453 = vrot.slane %v249, 3
        %v2454 = vrot.slane %v250, 3
        %v2455 = vsel %vm2387, %v2453, %v2454
        %v2456 = vrot.slane %v251, 3
        %v2457 = vsel %vm2387, %v2454, %v2456
        %v2458 = vrot.slane %v254, 3
        %v2459 = vrot.slane %v255, 3
        %v2460 = vsel %vm2387, %v2458, %v2459
        %v2461 = vrot.slane %v256, 3
        %v2462 = vsel %vm2387, %v2459, %v2461
        %v2463 = vrot.slane %v259, 3
        %v2464 = vrot.slane %v260, 3
        %v2465 = vsel %vm2387, %v2463, %v2464
        %v2466 = vrot.slane %v261, 3
        %v2467 = vsel %vm2387, %v2464, %v2466
        %s2468 = scalar_lea.vmem %s1, 36
        %v2469 = vld [vmem:[%s2468] sm:$0xf]
        %v2470 = vsel %vm473, %v2390, 0
        %v2472 = vsel %vm473, %v2392, 0
        %v2474 = vsel %vm473, %v2395, 0
        %v2476 = vsel %vm473, %v2397, 0
        %v2478 = vsel %vm473, %v2400, 0
        %v2480 = vsel %vm473, %v2402, 0
        %v2482 = vsel %vm473, %v2405, 0
        %v2484 = vsel %vm473, %v2407, 0
        %v2486 = vsel %vm473, %v2410, 0
        %v2488 = vsel %vm473, %v2412, 0
        %v2490 = vsel %vm473, %v2415, 0
        %v2492 = vsel %vm473, %v2417, 0
        %v2494 = vsel %vm473, %v2420, 0
        %v2496 = vsel %vm473, %v2422, 0
        %v2498 = vsel %vm473, %v2425, 0
        %v2500 = vsel %vm473, %v2427, 0
        %v2502 = vsel %vm473, %v2430, 0
        %v2504 = vsel %vm473, %v2432, 0
        %v2506 = vsel %vm473, %v2435, 0
        %v2508 = vsel %vm473, %v2437, 0
        %v2510 = vsel %vm473, %v2440, 0
        %v2512 = vsel %vm473, %v2442, 0
        %v2514 = vsel %vm473, %v2445, 0
        %v2516 = vsel %vm473, %v2447, 0
        %v2518 = vsel %vm473, %v2450, 0
        %v2520 = vsel %vm473, %v2452, 0
        %v2522 = vsel %vm473, %v2455, 0
        %v2524 = vsel %vm473, %v2457, 0
        %v2526 = vsel %vm473, %v2460, 0
        %v2528 = vsel %vm473, %v2462, 0
        %v2530 = vsel %vm473, %v2465, 0
        %v2532 = vsel %vm473, %v2467, 0
        %v2535 = vsel %vm538, %v2469, 0
        %2537 = vmatpush.msra.mxu0 0.0
        %2538 = vmatpush.msra.mxu0 0.0
        %2539 = vmatpush.msra.mxu0 0.0
        %2540 = vmatpush.msra.mxu0 0.0
        %2541 = vmatpush.msra.mxu0 0.0
        %2542 = vmatpush.msra.mxu0 0.0
        %2543 = vmatpush.msra.mxu0 0.0
        %2544 = vmatpush.msra.mxu0 0.0
        %2545 = vmatpush.msra.mxu0 0.0
        %2546 = vmatpush.msra.mxu0 0.0
        %2547 = vmatpush.msra.mxu0 0.0
        %2548 = vmatpush.msra.mxu0 0.0
        %2549 = vmatpush.msra.mxu0 0.0
        %2550 = vmatpush.msra.mxu0 0.0
        %2551 = vmatpush.msra.mxu0 0.0
        %2552 = vmatpush.msra.mxu0 %v2535
        %2553 = vmatmul.f32.gmra.mxu0 %v2470
        %v2554 = vpop.f32.mrf.mxu0
        %v2555 = vadd.f32 0.0, %v2554
        %2556 = vmatmul.f32.gmra.mxu0 %v2472
        %v2557 = vpop.f32.mrf.mxu0
        %v2558 = vadd.f32 0.0, %v2557
        %2559 = vmatmul.f32.gmra.mxu0 %v2474
        %v2560 = vpop.f32.mrf.mxu0
        %v2561 = vadd.f32 0.0, %v2560
        %2562 = vmatmul.f32.gmra.mxu0 %v2476
        %v2563 = vpop.f32.mrf.mxu0
        %v2564 = vadd.f32 0.0, %v2563
        %2565 = vmatmul.f32.gmra.mxu0 %v2478
        %v2566 = vpop.f32.mrf.mxu0
        %v2567 = vadd.f32 0.0, %v2566
        %2568 = vmatmul.f32.gmra.mxu0 %v2480
        %v2569 = vpop.f32.mrf.mxu0
        %v2570 = vadd.f32 0.0, %v2569
        %2571 = vmatmul.f32.gmra.mxu0 %v2482
        %v2572 = vpop.f32.mrf.mxu0
        %v2573 = vadd.f32 0.0, %v2572
        %2574 = vmatmul.f32.gmra.mxu0 %v2484
        %v2575 = vpop.f32.mrf.mxu0
        %v2576 = vadd.f32 0.0, %v2575
        %2577 = vmatmul.f32.gmra.mxu0 %v2486
        %v2578 = vpop.f32.mrf.mxu0
        %v2579 = vadd.f32 0.0, %v2578
        %2580 = vmatmul.f32.gmra.mxu0 %v2488
        %v2581 = vpop.f32.mrf.mxu0
        %v2582 = vadd.f32 0.0, %v2581
        %2583 = vmatmul.f32.gmra.mxu0 %v2490
        %v2584 = vpop.f32.mrf.mxu0
        %v2585 = vadd.f32 0.0, %v2584
        %2586 = vmatmul.f32.gmra.mxu0 %v2492
        %v2587 = vpop.f32.mrf.mxu0
        %v2588 = vadd.f32 0.0, %v2587
        %2589 = vmatmul.f32.gmra.mxu0 %v2494
        %v2590 = vpop.f32.mrf.mxu0
        %v2591 = vadd.f32 0.0, %v2590
        %2592 = vmatmul.f32.gmra.mxu0 %v2496
        %v2593 = vpop.f32.mrf.mxu0
        %v2594 = vadd.f32 0.0, %v2593
        %2595 = vmatmul.f32.gmra.mxu0 %v2498
        %v2596 = vpop.f32.mrf.mxu0
        %v2597 = vadd.f32 0.0, %v2596
        %2598 = vmatmul.f32.gmra.mxu0 %v2500
        %v2599 = vpop.f32.mrf.mxu0
        %v2600 = vadd.f32 0.0, %v2599
        %2601 = vmatmul.f32.gmra.mxu0 %v2502
        %v2602 = vpop.f32.mrf.mxu0
        %v2603 = vadd.f32 0.0, %v2602
        %2604 = vmatmul.f32.gmra.mxu0 %v2504
        %v2605 = vpop.f32.mrf.mxu0
        %v2606 = vadd.f32 0.0, %v2605
        %2607 = vmatmul.f32.gmra.mxu0 %v2506
        %v2608 = vpop.f32.mrf.mxu0
        %v2609 = vadd.f32 0.0, %v2608
        %2610 = vmatmul.f32.gmra.mxu0 %v2508
        %v2611 = vpop.f32.mrf.mxu0
        %v2612 = vadd.f32 0.0, %v2611
        %2613 = vmatmul.f32.gmra.mxu0 %v2510
        %v2614 = vpop.f32.mrf.mxu0
        %v2615 = vadd.f32 0.0, %v2614
        %2616 = vmatmul.f32.gmra.mxu0 %v2512
        %v2617 = vpop.f32.mrf.mxu0
        %v2618 = vadd.f32 0.0, %v2617
        %2619 = vmatmul.f32.gmra.mxu0 %v2514
        %v2620 = vpop.f32.mrf.mxu0
        %v2621 = vadd.f32 0.0, %v2620
        %2622 = vmatmul.f32.gmra.mxu0 %v2516
        %v2623 = vpop.f32.mrf.mxu0
        %v2624 = vadd.f32 0.0, %v2623
        %2625 = vmatmul.f32.gmra.mxu0 %v2518
        %v2626 = vpop.f32.mrf.mxu0
        %v2627 = vadd.f32 0.0, %v2626
        %2628 = vmatmul.f32.gmra.mxu0 %v2520
        %v2629 = vpop.f32.mrf.mxu0
        %v2630 = vadd.f32 0.0, %v2629
        %2631 = vmatmul.f32.gmra.mxu0 %v2522
        %v2632 = vpop.f32.mrf.mxu0
        %v2633 = vadd.f32 0.0, %v2632
        %2634 = vmatmul.f32.gmra.mxu0 %v2524
        %v2635 = vpop.f32.mrf.mxu0
        %v2636 = vadd.f32 0.0, %v2635
        %2637 = vmatmul.f32.gmra.mxu0 %v2526
        %v2638 = vpop.f32.mrf.mxu0
        %v2639 = vadd.f32 0.0, %v2638
        %2640 = vmatmul.f32.gmra.mxu0 %v2528
        %v2641 = vpop.f32.mrf.mxu0
        %v2642 = vadd.f32 0.0, %v2641
        %2643 = vmatmul.f32.gmra.mxu0 %v2530
        %v2644 = vpop.f32.mrf.mxu0
        %v2645 = vadd.f32 0.0, %v2644
        %2646 = vmatmul.f32.gmra.mxu0 %v2532
        %v2647 = vpop.f32.mrf.mxu0
        %v2648 = vadd.f32 0.0, %v2647
        %2649 = vdwg.mxu0
        %v2650 = vadd.f32 %v2346, %v2555
        %v2651 = vadd.f32 %v2347, %v2558
        %v2652 = vadd.f32 %v2348, %v2561
        %v2653 = vadd.f32 %v2349, %v2564
        %v2654 = vadd.f32 %v2350, %v2567
        %v2655 = vadd.f32 %v2351, %v2570
        %v2656 = vadd.f32 %v2352, %v2573
        %v2657 = vadd.f32 %v2353, %v2576
        %v2658 = vadd.f32 %v2354, %v2579
        %v2659 = vadd.f32 %v2355, %v2582
        %v2660 = vadd.f32 %v2356, %v2585
        %v2661 = vadd.f32 %v2357, %v2588
        %v2662 = vadd.f32 %v2358, %v2591
        %v2663 = vadd.f32 %v2359, %v2594
        %v2664 = vadd.f32 %v2360, %v2597
        %v2665 = vadd.f32 %v2361, %v2600
        %v2666 = vadd.f32 %v2362, %v2603
        %v2667 = vadd.f32 %v2363, %v2606
        %v2668 = vadd.f32 %v2364, %v2609
        %v2669 = vadd.f32 %v2365, %v2612
        %v2670 = vadd.f32 %v2366, %v2615
        %v2671 = vadd.f32 %v2367, %v2618
        %v2672 = vadd.f32 %v2368, %v2621
        %v2673 = vadd.f32 %v2369, %v2624
        %v2674 = vadd.f32 %v2370, %v2627
        %v2675 = vadd.f32 %v2371, %v2630
        %v2676 = vadd.f32 %v2372, %v2633
        %v2677 = vadd.f32 %v2373, %v2636
        %v2678 = vadd.f32 %v2374, %v2639
        %v2679 = vadd.f32 %v2375, %v2642
        %v2680 = vadd.f32 %v2376, %v2645
        %v2681 = vadd.f32 %v2377, %v2648
        %v2685 = vrot.slane %v185, 1
        %v2686 = vrot.slane %v186, 1
        %v2687 = vsel %vm703, %v2685, %v2686
        %v2688 = vrot.slane %v187, 1
        %v2689 = vsel %vm703, %v2686, %v2688
        %v2690 = vrot.slane %v190, 1
        %v2691 = vrot.slane %v191, 1
        %v2692 = vsel %vm703, %v2690, %v2691
        %v2693 = vrot.slane %v192, 1
        %v2694 = vsel %vm703, %v2691, %v2693
        %v2695 = vrot.slane %v195, 1
        %v2696 = vrot.slane %v196, 1
        %v2697 = vsel %vm703, %v2695, %v2696
        %v2698 = vrot.slane %v197, 1
        %v2699 = vsel %vm703, %v2696, %v2698
        %s2700 = scalar_lea.vmem %s1, 40
        %v2701 = vld [vmem:[%s2700] sm:$0xf]
        %v2702 = vsel %vm473, %v2687, 0
        %v2704 = vsel %vm473, %v2689, 0
        %v2706 = vsel %vm473, %v2692, 0
        %v2708 = vsel %vm473, %v2694, 0
        %v2710 = vsel %vm473, %v2697, 0
        %v2712 = vsel %vm473, %v2699, 0
        %v2715 = vsel %vm538, %v2701, 0
        %2717 = vmatpush.msra.mxu0 0.0
        %2718 = vmatpush.msra.mxu0 0.0
        %2719 = vmatpush.msra.mxu0 0.0
        %2720 = vmatpush.msra.mxu0 0.0
        %2721 = vmatpush.msra.mxu0 0.0
        %2722 = vmatpush.msra.mxu0 0.0
        %2723 = vmatpush.msra.mxu0 0.0
        %2724 = vmatpush.msra.mxu0 0.0
        %2725 = vmatpush.msra.mxu0 0.0
        %2726 = vmatpush.msra.mxu0 0.0
        %2727 = vmatpush.msra.mxu0 0.0
        %2728 = vmatpush.msra.mxu0 0.0
        %2729 = vmatpush.msra.mxu0 0.0
        %2730 = vmatpush.msra.mxu0 0.0
        %2731 = vmatpush.msra.mxu0 0.0
        %2732 = vmatpush.msra.mxu0 %v2715
        %2733 = vmatmul.f32.gmra.mxu0 %v2702
        %v2734 = vpop.f32.mrf.mxu0
        %v2735 = vadd.f32 0.0, %v2734
        %2736 = vmatmul.f32.gmra.mxu0 %v2704
        %v2737 = vpop.f32.mrf.mxu0
        %v2738 = vadd.f32 0.0, %v2737
        %2739 = vmatmul.f32.gmra.mxu0 %v2706
        %v2740 = vpop.f32.mrf.mxu0
        %v2741 = vadd.f32 0.0, %v2740
        %2742 = vmatmul.f32.gmra.mxu0 %v2708
        %v2743 = vpop.f32.mrf.mxu0
        %v2744 = vadd.f32 0.0, %v2743
        %2745 = vmatmul.f32.gmra.mxu0 %v2710
        %v2746 = vpop.f32.mrf.mxu0
        %v2747 = vadd.f32 0.0, %v2746
        %2748 = vmatmul.f32.gmra.mxu0 %v2712
        %v2749 = vpop.f32.mrf.mxu0
        %v2750 = vadd.f32 0.0, %v2749
        %2751 = vmatmul.f32.gmra.mxu0 %v786
        %v2752 = vpop.f32.mrf.mxu0
        %v2753 = vadd.f32 0.0, %v2752
        %2754 = vmatmul.f32.gmra.mxu0 %v788
        %v2755 = vpop.f32.mrf.mxu0
        %v2756 = vadd.f32 0.0, %v2755
        %2757 = vmatmul.f32.gmra.mxu0 %v790
        %v2758 = vpop.f32.mrf.mxu0
        %v2759 = vadd.f32 0.0, %v2758
        %2760 = vmatmul.f32.gmra.mxu0 %v792
        %v2761 = vpop.f32.mrf.mxu0
        %v2762 = vadd.f32 0.0, %v2761
        %2763 = vmatmul.f32.gmra.mxu0 %v794
        %v2764 = vpop.f32.mrf.mxu0
        %v2765 = vadd.f32 0.0, %v2764
        %2766 = vmatmul.f32.gmra.mxu0 %v796
        %v2767 = vpop.f32.mrf.mxu0
        %v2768 = vadd.f32 0.0, %v2767
        %2769 = vmatmul.f32.gmra.mxu0 %v798
        %v2770 = vpop.f32.mrf.mxu0
        %v2771 = vadd.f32 0.0, %v2770
        %2772 = vmatmul.f32.gmra.mxu0 %v800
        %v2773 = vpop.f32.mrf.mxu0
        %v2774 = vadd.f32 0.0, %v2773
        %2775 = vmatmul.f32.gmra.mxu0 %v802
        %v2776 = vpop.f32.mrf.mxu0
        %v2777 = vadd.f32 0.0, %v2776
        %2778 = vmatmul.f32.gmra.mxu0 %v804
        %v2779 = vpop.f32.mrf.mxu0
        %v2780 = vadd.f32 0.0, %v2779
        %2781 = vmatmul.f32.gmra.mxu0 %v806
        %v2782 = vpop.f32.mrf.mxu0
        %v2783 = vadd.f32 0.0, %v2782
        %2784 = vmatmul.f32.gmra.mxu0 %v808
        %v2785 = vpop.f32.mrf.mxu0
        %v2786 = vadd.f32 0.0, %v2785
        %2787 = vmatmul.f32.gmra.mxu0 %v810
        %v2788 = vpop.f32.mrf.mxu0
        %v2789 = vadd.f32 0.0, %v2788
        %2790 = vmatmul.f32.gmra.mxu0 %v812
        %v2791 = vpop.f32.mrf.mxu0
        %v2792 = vadd.f32 0.0, %v2791
        %2793 = vmatmul.f32.gmra.mxu0 %v814
        %v2794 = vpop.f32.mrf.mxu0
        %v2795 = vadd.f32 0.0, %v2794
        %2796 = vmatmul.f32.gmra.mxu0 %v816
        %v2797 = vpop.f32.mrf.mxu0
        %v2798 = vadd.f32 0.0, %v2797
        %2799 = vmatmul.f32.gmra.mxu0 %v818
        %v2800 = vpop.f32.mrf.mxu0
        %v2801 = vadd.f32 0.0, %v2800
        %2802 = vmatmul.f32.gmra.mxu0 %v820
        %v2803 = vpop.f32.mrf.mxu0
        %v2804 = vadd.f32 0.0, %v2803
        %2805 = vmatmul.f32.gmra.mxu0 %v822
        %v2806 = vpop.f32.mrf.mxu0
        %v2807 = vadd.f32 0.0, %v2806
        %2808 = vmatmul.f32.gmra.mxu0 %v824
        %v2809 = vpop.f32.mrf.mxu0
        %v2810 = vadd.f32 0.0, %v2809
        %2811 = vmatmul.f32.gmra.mxu0 %v826
        %v2812 = vpop.f32.mrf.mxu0
        %v2813 = vadd.f32 0.0, %v2812
        %2814 = vmatmul.f32.gmra.mxu0 %v828
        %v2815 = vpop.f32.mrf.mxu0
        %v2816 = vadd.f32 0.0, %v2815
        %2817 = vmatmul.f32.gmra.mxu0 %v830
        %v2818 = vpop.f32.mrf.mxu0
        %v2819 = vadd.f32 0.0, %v2818
        %2820 = vmatmul.f32.gmra.mxu0 %v832
        %v2821 = vpop.f32.mrf.mxu0
        %v2822 = vadd.f32 0.0, %v2821
        %2823 = vmatmul.f32.gmra.mxu0 %v834
        %v2824 = vpop.f32.mrf.mxu0
        %v2825 = vadd.f32 0.0, %v2824
        %2826 = vmatmul.f32.gmra.mxu0 %v836
        %v2827 = vpop.f32.mrf.mxu0
        %v2828 = vadd.f32 0.0, %v2827
        %2829 = vdwg.mxu0
        %v2830 = vadd.f32 %v2650, %v2735
        %v2831 = vadd.f32 %v2651, %v2738
        %v2832 = vadd.f32 %v2652, %v2741
        %v2833 = vadd.f32 %v2653, %v2744
        %v2834 = vadd.f32 %v2654, %v2747
        %v2835 = vadd.f32 %v2655, %v2750
        %v2836 = vadd.f32 %v2656, %v2753
        %v2837 = vadd.f32 %v2657, %v2756
        %v2838 = vadd.f32 %v2658, %v2759
        %v2839 = vadd.f32 %v2659, %v2762
        %v2840 = vadd.f32 %v2660, %v2765
        %v2841 = vadd.f32 %v2661, %v2768
        %v2842 = vadd.f32 %v2662, %v2771
        %v2843 = vadd.f32 %v2663, %v2774
        %v2844 = vadd.f32 %v2664, %v2777
        %v2845 = vadd.f32 %v2665, %v2780
        %v2846 = vadd.f32 %v2666, %v2783
        %v2847 = vadd.f32 %v2667, %v2786
        %v2848 = vadd.f32 %v2668, %v2789
        %v2849 = vadd.f32 %v2669, %v2792
        %v2850 = vadd.f32 %v2670, %v2795
        %v2851 = vadd.f32 %v2671, %v2798
        %v2852 = vadd.f32 %v2672, %v2801
        %v2853 = vadd.f32 %v2673, %v2804
        %v2854 = vadd.f32 %v2674, %v2807
        %v2855 = vadd.f32 %v2675, %v2810
        %v2856 = vadd.f32 %v2676, %v2813
        %v2857 = vadd.f32 %v2677, %v2816
        %v2858 = vadd.f32 %v2678, %v2819
        %v2859 = vadd.f32 %v2679, %v2822
        %v2860 = vadd.f32 %v2680, %v2825
        %v2861 = vadd.f32 %v2681, %v2828
        %vm2862 = vcmask 1040384
        %v2863 = vrot.slane %v185, 7
        %v2864 = vrot.slane %v186, 7
        %v2865 = vsel %vm2862, %v2863, %v2864
        %v2866 = vrot.slane %v187, 7
        %v2867 = vsel %vm2862, %v2864, %v2866
        %v2868 = vrot.slane %v190, 7
        %v2869 = vrot.slane %v191, 7
        %v2870 = vsel %vm2862, %v2868, %v2869
        %v2871 = vrot.slane %v192, 7
        %v2872 = vsel %vm2862, %v2869, %v2871
        %v2873 = vrot.slane %v195, 7
        %v2874 = vrot.slane %v196, 7
        %v2875 = vsel %vm2862, %v2873, %v2874
        %v2876 = vrot.slane %v197, 7
        %v2877 = vsel %vm2862, %v2874, %v2876
        %v2878 = vrot.slane %v200, 7
        %v2879 = vrot.slane %v201, 7
        %v2880 = vsel %vm2862, %v2878, %v2879
        %v2881 = vrot.slane %v202, 7
        %v2882 = vsel %vm2862, %v2879, %v2881
        %v2883 = vrot.slane %v205, 7
        %v2884 = vrot.slane %v206, 7
        %v2885 = vsel %vm2862, %v2883, %v2884
        %v2886 = vrot.slane %v207, 7
        %v2887 = vsel %vm2862, %v2884, %v2886
        %v2888 = vrot.slane %v210, 7
        %v2889 = vrot.slane %v211, 7
        %v2890 = vsel %vm2862, %v2888, %v2889
        %v2891 = vrot.slane %v212, 7
        %v2892 = vsel %vm2862, %v2889, %v2891
        %v2893 = vrot.slane %v215, 7
        %v2894 = vrot.slane %v216, 7
        %v2895 = vsel %vm2862, %v2893, %v2894
        %v2896 = vrot.slane %v217, 7
        %v2897 = vsel %vm2862, %v2894, %v2896
        %v2898 = vrot.slane %v220, 7
        %v2899 = vrot.slane %v221, 7
        %v2900 = vsel %vm2862, %v2898, %v2899
        %v2901 = vrot.slane %v222, 7
        %v2902 = vsel %vm2862, %v2899, %v2901
        %v2903 = vrot.slane %v225, 7
        %v2904 = vrot.slane %v226, 7
        %v2905 = vsel %vm2862, %v2903, %v2904
        %v2906 = vrot.slane %v227, 7
        %v2907 = vsel %vm2862, %v2904, %v2906
        %v2908 = vrot.slane %v230, 7
        %v2909 = vrot.slane %v231, 7
        %v2910 = vsel %vm2862, %v2908, %v2909
        %v2911 = vrot.slane %v232, 7
        %v2912 = vsel %vm2862, %v2909, %v2911
        %v2913 = vrot.slane %v235, 7
        %v2914 = vrot.slane %v236, 7
        %v2915 = vsel %vm2862, %v2913, %v2914
        %v2916 = vrot.slane %v237, 7
        %v2917 = vsel %vm2862, %v2914, %v2916
        %v2918 = vrot.slane %v240, 7
        %v2919 = vrot.slane %v241, 7
        %v2920 = vsel %vm2862, %v2918, %v2919
        %v2921 = vrot.slane %v242, 7
        %v2922 = vsel %vm2862, %v2919, %v2921
        %v2923 = vrot.slane %v245, 7
        %v2924 = vrot.slane %v246, 7
        %v2925 = vsel %vm2862, %v2923, %v2924
        %v2926 = vrot.slane %v247, 7
        %v2927 = vsel %vm2862, %v2924, %v2926
        %v2928 = vrot.slane %v250, 7
        %v2929 = vrot.slane %v251, 7
        %v2930 = vsel %vm2862, %v2928, %v2929
        %v2931 = vrot.slane %v252, 7
        %v2932 = vsel %vm2862, %v2929, %v2931
        %v2933 = vrot.slane %v255, 7
        %v2934 = vrot.slane %v256, 7
        %v2935 = vsel %vm2862, %v2933, %v2934
        %v2936 = vrot.slane %v257, 7
        %v2937 = vsel %vm2862, %v2934, %v2936
        %v2938 = vrot.slane %v260, 7
        %v2939 = vrot.slane %v261, 7
        %v2940 = vsel %vm2862, %v2938, %v2939
        %v2941 = vrot.slane %v262, 7
        %v2942 = vsel %vm2862, %v2939, %v2941
        %s2943 = scalar_lea.vmem %s1, 44
        %v2944 = vld [vmem:[%s2943] sm:$0xf]
        %v2945 = vsel %vm473, %v2865, 0
        %v2947 = vsel %vm473, %v2867, 0
        %v2949 = vsel %vm473, %v2870, 0
        %v2951 = vsel %vm473, %v2872, 0
        %v2953 = vsel %vm473, %v2875, 0
        %v2955 = vsel %vm473, %v2877, 0
        %v2957 = vsel %vm473, %v2880, 0
        %v2959 = vsel %vm473, %v2882, 0
        %v2961 = vsel %vm473, %v2885, 0
        %v2963 = vsel %vm473, %v2887, 0
        %v2965 = vsel %vm473, %v2890, 0
        %v2967 = vsel %vm473, %v2892, 0
        %v2969 = vsel %vm473, %v2895, 0
        %v2971 = vsel %vm473, %v2897, 0
        %v2973 = vsel %vm473, %v2900, 0
        %v2975 = vsel %vm473, %v2902, 0
        %v2977 = vsel %vm473, %v2905, 0
        %v2979 = vsel %vm473, %v2907, 0
        %v2981 = vsel %vm473, %v2910, 0
        %v2983 = vsel %vm473, %v2912, 0
        %v2985 = vsel %vm473, %v2915, 0
        %v2987 = vsel %vm473, %v2917, 0
        %v2989 = vsel %vm473, %v2920, 0
        %v2991 = vsel %vm473, %v2922, 0
        %v2993 = vsel %vm473, %v2925, 0
        %v2995 = vsel %vm473, %v2927, 0
        %v2997 = vsel %vm473, %v2930, 0
        %v2999 = vsel %vm473, %v2932, 0
        %v3001 = vsel %vm473, %v2935, 0
        %v3003 = vsel %vm473, %v2937, 0
        %v3005 = vsel %vm473, %v2940, 0
        %v3007 = vsel %vm473, %v2942, 0
        %v3010 = vsel %vm538, %v2944, 0
        %3012 = vmatpush.msra.mxu0 0.0
        %3013 = vmatpush.msra.mxu0 0.0
        %3014 = vmatpush.msra.mxu0 0.0
        %3015 = vmatpush.msra.mxu0 0.0
        %3016 = vmatpush.msra.mxu0 0.0
        %3017 = vmatpush.msra.mxu0 0.0
        %3018 = vmatpush.msra.mxu0 0.0
        %3019 = vmatpush.msra.mxu0 0.0
        %3020 = vmatpush.msra.mxu0 0.0
        %3021 = vmatpush.msra.mxu0 0.0
        %3022 = vmatpush.msra.mxu0 0.0
        %3023 = vmatpush.msra.mxu0 0.0
        %3024 = vmatpush.msra.mxu0 0.0
        %3025 = vmatpush.msra.mxu0 0.0
        %3026 = vmatpush.msra.mxu0 0.0
        %3027 = vmatpush.msra.mxu0 %v3010
        %3028 = vmatmul.f32.gmra.mxu0 %v2945
        %v3029 = vpop.f32.mrf.mxu0
        %v3030 = vadd.f32 0.0, %v3029
        %3031 = vmatmul.f32.gmra.mxu0 %v2947
        %v3032 = vpop.f32.mrf.mxu0
        %v3033 = vadd.f32 0.0, %v3032
        %3034 = vmatmul.f32.gmra.mxu0 %v2949
        %v3035 = vpop.f32.mrf.mxu0
        %v3036 = vadd.f32 0.0, %v3035
        %3037 = vmatmul.f32.gmra.mxu0 %v2951
        %v3038 = vpop.f32.mrf.mxu0
        %v3039 = vadd.f32 0.0, %v3038
        %3040 = vmatmul.f32.gmra.mxu0 %v2953
        %v3041 = vpop.f32.mrf.mxu0
        %v3042 = vadd.f32 0.0, %v3041
        %3043 = vmatmul.f32.gmra.mxu0 %v2955
        %v3044 = vpop.f32.mrf.mxu0
        %v3045 = vadd.f32 0.0, %v3044
        %3046 = vmatmul.f32.gmra.mxu0 %v2957
        %v3047 = vpop.f32.mrf.mxu0
        %v3048 = vadd.f32 0.0, %v3047
        %3049 = vmatmul.f32.gmra.mxu0 %v2959
        %v3050 = vpop.f32.mrf.mxu0
        %v3051 = vadd.f32 0.0, %v3050
        %3052 = vmatmul.f32.gmra.mxu0 %v2961
        %v3053 = vpop.f32.mrf.mxu0
        %v3054 = vadd.f32 0.0, %v3053
        %3055 = vmatmul.f32.gmra.mxu0 %v2963
        %v3056 = vpop.f32.mrf.mxu0
        %v3057 = vadd.f32 0.0, %v3056
        %3058 = vmatmul.f32.gmra.mxu0 %v2965
        %v3059 = vpop.f32.mrf.mxu0
        %v3060 = vadd.f32 0.0, %v3059
        %3061 = vmatmul.f32.gmra.mxu0 %v2967
        %v3062 = vpop.f32.mrf.mxu0
        %v3063 = vadd.f32 0.0, %v3062
        %3064 = vmatmul.f32.gmra.mxu0 %v2969
        %v3065 = vpop.f32.mrf.mxu0
        %v3066 = vadd.f32 0.0, %v3065
        %3067 = vmatmul.f32.gmra.mxu0 %v2971
        %v3068 = vpop.f32.mrf.mxu0
        %v3069 = vadd.f32 0.0, %v3068
        %3070 = vmatmul.f32.gmra.mxu0 %v2973
        %v3071 = vpop.f32.mrf.mxu0
        %v3072 = vadd.f32 0.0, %v3071
        %3073 = vmatmul.f32.gmra.mxu0 %v2975
        %v3074 = vpop.f32.mrf.mxu0
        %v3075 = vadd.f32 0.0, %v3074
        %3076 = vmatmul.f32.gmra.mxu0 %v2977
        %v3077 = vpop.f32.mrf.mxu0
        %v3078 = vadd.f32 0.0, %v3077
        %3079 = vmatmul.f32.gmra.mxu0 %v2979
        %v3080 = vpop.f32.mrf.mxu0
        %v3081 = vadd.f32 0.0, %v3080
        %3082 = vmatmul.f32.gmra.mxu0 %v2981
        %v3083 = vpop.f32.mrf.mxu0
        %v3084 = vadd.f32 0.0, %v3083
        %3085 = vmatmul.f32.gmra.mxu0 %v2983
        %v3086 = vpop.f32.mrf.mxu0
        %v3087 = vadd.f32 0.0, %v3086
        %3088 = vmatmul.f32.gmra.mxu0 %v2985
        %v3089 = vpop.f32.mrf.mxu0
        %v3090 = vadd.f32 0.0, %v3089
        %3091 = vmatmul.f32.gmra.mxu0 %v2987
        %v3092 = vpop.f32.mrf.mxu0
        %v3093 = vadd.f32 0.0, %v3092
        %3094 = vmatmul.f32.gmra.mxu0 %v2989
        %v3095 = vpop.f32.mrf.mxu0
        %v3096 = vadd.f32 0.0, %v3095
        %3097 = vmatmul.f32.gmra.mxu0 %v2991
        %v3098 = vpop.f32.mrf.mxu0
        %v3099 = vadd.f32 0.0, %v3098
        %3100 = vmatmul.f32.gmra.mxu0 %v2993
        %v3101 = vpop.f32.mrf.mxu0
        %v3102 = vadd.f32 0.0, %v3101
        %3103 = vmatmul.f32.gmra.mxu0 %v2995
        %v3104 = vpop.f32.mrf.mxu0
        %v3105 = vadd.f32 0.0, %v3104
        %3106 = vmatmul.f32.gmra.mxu0 %v2997
        %v3107 = vpop.f32.mrf.mxu0
        %v3108 = vadd.f32 0.0, %v3107
        %3109 = vmatmul.f32.gmra.mxu0 %v2999
        %v3110 = vpop.f32.mrf.mxu0
        %v3111 = vadd.f32 0.0, %v3110
        %3112 = vmatmul.f32.gmra.mxu0 %v3001
        %v3113 = vpop.f32.mrf.mxu0
        %v3114 = vadd.f32 0.0, %v3113
        %3115 = vmatmul.f32.gmra.mxu0 %v3003
        %v3116 = vpop.f32.mrf.mxu0
        %v3117 = vadd.f32 0.0, %v3116
        %3118 = vmatmul.f32.gmra.mxu0 %v3005
        %v3119 = vpop.f32.mrf.mxu0
        %v3120 = vadd.f32 0.0, %v3119
        %3121 = vmatmul.f32.gmra.mxu0 %v3007
        %v3122 = vpop.f32.mrf.mxu0
        %v3123 = vadd.f32 0.0, %v3122
        %3124 = vdwg.mxu0
        %v3125 = vadd.f32 %v2830, %v3030
        %v3126 = vadd.f32 %v2831, %v3033
        %v3127 = vadd.f32 %v2832, %v3036
        %v3128 = vadd.f32 %v2833, %v3039
        %v3129 = vadd.f32 %v2834, %v3042
        %v3130 = vadd.f32 %v2835, %v3045
        %v3131 = vadd.f32 %v2836, %v3048
        %v3132 = vadd.f32 %v2837, %v3051
        %v3133 = vadd.f32 %v2838, %v3054
        %v3134 = vadd.f32 %v2839, %v3057
        %v3135 = vadd.f32 %v2840, %v3060
        %v3136 = vadd.f32 %v2841, %v3063
        %v3137 = vadd.f32 %v2842, %v3066
        %v3138 = vadd.f32 %v2843, %v3069
        %v3139 = vadd.f32 %v2844, %v3072
        %v3140 = vadd.f32 %v2845, %v3075
        %v3141 = vadd.f32 %v2846, %v3078
        %v3142 = vadd.f32 %v2847, %v3081
        %v3143 = vadd.f32 %v2848, %v3084
        %v3144 = vadd.f32 %v2849, %v3087
        %v3145 = vadd.f32 %v2850, %v3090
        %v3146 = vadd.f32 %v2851, %v3093
        %v3147 = vadd.f32 %v2852, %v3096
        %v3148 = vadd.f32 %v2853, %v3099
        %v3149 = vadd.f32 %v2854, %v3102
        %v3150 = vadd.f32 %v2855, %v3105
        %v3151 = vadd.f32 %v2856, %v3108
        %v3152 = vadd.f32 %v2857, %v3111
        %v3153 = vadd.f32 %v2858, %v3114
        %v3154 = vadd.f32 %v2859, %v3117
        %v3155 = vadd.f32 %v2860, %v3120
        %v3156 = vadd.f32 %v2861, %v3123
        %v3157 = vrot.slane %v264, 3
        %v3158 = vrot.slane %v265, 3
        %v3159 = vsel %vm2387, %v3157, %v3158
        %v3160 = vrot.slane %v266, 3
        %v3161 = vsel %vm2387, %v3158, %v3160
        %v3162 = vrot.slane %v269, 3
        %v3163 = vrot.slane %v270, 3
        %v3164 = vsel %vm2387, %v3162, %v3163
        %v3165 = vrot.slane %v271, 3
        %v3166 = vsel %vm2387, %v3163, %v3165
        %v3167 = vrot.slane %v274, 3
        %v3168 = vrot.slane %v275, 3
        %v3169 = vsel %vm2387, %v3167, %v3168
        %v3170 = vrot.slane %v276, 3
        %v3171 = vsel %vm2387, %v3168, %v3170
        %v3172 = vrot.slane %v279, 3
        %v3173 = vrot.slane %v280, 3
        %v3174 = vsel %vm2387, %v3172, %v3173
        %v3175 = vrot.slane %v281, 3
        %v3176 = vsel %vm2387, %v3173, %v3175
        %v3177 = vrot.slane %v284, 3
        %v3178 = vrot.slane %v285, 3
        %v3179 = vsel %vm2387, %v3177, %v3178
        %v3180 = vrot.slane %v286, 3
        %v3181 = vsel %vm2387, %v3178, %v3180
        %v3182 = vrot.slane %v289, 3
        %v3183 = vrot.slane %v290, 3
        %v3184 = vsel %vm2387, %v3182, %v3183
        %v3185 = vrot.slane %v291, 3
        %v3186 = vsel %vm2387, %v3183, %v3185
        %s3187 = scalar_lea.vmem %s1, 48
        %v3188 = vld [vmem:[%s3187] sm:$0xf]
        %v3189 = vsel %vm473, %v3159, 0
        %v3191 = vsel %vm473, %v3161, 0
        %v3193 = vsel %vm473, %v3164, 0
        %v3195 = vsel %vm473, %v3166, 0
        %v3197 = vsel %vm473, %v3169, 0
        %v3199 = vsel %vm473, %v3171, 0
        %v3201 = vsel %vm473, %v3174, 0
        %v3203 = vsel %vm473, %v3176, 0
        %v3205 = vsel %vm473, %v3179, 0
        %v3207 = vsel %vm473, %v3181, 0
        %v3209 = vsel %vm473, %v3184, 0
        %v3211 = vsel %vm473, %v3186, 0
        %v3214 = vsel %vm538, %v3188, 0
        %3216 = vmatpush.msra.mxu0 0.0
        %3217 = vmatpush.msra.mxu0 0.0
        %3218 = vmatpush.msra.mxu0 0.0
        %3219 = vmatpush.msra.mxu0 0.0
        %3220 = vmatpush.msra.mxu0 0.0
        %3221 = vmatpush.msra.mxu0 0.0
        %3222 = vmatpush.msra.mxu0 0.0
        %3223 = vmatpush.msra.mxu0 0.0
        %3224 = vmatpush.msra.mxu0 0.0
        %3225 = vmatpush.msra.mxu0 0.0
        %3226 = vmatpush.msra.mxu0 0.0
        %3227 = vmatpush.msra.mxu0 0.0
        %3228 = vmatpush.msra.mxu0 0.0
        %3229 = vmatpush.msra.mxu0 0.0
        %3230 = vmatpush.msra.mxu0 0.0
        %3231 = vmatpush.msra.mxu0 %v3214
        %3232 = vmatmul.f32.gmra.mxu0 %v2494
        %v3233 = vpop.f32.mrf.mxu0
        %v3234 = vadd.f32 0.0, %v3233
        %3235 = vmatmul.f32.gmra.mxu0 %v2496
        %v3236 = vpop.f32.mrf.mxu0
        %v3237 = vadd.f32 0.0, %v3236
        %3238 = vmatmul.f32.gmra.mxu0 %v2498
        %v3239 = vpop.f32.mrf.mxu0
        %v3240 = vadd.f32 0.0, %v3239
        %3241 = vmatmul.f32.gmra.mxu0 %v2500
        %v3242 = vpop.f32.mrf.mxu0
        %v3243 = vadd.f32 0.0, %v3242
        %3244 = vmatmul.f32.gmra.mxu0 %v2502
        %v3245 = vpop.f32.mrf.mxu0
        %v3246 = vadd.f32 0.0, %v3245
        %3247 = vmatmul.f32.gmra.mxu0 %v2504
        %v3248 = vpop.f32.mrf.mxu0
        %v3249 = vadd.f32 0.0, %v3248
        %3250 = vmatmul.f32.gmra.mxu0 %v2506
        %v3251 = vpop.f32.mrf.mxu0
        %v3252 = vadd.f32 0.0, %v3251
        %3253 = vmatmul.f32.gmra.mxu0 %v2508
        %v3254 = vpop.f32.mrf.mxu0
        %v3255 = vadd.f32 0.0, %v3254
        %3256 = vmatmul.f32.gmra.mxu0 %v2510
        %v3257 = vpop.f32.mrf.mxu0
        %v3258 = vadd.f32 0.0, %v3257
        %3259 = vmatmul.f32.gmra.mxu0 %v2512
        %v3260 = vpop.f32.mrf.mxu0
        %v3261 = vadd.f32 0.0, %v3260
        %3262 = vmatmul.f32.gmra.mxu0 %v2514
        %v3263 = vpop.f32.mrf.mxu0
        %v3264 = vadd.f32 0.0, %v3263
        %3265 = vmatmul.f32.gmra.mxu0 %v2516
        %v3266 = vpop.f32.mrf.mxu0
        %v3267 = vadd.f32 0.0, %v3266
        %3268 = vmatmul.f32.gmra.mxu0 %v2518
        %v3269 = vpop.f32.mrf.mxu0
        %v3270 = vadd.f32 0.0, %v3269
        %3271 = vmatmul.f32.gmra.mxu0 %v2520
        %v3272 = vpop.f32.mrf.mxu0
        %v3273 = vadd.f32 0.0, %v3272
        %3274 = vmatmul.f32.gmra.mxu0 %v2522
        %v3275 = vpop.f32.mrf.mxu0
        %v3276 = vadd.f32 0.0, %v3275
        %3277 = vmatmul.f32.gmra.mxu0 %v2524
        %v3278 = vpop.f32.mrf.mxu0
        %v3279 = vadd.f32 0.0, %v3278
        %3280 = vmatmul.f32.gmra.mxu0 %v2526
        %v3281 = vpop.f32.mrf.mxu0
        %v3282 = vadd.f32 0.0, %v3281
        %3283 = vmatmul.f32.gmra.mxu0 %v2528
        %v3284 = vpop.f32.mrf.mxu0
        %v3285 = vadd.f32 0.0, %v3284
        %3286 = vmatmul.f32.gmra.mxu0 %v2530
        %v3287 = vpop.f32.mrf.mxu0
        %v3288 = vadd.f32 0.0, %v3287
        %3289 = vmatmul.f32.gmra.mxu0 %v2532
        %v3290 = vpop.f32.mrf.mxu0
        %v3291 = vadd.f32 0.0, %v3290
        %3292 = vmatmul.f32.gmra.mxu0 %v3189
        %v3293 = vpop.f32.mrf.mxu0
        %v3294 = vadd.f32 0.0, %v3293
        %3295 = vmatmul.f32.gmra.mxu0 %v3191
        %v3296 = vpop.f32.mrf.mxu0
        %v3297 = vadd.f32 0.0, %v3296
        %3298 = vmatmul.f32.gmra.mxu0 %v3193
        %v3299 = vpop.f32.mrf.mxu0
        %v3300 = vadd.f32 0.0, %v3299
        %3301 = vmatmul.f32.gmra.mxu0 %v3195
        %v3302 = vpop.f32.mrf.mxu0
        %v3303 = vadd.f32 0.0, %v3302
        %3304 = vmatmul.f32.gmra.mxu0 %v3197
        %v3305 = vpop.f32.mrf.mxu0
        %v3306 = vadd.f32 0.0, %v3305
        %3307 = vmatmul.f32.gmra.mxu0 %v3199
        %v3308 = vpop.f32.mrf.mxu0
        %v3309 = vadd.f32 0.0, %v3308
        %3310 = vmatmul.f32.gmra.mxu0 %v3201
        %v3311 = vpop.f32.mrf.mxu0
        %v3312 = vadd.f32 0.0, %v3311
        %3313 = vmatmul.f32.gmra.mxu0 %v3203
        %v3314 = vpop.f32.mrf.mxu0
        %v3315 = vadd.f32 0.0, %v3314
        %3316 = vmatmul.f32.gmra.mxu0 %v3205
        %v3317 = vpop.f32.mrf.mxu0
        %v3318 = vadd.f32 0.0, %v3317
        %3319 = vmatmul.f32.gmra.mxu0 %v3207
        %v3320 = vpop.f32.mrf.mxu0
        %v3321 = vadd.f32 0.0, %v3320
        %3322 = vmatmul.f32.gmra.mxu0 %v3209
        %v3323 = vpop.f32.mrf.mxu0
        %v3324 = vadd.f32 0.0, %v3323
        %3325 = vmatmul.f32.gmra.mxu0 %v3211
        %v3326 = vpop.f32.mrf.mxu0
        %v3327 = vadd.f32 0.0, %v3326
        %3328 = vdwg.mxu0
        %v3329 = vadd.f32 %v3125, %v3234
        %v3330 = vadd.f32 %v3126, %v3237
        %v3331 = vadd.f32 %v3127, %v3240
        %v3332 = vadd.f32 %v3128, %v3243
        %v3333 = vadd.f32 %v3129, %v3246
        %v3334 = vadd.f32 %v3130, %v3249
        %v3335 = vadd.f32 %v3131, %v3252
        %v3336 = vadd.f32 %v3132, %v3255
        %v3337 = vadd.f32 %v3133, %v3258
        %v3338 = vadd.f32 %v3134, %v3261
        %v3339 = vadd.f32 %v3135, %v3264
        %v3340 = vadd.f32 %v3136, %v3267
        %v3341 = vadd.f32 %v3137, %v3270
        %v3342 = vadd.f32 %v3138, %v3273
        %v3343 = vadd.f32 %v3139, %v3276
        %v3344 = vadd.f32 %v3140, %v3279
        %v3345 = vadd.f32 %v3141, %v3282
        %v3346 = vadd.f32 %v3142, %v3285
        %v3347 = vadd.f32 %v3143, %v3288
        %v3348 = vadd.f32 %v3144, %v3291
        %v3349 = vadd.f32 %v3145, %v3294
        %v3350 = vadd.f32 %v3146, %v3297
        %v3351 = vadd.f32 %v3147, %v3300
        %v3352 = vadd.f32 %v3148, %v3303
        %v3353 = vadd.f32 %v3149, %v3306
        %v3354 = vadd.f32 %v3150, %v3309
        %v3355 = vadd.f32 %v3151, %v3312
        %v3356 = vadd.f32 %v3152, %v3315
        %v3357 = vadd.f32 %v3153, %v3318
        %v3358 = vadd.f32 %v3154, %v3321
        %v3359 = vadd.f32 %v3155, %v3324
        %v3360 = vadd.f32 %v3156, %v3327
        %v3361 = vrot.slane %v265, 7
        %v3362 = vrot.slane %v266, 7
        %v3363 = vsel %vm2862, %v3361, %v3362
        %v3364 = vrot.slane %v267, 7
        %v3365 = vsel %vm2862, %v3362, %v3364
        %v3366 = vrot.slane %v270, 7
        %v3367 = vrot.slane %v271, 7
        %v3368 = vsel %vm2862, %v3366, %v3367
        %v3369 = vrot.slane %v272, 7
        %v3370 = vsel %vm2862, %v3367, %v3369
        %v3371 = vrot.slane %v275, 7
        %v3372 = vrot.slane %v276, 7
        %v3373 = vsel %vm2862, %v3371, %v3372
        %v3374 = vrot.slane %v277, 7
        %v3375 = vsel %vm2862, %v3372, %v3374
        %v3376 = vrot.slane %v280, 7
        %v3377 = vrot.slane %v281, 7
        %v3378 = vsel %vm2862, %v3376, %v3377
        %v3379 = vrot.slane %v282, 7
        %v3380 = vsel %vm2862, %v3377, %v3379
        %v3381 = vrot.slane %v285, 7
        %v3382 = vrot.slane %v286, 7
        %v3383 = vsel %vm2862, %v3381, %v3382
        %v3384 = vrot.slane %v287, 7
        %v3385 = vsel %vm2862, %v3382, %v3384
        %v3386 = vrot.slane %v290, 7
        %v3387 = vrot.slane %v291, 7
        %v3388 = vsel %vm2862, %v3386, %v3387
        %v3389 = vrot.slane %v292, 7
        %v3390 = vsel %vm2862, %v3387, %v3389
        %s3391 = scalar_lea.vmem %s1, 52
        %v3392 = vld [vmem:[%s3391] sm:$0xf]
        %v3393 = vsel %vm473, %v3363, 0
        %v3395 = vsel %vm473, %v3365, 0
        %v3397 = vsel %vm473, %v3368, 0
        %v3399 = vsel %vm473, %v3370, 0
        %v3401 = vsel %vm473, %v3373, 0
        %v3403 = vsel %vm473, %v3375, 0
        %v3405 = vsel %vm473, %v3378, 0
        %v3407 = vsel %vm473, %v3380, 0
        %v3409 = vsel %vm473, %v3383, 0
        %v3411 = vsel %vm473, %v3385, 0
        %v3413 = vsel %vm473, %v3388, 0
        %v3415 = vsel %vm473, %v3390, 0
        %v3418 = vsel %vm538, %v3392, 0
        %3420 = vmatpush.msra.mxu0 0.0
        %3421 = vmatpush.msra.mxu0 0.0
        %3422 = vmatpush.msra.mxu0 0.0
        %3423 = vmatpush.msra.mxu0 0.0
        %3424 = vmatpush.msra.mxu0 0.0
        %3425 = vmatpush.msra.mxu0 0.0
        %3426 = vmatpush.msra.mxu0 0.0
        %3427 = vmatpush.msra.mxu0 0.0
        %3428 = vmatpush.msra.mxu0 0.0
        %3429 = vmatpush.msra.mxu0 0.0
        %3430 = vmatpush.msra.mxu0 0.0
        %3431 = vmatpush.msra.mxu0 0.0
        %3432 = vmatpush.msra.mxu0 0.0
        %3433 = vmatpush.msra.mxu0 0.0
        %3434 = vmatpush.msra.mxu0 0.0
        %3435 = vmatpush.msra.mxu0 %v3418
        %3436 = vmatmul.f32.gmra.mxu0 %v2969
        %v3437 = vpop.f32.mrf.mxu0
        %v3438 = vadd.f32 0.0, %v3437
        %3439 = vmatmul.f32.gmra.mxu0 %v2971
        %v3440 = vpop.f32.mrf.mxu0
        %v3441 = vadd.f32 0.0, %v3440
        %3442 = vmatmul.f32.gmra.mxu0 %v2973
        %v3443 = vpop.f32.mrf.mxu0
        %v3444 = vadd.f32 0.0, %v3443
        %3445 = vmatmul.f32.gmra.mxu0 %v2975
        %v3446 = vpop.f32.mrf.mxu0
        %v3447 = vadd.f32 0.0, %v3446
        %3448 = vmatmul.f32.gmra.mxu0 %v2977
        %v3449 = vpop.f32.mrf.mxu0
        %v3450 = vadd.f32 0.0, %v3449
        %3451 = vmatmul.f32.gmra.mxu0 %v2979
        %v3452 = vpop.f32.mrf.mxu0
        %v3453 = vadd.f32 0.0, %v3452
        %3454 = vmatmul.f32.gmra.mxu0 %v2981
        %v3455 = vpop.f32.mrf.mxu0
        %v3456 = vadd.f32 0.0, %v3455
        %3457 = vmatmul.f32.gmra.mxu0 %v2983
        %v3458 = vpop.f32.mrf.mxu0
        %v3459 = vadd.f32 0.0, %v3458
        %3460 = vmatmul.f32.gmra.mxu0 %v2985
        %v3461 = vpop.f32.mrf.mxu0
        %v3462 = vadd.f32 0.0, %v3461
        %3463 = vmatmul.f32.gmra.mxu0 %v2987
        %v3464 = vpop.f32.mrf.mxu0
        %v3465 = vadd.f32 0.0, %v3464
        %3466 = vmatmul.f32.gmra.mxu0 %v2989
        %v3467 = vpop.f32.mrf.mxu0
        %v3468 = vadd.f32 0.0, %v3467
        %3469 = vmatmul.f32.gmra.mxu0 %v2991
        %v3470 = vpop.f32.mrf.mxu0
        %v3471 = vadd.f32 0.0, %v3470
        %3472 = vmatmul.f32.gmra.mxu0 %v2993
        %v3473 = vpop.f32.mrf.mxu0
        %v3474 = vadd.f32 0.0, %v3473
        %3475 = vmatmul.f32.gmra.mxu0 %v2995
        %v3476 = vpop.f32.mrf.mxu0
        %v3477 = vadd.f32 0.0, %v3476
        %3478 = vmatmul.f32.gmra.mxu0 %v2997
        %v3479 = vpop.f32.mrf.mxu0
        %v3480 = vadd.f32 0.0, %v3479
        %3481 = vmatmul.f32.gmra.mxu0 %v2999
        %v3482 = vpop.f32.mrf.mxu0
        %v3483 = vadd.f32 0.0, %v3482
        %3484 = vmatmul.f32.gmra.mxu0 %v3001
        %v3485 = vpop.f32.mrf.mxu0
        %v3486 = vadd.f32 0.0, %v3485
        %3487 = vmatmul.f32.gmra.mxu0 %v3003
        %v3488 = vpop.f32.mrf.mxu0
        %v3489 = vadd.f32 0.0, %v3488
        %3490 = vmatmul.f32.gmra.mxu0 %v3005
        %v3491 = vpop.f32.mrf.mxu0
        %v3492 = vadd.f32 0.0, %v3491
        %3493 = vmatmul.f32.gmra.mxu0 %v3007
        %v3494 = vpop.f32.mrf.mxu0
        %v3495 = vadd.f32 0.0, %v3494
        %3496 = vmatmul.f32.gmra.mxu0 %v3393
        %v3497 = vpop.f32.mrf.mxu0
        %v3498 = vadd.f32 0.0, %v3497
        %3499 = vmatmul.f32.gmra.mxu0 %v3395
        %v3500 = vpop.f32.mrf.mxu0
        %v3501 = vadd.f32 0.0, %v3500
        %3502 = vmatmul.f32.gmra.mxu0 %v3397
        %v3503 = vpop.f32.mrf.mxu0
        %v3504 = vadd.f32 0.0, %v3503
        %3505 = vmatmul.f32.gmra.mxu0 %v3399
        %v3506 = vpop.f32.mrf.mxu0
        %v3507 = vadd.f32 0.0, %v3506
        %3508 = vmatmul.f32.gmra.mxu0 %v3401
        %v3509 = vpop.f32.mrf.mxu0
        %v3510 = vadd.f32 0.0, %v3509
        %3511 = vmatmul.f32.gmra.mxu0 %v3403
        %v3512 = vpop.f32.mrf.mxu0
        %v3513 = vadd.f32 0.0, %v3512
        %3514 = vmatmul.f32.gmra.mxu0 %v3405
        %v3515 = vpop.f32.mrf.mxu0
        %v3516 = vadd.f32 0.0, %v3515
        %3517 = vmatmul.f32.gmra.mxu0 %v3407
        %v3518 = vpop.f32.mrf.mxu0
        %v3519 = vadd.f32 0.0, %v3518
        %3520 = vmatmul.f32.gmra.mxu0 %v3409
        %v3521 = vpop.f32.mrf.mxu0
        %v3522 = vadd.f32 0.0, %v3521
        %3523 = vmatmul.f32.gmra.mxu0 %v3411
        %v3524 = vpop.f32.mrf.mxu0
        %v3525 = vadd.f32 0.0, %v3524
        %3526 = vmatmul.f32.gmra.mxu0 %v3413
        %v3527 = vpop.f32.mrf.mxu0
        %v3528 = vadd.f32 0.0, %v3527
        %3529 = vmatmul.f32.gmra.mxu0 %v3415
        %v3530 = vpop.f32.mrf.mxu0
        %v3531 = vadd.f32 0.0, %v3530
        %3532 = vdwg.mxu0
        %v3533 = vadd.f32 %v3329, %v3438
        %v3534 = vadd.f32 %v3330, %v3441
        %v3535 = vadd.f32 %v3331, %v3444
        %v3536 = vadd.f32 %v3332, %v3447
        %v3537 = vadd.f32 %v3333, %v3450
        %v3538 = vadd.f32 %v3334, %v3453
        %v3539 = vadd.f32 %v3335, %v3456
        %v3540 = vadd.f32 %v3336, %v3459
        %v3541 = vadd.f32 %v3337, %v3462
        %v3542 = vadd.f32 %v3338, %v3465
        %v3543 = vadd.f32 %v3339, %v3468
        %v3544 = vadd.f32 %v3340, %v3471
        %v3545 = vadd.f32 %v3341, %v3474
        %v3546 = vadd.f32 %v3342, %v3477
        %v3547 = vadd.f32 %v3343, %v3480
        %v3548 = vadd.f32 %v3344, %v3483
        %v3549 = vadd.f32 %v3345, %v3486
        %v3550 = vadd.f32 %v3346, %v3489
        %v3551 = vadd.f32 %v3347, %v3492
        %v3552 = vadd.f32 %v3348, %v3495
        %v3553 = vadd.f32 %v3349, %v3498
        %v3554 = vadd.f32 %v3350, %v3501
        %v3555 = vadd.f32 %v3351, %v3504
        %v3556 = vadd.f32 %v3352, %v3507
        %v3557 = vadd.f32 %v3353, %v3510
        %v3558 = vadd.f32 %v3354, %v3513
        %v3559 = vadd.f32 %v3355, %v3516
        %v3560 = vadd.f32 %v3356, %v3519
        %v3561 = vadd.f32 %v3357, %v3522
        %v3562 = vadd.f32 %v3358, %v3525
        %v3563 = vadd.f32 %v3359, %v3528
        %v3564 = vadd.f32 %v3360, %v3531
        %v3574 = vrot.slane %v294, 3
        %v3575 = vrot.slane %v295, 3
        %v3576 = vsel %vm2387, %v3574, %v3575
        %v3577 = vrot.slane %v296, 3
        %v3578 = vsel %vm2387, %v3575, %v3577
        %v3579 = vrot.slane %v299, 3
        %v3580 = vrot.slane %v300, 3
        %v3581 = vsel %vm2387, %v3579, %v3580
        %v3582 = vrot.slane %v301, 3
        %v3583 = vsel %vm2387, %v3580, %v3582
        %v3584 = vrot.slane %v304, 3
        %v3585 = vrot.slane %v305, 3
        %v3586 = vsel %vm2387, %v3584, %v3585
        %v3587 = vrot.slane %v306, 3
        %v3588 = vsel %vm2387, %v3585, %v3587
        %v3589 = vrot.slane %v309, 3
        %v3590 = vrot.slane %v310, 3
        %v3591 = vsel %vm2387, %v3589, %v3590
        %v3592 = vrot.slane %v311, 3
        %v3593 = vsel %vm2387, %v3590, %v3592
        %v3594 = vrot.slane %v314, 3
        %v3595 = vrot.slane %v315, 3
        %v3596 = vsel %vm2387, %v3594, %v3595
        %v3597 = vrot.slane %v316, 3
        %v3598 = vsel %vm2387, %v3595, %v3597
        %v3599 = vrot.slane %v319, 3
        %v3600 = vrot.slane %v320, 3
        %v3601 = vsel %vm2387, %v3599, %v3600
        %v3602 = vrot.slane %v321, 3
        %v3603 = vsel %vm2387, %v3600, %v3602
        %s3604 = scalar_lea.vmem %s1, 56
        %v3605 = vld [vmem:[%s3604] sm:$0xf]
        %v3606 = vsel %vm473, %v3576, 0
        %v3608 = vsel %vm473, %v3578, 0
        %v3610 = vsel %vm473, %v3581, 0
        %v3612 = vsel %vm473, %v3583, 0
        %v3614 = vsel %vm473, %v3586, 0
        %v3616 = vsel %vm473, %v3588, 0
        %v3618 = vsel %vm473, %v3591, 0
        %v3620 = vsel %vm473, %v3593, 0
        %v3622 = vsel %vm473, %v3596, 0
        %v3624 = vsel %vm473, %v3598, 0
        %v3626 = vsel %vm473, %v3601, 0
        %v3628 = vsel %vm473, %v3603, 0
        %v3631 = vsel %vm538, %v3605, 0
        %3633 = vmatpush.msra.mxu0 0.0
        %3634 = vmatpush.msra.mxu0 0.0
        %3635 = vmatpush.msra.mxu0 0.0
        %3636 = vmatpush.msra.mxu0 0.0
        %3637 = vmatpush.msra.mxu0 0.0
        %3638 = vmatpush.msra.mxu0 0.0
        %3639 = vmatpush.msra.mxu0 0.0
        %3640 = vmatpush.msra.mxu0 0.0
        %3641 = vmatpush.msra.mxu0 0.0
        %3642 = vmatpush.msra.mxu0 0.0
        %3643 = vmatpush.msra.mxu0 0.0
        %3644 = vmatpush.msra.mxu0 0.0
        %3645 = vmatpush.msra.mxu0 0.0
        %3646 = vmatpush.msra.mxu0 0.0
        %3647 = vmatpush.msra.mxu0 0.0
        %3648 = vmatpush.msra.mxu0 %v3631
        %3649 = vmatmul.f32.gmra.mxu0 %v2518
        %v3650 = vpop.f32.mrf.mxu0
        %v3651 = vadd.f32 0.0, %v3650
        %3652 = vmatmul.f32.gmra.mxu0 %v2520
        %v3653 = vpop.f32.mrf.mxu0
        %v3654 = vadd.f32 0.0, %v3653
        %3655 = vmatmul.f32.gmra.mxu0 %v2522
        %v3656 = vpop.f32.mrf.mxu0
        %v3657 = vadd.f32 0.0, %v3656
        %3658 = vmatmul.f32.gmra.mxu0 %v2524
        %v3659 = vpop.f32.mrf.mxu0
        %v3660 = vadd.f32 0.0, %v3659
        %3661 = vmatmul.f32.gmra.mxu0 %v2526
        %v3662 = vpop.f32.mrf.mxu0
        %v3663 = vadd.f32 0.0, %v3662
        %3664 = vmatmul.f32.gmra.mxu0 %v2528
        %v3665 = vpop.f32.mrf.mxu0
        %v3666 = vadd.f32 0.0, %v3665
        %3667 = vmatmul.f32.gmra.mxu0 %v2530
        %v3668 = vpop.f32.mrf.mxu0
        %v3669 = vadd.f32 0.0, %v3668
        %3670 = vmatmul.f32.gmra.mxu0 %v2532
        %v3671 = vpop.f32.mrf.mxu0
        %v3672 = vadd.f32 0.0, %v3671
        %3673 = vmatmul.f32.gmra.mxu0 %v3189
        %v3674 = vpop.f32.mrf.mxu0
        %v3675 = vadd.f32 0.0, %v3674
        %3676 = vmatmul.f32.gmra.mxu0 %v3191
        %v3677 = vpop.f32.mrf.mxu0
        %v3678 = vadd.f32 0.0, %v3677
        %3679 = vmatmul.f32.gmra.mxu0 %v3193
        %v3680 = vpop.f32.mrf.mxu0
        %v3681 = vadd.f32 0.0, %v3680
        %3682 = vmatmul.f32.gmra.mxu0 %v3195
        %v3683 = vpop.f32.mrf.mxu0
        %v3684 = vadd.f32 0.0, %v3683
        %3685 = vmatmul.f32.gmra.mxu0 %v3197
        %v3686 = vpop.f32.mrf.mxu0
        %v3687 = vadd.f32 0.0, %v3686
        %3688 = vmatmul.f32.gmra.mxu0 %v3199
        %v3689 = vpop.f32.mrf.mxu0
        %v3690 = vadd.f32 0.0, %v3689
        %3691 = vmatmul.f32.gmra.mxu0 %v3201
        %v3692 = vpop.f32.mrf.mxu0
        %v3693 = vadd.f32 0.0, %v3692
        %3694 = vmatmul.f32.gmra.mxu0 %v3203
        %v3695 = vpop.f32.mrf.mxu0
        %v3696 = vadd.f32 0.0, %v3695
        %3697 = vmatmul.f32.gmra.mxu0 %v3205
        %v3698 = vpop.f32.mrf.mxu0
        %v3699 = vadd.f32 0.0, %v3698
        %3700 = vmatmul.f32.gmra.mxu0 %v3207
        %v3701 = vpop.f32.mrf.mxu0
        %v3702 = vadd.f32 0.0, %v3701
        %3703 = vmatmul.f32.gmra.mxu0 %v3209
        %v3704 = vpop.f32.mrf.mxu0
        %v3705 = vadd.f32 0.0, %v3704
        %3706 = vmatmul.f32.gmra.mxu0 %v3211
        %v3707 = vpop.f32.mrf.mxu0
        %v3708 = vadd.f32 0.0, %v3707
        %3709 = vmatmul.f32.gmra.mxu0 %v3606
        %v3710 = vpop.f32.mrf.mxu0
        %v3711 = vadd.f32 0.0, %v3710
        %3712 = vmatmul.f32.gmra.mxu0 %v3608
        %v3713 = vpop.f32.mrf.mxu0
        %v3714 = vadd.f32 0.0, %v3713
        %3715 = vmatmul.f32.gmra.mxu0 %v3610
        %v3716 = vpop.f32.mrf.mxu0
        %v3717 = vadd.f32 0.0, %v3716
        %3718 = vmatmul.f32.gmra.mxu0 %v3612
        %v3719 = vpop.f32.mrf.mxu0
        %v3720 = vadd.f32 0.0, %v3719
        %3721 = vmatmul.f32.gmra.mxu0 %v3614
        %v3722 = vpop.f32.mrf.mxu0
        %v3723 = vadd.f32 0.0, %v3722
        %3724 = vmatmul.f32.gmra.mxu0 %v3616
        %v3725 = vpop.f32.mrf.mxu0
        %v3726 = vadd.f32 0.0, %v3725
        %3727 = vmatmul.f32.gmra.mxu0 %v3618
        %v3728 = vpop.f32.mrf.mxu0
        %v3729 = vadd.f32 0.0, %v3728
        %3730 = vmatmul.f32.gmra.mxu0 %v3620
        %v3731 = vpop.f32.mrf.mxu0
        %v3732 = vadd.f32 0.0, %v3731
        %3733 = vmatmul.f32.gmra.mxu0 %v3622
        %v3734 = vpop.f32.mrf.mxu0
        %v3735 = vadd.f32 0.0, %v3734
        %3736 = vmatmul.f32.gmra.mxu0 %v3624
        %v3737 = vpop.f32.mrf.mxu0
        %v3738 = vadd.f32 0.0, %v3737
        %3739 = vmatmul.f32.gmra.mxu0 %v3626
        %v3740 = vpop.f32.mrf.mxu0
        %v3741 = vadd.f32 0.0, %v3740
        %3742 = vmatmul.f32.gmra.mxu0 %v3628
        %v3743 = vpop.f32.mrf.mxu0
        %v3744 = vadd.f32 0.0, %v3743
        %3745 = vdwg.mxu0
        %v3746 = vadd.f32 %v3533, %v3651
        %v3747 = vadd.f32 %v3534, %v3654
        %v3748 = vadd.f32 %v3535, %v3657
        %v3749 = vadd.f32 %v3536, %v3660
        %v3750 = vadd.f32 %v3537, %v3663
        %v3751 = vadd.f32 %v3538, %v3666
        %v3752 = vadd.f32 %v3539, %v3669
        %v3753 = vadd.f32 %v3540, %v3672
        %v3754 = vadd.f32 %v3541, %v3675
        %v3755 = vadd.f32 %v3542, %v3678
        %v3756 = vadd.f32 %v3543, %v3681
        %v3757 = vadd.f32 %v3544, %v3684
        %v3758 = vadd.f32 %v3545, %v3687
        %v3759 = vadd.f32 %v3546, %v3690
        %v3760 = vadd.f32 %v3547, %v3693
        %v3761 = vadd.f32 %v3548, %v3696
        %v3762 = vadd.f32 %v3549, %v3699
        %v3763 = vadd.f32 %v3550, %v3702
        %v3764 = vadd.f32 %v3551, %v3705
        %v3765 = vadd.f32 %v3552, %v3708
        %v3766 = vadd.f32 %v3553, %v3711
        %v3767 = vadd.f32 %v3554, %v3714
        %v3768 = vadd.f32 %v3555, %v3717
        %v3769 = vadd.f32 %v3556, %v3720
        %v3770 = vadd.f32 %v3557, %v3723
        %v3771 = vadd.f32 %v3558, %v3726
        %v3772 = vadd.f32 %v3559, %v3729
        %v3773 = vadd.f32 %v3560, %v3732
        %v3774 = vadd.f32 %v3561, %v3735
        %v3775 = vadd.f32 %v3562, %v3738
        %v3776 = vadd.f32 %v3563, %v3741
        %v3777 = vadd.f32 %v3564, %v3744
        %v3781 = vrot.slane %v310, 1
        %v3782 = vrot.slane %v311, 1
        %v3783 = vsel %vm703, %v3781, %v3782
        %v3784 = vrot.slane %v312, 1
        %v3785 = vsel %vm703, %v3782, %v3784
        %v3786 = vrot.slane %v315, 1
        %v3787 = vrot.slane %v316, 1
        %v3788 = vsel %vm703, %v3786, %v3787
        %v3789 = vrot.slane %v317, 1
        %v3790 = vsel %vm703, %v3787, %v3789
        %v3791 = vrot.slane %v320, 1
        %v3792 = vrot.slane %v321, 1
        %v3793 = vsel %vm703, %v3791, %v3792
        %v3794 = vrot.slane %v322, 1
        %v3795 = vsel %vm703, %v3792, %v3794
        %s3796 = scalar_lea.vmem %s1, 60
        %v3797 = vld [vmem:[%s3796] sm:$0xf]
        %v3798 = vsel %vm473, %v3783, 0
        %v3800 = vsel %vm473, %v3785, 0
        %v3802 = vsel %vm473, %v3788, 0
        %v3804 = vsel %vm473, %v3790, 0
        %v3806 = vsel %vm473, %v3793, 0
        %v3808 = vsel %vm473, %v3795, 0
        %v3811 = vsel %vm538, %v3797, 0
        %3813 = vmatpush.msra.mxu0 0.0
        %3814 = vmatpush.msra.mxu0 0.0
        %3815 = vmatpush.msra.mxu0 0.0
        %3816 = vmatpush.msra.mxu0 0.0
        %3817 = vmatpush.msra.mxu0 0.0
        %3818 = vmatpush.msra.mxu0 0.0
        %3819 = vmatpush.msra.mxu0 0.0
        %3820 = vmatpush.msra.mxu0 0.0
        %3821 = vmatpush.msra.mxu0 0.0
        %3822 = vmatpush.msra.mxu0 0.0
        %3823 = vmatpush.msra.mxu0 0.0
        %3824 = vmatpush.msra.mxu0 0.0
        %3825 = vmatpush.msra.mxu0 0.0
        %3826 = vmatpush.msra.mxu0 0.0
        %3827 = vmatpush.msra.mxu0 0.0
        %3828 = vmatpush.msra.mxu0 %v3811
        %3829 = vmatmul.f32.gmra.mxu0 %v822
        %v3830 = vpop.f32.mrf.mxu0
        %v3831 = vadd.f32 0.0, %v3830
        %3832 = vmatmul.f32.gmra.mxu0 %v824
        %v3833 = vpop.f32.mrf.mxu0
        %v3834 = vadd.f32 0.0, %v3833
        %3835 = vmatmul.f32.gmra.mxu0 %v826
        %v3836 = vpop.f32.mrf.mxu0
        %v3837 = vadd.f32 0.0, %v3836
        %3838 = vmatmul.f32.gmra.mxu0 %v828
        %v3839 = vpop.f32.mrf.mxu0
        %v3840 = vadd.f32 0.0, %v3839
        %3841 = vmatmul.f32.gmra.mxu0 %v830
        %v3842 = vpop.f32.mrf.mxu0
        %v3843 = vadd.f32 0.0, %v3842
        %3844 = vmatmul.f32.gmra.mxu0 %v832
        %v3845 = vpop.f32.mrf.mxu0
        %v3846 = vadd.f32 0.0, %v3845
        %3847 = vmatmul.f32.gmra.mxu0 %v834
        %v3848 = vpop.f32.mrf.mxu0
        %v3849 = vadd.f32 0.0, %v3848
        %3850 = vmatmul.f32.gmra.mxu0 %v836
        %v3851 = vpop.f32.mrf.mxu0
        %v3852 = vadd.f32 0.0, %v3851
        %3853 = vmatmul.f32.gmra.mxu0 %v838
        %v3854 = vpop.f32.mrf.mxu0
        %v3855 = vadd.f32 0.0, %v3854
        %3856 = vmatmul.f32.gmra.mxu0 %v840
        %v3857 = vpop.f32.mrf.mxu0
        %v3858 = vadd.f32 0.0, %v3857
        %3859 = vmatmul.f32.gmra.mxu0 %v842
        %v3860 = vpop.f32.mrf.mxu0
        %v3861 = vadd.f32 0.0, %v3860
        %3862 = vmatmul.f32.gmra.mxu0 %v844
        %v3863 = vpop.f32.mrf.mxu0
        %v3864 = vadd.f32 0.0, %v3863
        %3865 = vmatmul.f32.gmra.mxu0 %v846
        %v3866 = vpop.f32.mrf.mxu0
        %v3867 = vadd.f32 0.0, %v3866
        %3868 = vmatmul.f32.gmra.mxu0 %v848
        %v3869 = vpop.f32.mrf.mxu0
        %v3870 = vadd.f32 0.0, %v3869
        %3871 = vmatmul.f32.gmra.mxu0 %v1498
        %v3872 = vpop.f32.mrf.mxu0
        %v3873 = vadd.f32 0.0, %v3872
        %3874 = vmatmul.f32.gmra.mxu0 %v1500
        %v3875 = vpop.f32.mrf.mxu0
        %v3876 = vadd.f32 0.0, %v3875
        %3877 = vmatmul.f32.gmra.mxu0 %v1502
        %v3878 = vpop.f32.mrf.mxu0
        %v3879 = vadd.f32 0.0, %v3878
        %3880 = vmatmul.f32.gmra.mxu0 %v1504
        %v3881 = vpop.f32.mrf.mxu0
        %v3882 = vadd.f32 0.0, %v3881
        %3883 = vmatmul.f32.gmra.mxu0 %v1506
        %v3884 = vpop.f32.mrf.mxu0
        %v3885 = vadd.f32 0.0, %v3884
        %3886 = vmatmul.f32.gmra.mxu0 %v1508
        %v3887 = vpop.f32.mrf.mxu0
        %v3888 = vadd.f32 0.0, %v3887
        %3889 = vmatmul.f32.gmra.mxu0 %v2041
        %v3890 = vpop.f32.mrf.mxu0
        %v3891 = vadd.f32 0.0, %v3890
        %3892 = vmatmul.f32.gmra.mxu0 %v2043
        %v3893 = vpop.f32.mrf.mxu0
        %v3894 = vadd.f32 0.0, %v3893
        %3895 = vmatmul.f32.gmra.mxu0 %v2045
        %v3896 = vpop.f32.mrf.mxu0
        %v3897 = vadd.f32 0.0, %v3896
        %3898 = vmatmul.f32.gmra.mxu0 %v2047
        %v3899 = vpop.f32.mrf.mxu0
        %v3900 = vadd.f32 0.0, %v3899
        %3901 = vmatmul.f32.gmra.mxu0 %v2049
        %v3902 = vpop.f32.mrf.mxu0
        %v3903 = vadd.f32 0.0, %v3902
        %3904 = vmatmul.f32.gmra.mxu0 %v2051
        %v3905 = vpop.f32.mrf.mxu0
        %v3906 = vadd.f32 0.0, %v3905
        %3907 = vmatmul.f32.gmra.mxu0 %v3798
        %v3908 = vpop.f32.mrf.mxu0
        %v3909 = vadd.f32 0.0, %v3908
        %3910 = vmatmul.f32.gmra.mxu0 %v3800
        %v3911 = vpop.f32.mrf.mxu0
        %v3912 = vadd.f32 0.0, %v3911
        %3913 = vmatmul.f32.gmra.mxu0 %v3802
        %v3914 = vpop.f32.mrf.mxu0
        %v3915 = vadd.f32 0.0, %v3914
        %3916 = vmatmul.f32.gmra.mxu0 %v3804
        %v3917 = vpop.f32.mrf.mxu0
        %v3918 = vadd.f32 0.0, %v3917
        %3919 = vmatmul.f32.gmra.mxu0 %v3806
        %v3920 = vpop.f32.mrf.mxu0
        %v3921 = vadd.f32 0.0, %v3920
        %3922 = vmatmul.f32.gmra.mxu0 %v3808
        %v3923 = vpop.f32.mrf.mxu0
        %v3924 = vadd.f32 0.0, %v3923
        %3925 = vdwg.mxu0
        %v3926 = vadd.f32 %v3746, %v3831
        %v3927 = vadd.f32 %v3747, %v3834
        %v3928 = vadd.f32 %v3748, %v3837
        %v3929 = vadd.f32 %v3749, %v3840
        %v3930 = vadd.f32 %v3750, %v3843
        %v3931 = vadd.f32 %v3751, %v3846
        %v3932 = vadd.f32 %v3752, %v3849
        %v3933 = vadd.f32 %v3753, %v3852
        %v3934 = vadd.f32 %v3754, %v3855
        %v3935 = vadd.f32 %v3755, %v3858
        %v3936 = vadd.f32 %v3756, %v3861
        %v3937 = vadd.f32 %v3757, %v3864
        %v3938 = vadd.f32 %v3758, %v3867
        %v3939 = vadd.f32 %v3759, %v3870
        %v3940 = vadd.f32 %v3760, %v3873
        %v3941 = vadd.f32 %v3761, %v3876
        %v3942 = vadd.f32 %v3762, %v3879
        %v3943 = vadd.f32 %v3763, %v3882
        %v3944 = vadd.f32 %v3764, %v3885
        %v3945 = vadd.f32 %v3765, %v3888
        %v3946 = vadd.f32 %v3766, %v3891
        %v3947 = vadd.f32 %v3767, %v3894
        %v3948 = vadd.f32 %v3768, %v3897
        %v3949 = vadd.f32 %v3769, %v3900
        %v3950 = vadd.f32 %v3770, %v3903
        %v3951 = vadd.f32 %v3771, %v3906
        %v3952 = vadd.f32 %v3772, %v3909
        %v3953 = vadd.f32 %v3773, %v3912
        %v3954 = vadd.f32 %v3774, %v3915
        %v3955 = vadd.f32 %v3775, %v3918
        %v3956 = vadd.f32 %v3776, %v3921
        %v3957 = vadd.f32 %v3777, %v3924
        %v3958 = vrot.slane %v295, 7
        %v3959 = vrot.slane %v296, 7
        %v3960 = vsel %vm2862, %v3958, %v3959
        %v3961 = vrot.slane %v297, 7
        %v3962 = vsel %vm2862, %v3959, %v3961
        %v3963 = vrot.slane %v300, 7
        %v3964 = vrot.slane %v301, 7
        %v3965 = vsel %vm2862, %v3963, %v3964
        %v3966 = vrot.slane %v302, 7
        %v3967 = vsel %vm2862, %v3964, %v3966
        %v3968 = vrot.slane %v305, 7
        %v3969 = vrot.slane %v306, 7
        %v3970 = vsel %vm2862, %v3968, %v3969
        %v3971 = vrot.slane %v307, 7
        %v3972 = vsel %vm2862, %v3969, %v3971
        %v3973 = vrot.slane %v310, 7
        %v3974 = vrot.slane %v311, 7
        %v3975 = vsel %vm2862, %v3973, %v3974
        %v3976 = vrot.slane %v312, 7
        %v3977 = vsel %vm2862, %v3974, %v3976
        %v3978 = vrot.slane %v315, 7
        %v3979 = vrot.slane %v316, 7
        %v3980 = vsel %vm2862, %v3978, %v3979
        %v3981 = vrot.slane %v317, 7
        %v3982 = vsel %vm2862, %v3979, %v3981
        %v3983 = vrot.slane %v320, 7
        %v3984 = vrot.slane %v321, 7
        %v3985 = vsel %vm2862, %v3983, %v3984
        %v3986 = vrot.slane %v322, 7
        %v3987 = vsel %vm2862, %v3984, %v3986
        %s3988 = scalar_lea.vmem %s1, 64
        %v3989 = vld [vmem:[%s3988] sm:$0xf]
        %v3990 = vsel %vm473, %v3960, 0
        %v3992 = vsel %vm473, %v3962, 0
        %v3994 = vsel %vm473, %v3965, 0
        %v3996 = vsel %vm473, %v3967, 0
        %v3998 = vsel %vm473, %v3970, 0
        %v4000 = vsel %vm473, %v3972, 0
        %v4002 = vsel %vm473, %v3975, 0
        %v4004 = vsel %vm473, %v3977, 0
        %v4006 = vsel %vm473, %v3980, 0
        %v4008 = vsel %vm473, %v3982, 0
        %v4010 = vsel %vm473, %v3985, 0
        %v4012 = vsel %vm473, %v3987, 0
        %v4015 = vsel %vm538, %v3989, 0
        %4017 = vmatpush.msra.mxu0 0.0
        %4018 = vmatpush.msra.mxu0 0.0
        %4019 = vmatpush.msra.mxu0 0.0
        %4020 = vmatpush.msra.mxu0 0.0
        %4021 = vmatpush.msra.mxu0 0.0
        %4022 = vmatpush.msra.mxu0 0.0
        %4023 = vmatpush.msra.mxu0 0.0
        %4024 = vmatpush.msra.mxu0 0.0
        %4025 = vmatpush.msra.mxu0 0.0
        %4026 = vmatpush.msra.mxu0 0.0
        %4027 = vmatpush.msra.mxu0 0.0
        %4028 = vmatpush.msra.mxu0 0.0
        %4029 = vmatpush.msra.mxu0 0.0
        %4030 = vmatpush.msra.mxu0 0.0
        %4031 = vmatpush.msra.mxu0 0.0
        %4032 = vmatpush.msra.mxu0 %v4015
        %4033 = vmatmul.f32.gmra.mxu0 %v2993
        %v4034 = vpop.f32.mrf.mxu0
        %v4035 = vadd.f32 0.0, %v4034
        %4036 = vmatmul.f32.gmra.mxu0 %v2995
        %v4037 = vpop.f32.mrf.mxu0
        %v4038 = vadd.f32 0.0, %v4037
        %4039 = vmatmul.f32.gmra.mxu0 %v2997
        %v4040 = vpop.f32.mrf.mxu0
        %v4041 = vadd.f32 0.0, %v4040
        %4042 = vmatmul.f32.gmra.mxu0 %v2999
        %v4043 = vpop.f32.mrf.mxu0
        %v4044 = vadd.f32 0.0, %v4043
        %4045 = vmatmul.f32.gmra.mxu0 %v3001
        %v4046 = vpop.f32.mrf.mxu0
        %v4047 = vadd.f32 0.0, %v4046
        %4048 = vmatmul.f32.gmra.mxu0 %v3003
        %v4049 = vpop.f32.mrf.mxu0
        %v4050 = vadd.f32 0.0, %v4049
        %4051 = vmatmul.f32.gmra.mxu0 %v3005
        %v4052 = vpop.f32.mrf.mxu0
        %v4053 = vadd.f32 0.0, %v4052
        %4054 = vmatmul.f32.gmra.mxu0 %v3007
        %v4055 = vpop.f32.mrf.mxu0
        %v4056 = vadd.f32 0.0, %v4055
        %4057 = vmatmul.f32.gmra.mxu0 %v3393
        %v4058 = vpop.f32.mrf.mxu0
        %v4059 = vadd.f32 0.0, %v4058
        %4060 = vmatmul.f32.gmra.mxu0 %v3395
        %v4061 = vpop.f32.mrf.mxu0
        %v4062 = vadd.f32 0.0, %v4061
        %4063 = vmatmul.f32.gmra.mxu0 %v3397
        %v4064 = vpop.f32.mrf.mxu0
        %v4065 = vadd.f32 0.0, %v4064
        %4066 = vmatmul.f32.gmra.mxu0 %v3399
        %v4067 = vpop.f32.mrf.mxu0
        %v4068 = vadd.f32 0.0, %v4067
        %4069 = vmatmul.f32.gmra.mxu0 %v3401
        %v4070 = vpop.f32.mrf.mxu0
        %v4071 = vadd.f32 0.0, %v4070
        %4072 = vmatmul.f32.gmra.mxu0 %v3403
        %v4073 = vpop.f32.mrf.mxu0
        %v4074 = vadd.f32 0.0, %v4073
        %4075 = vmatmul.f32.gmra.mxu0 %v3405
        %v4076 = vpop.f32.mrf.mxu0
        %v4077 = vadd.f32 0.0, %v4076
        %4078 = vmatmul.f32.gmra.mxu0 %v3407
        %v4079 = vpop.f32.mrf.mxu0
        %v4080 = vadd.f32 0.0, %v4079
        %4081 = vmatmul.f32.gmra.mxu0 %v3409
        %v4082 = vpop.f32.mrf.mxu0
        %v4083 = vadd.f32 0.0, %v4082
        %4084 = vmatmul.f32.gmra.mxu0 %v3411
        %v4085 = vpop.f32.mrf.mxu0
        %v4086 = vadd.f32 0.0, %v4085
        %4087 = vmatmul.f32.gmra.mxu0 %v3413
        %v4088 = vpop.f32.mrf.mxu0
        %v4089 = vadd.f32 0.0, %v4088
        %4090 = vmatmul.f32.gmra.mxu0 %v3415
        %v4091 = vpop.f32.mrf.mxu0
        %v4092 = vadd.f32 0.0, %v4091
        %4093 = vmatmul.f32.gmra.mxu0 %v3990
        %v4094 = vpop.f32.mrf.mxu0
        %v4095 = vadd.f32 0.0, %v4094
        %4096 = vmatmul.f32.gmra.mxu0 %v3992
        %v4097 = vpop.f32.mrf.mxu0
        %v4098 = vadd.f32 0.0, %v4097
        %4099 = vmatmul.f32.gmra.mxu0 %v3994
        %v4100 = vpop.f32.mrf.mxu0
        %v4101 = vadd.f32 0.0, %v4100
        %4102 = vmatmul.f32.gmra.mxu0 %v3996
        %v4103 = vpop.f32.mrf.mxu0
        %v4104 = vadd.f32 0.0, %v4103
        %4105 = vmatmul.f32.gmra.mxu0 %v3998
        %v4106 = vpop.f32.mrf.mxu0
        %v4107 = vadd.f32 0.0, %v4106
        %4108 = vmatmul.f32.gmra.mxu0 %v4000
        %v4109 = vpop.f32.mrf.mxu0
        %v4110 = vadd.f32 0.0, %v4109
        %4111 = vmatmul.f32.gmra.mxu0 %v4002
        %v4112 = vpop.f32.mrf.mxu0
        %v4113 = vadd.f32 0.0, %v4112
        %4114 = vmatmul.f32.gmra.mxu0 %v4004
        %v4115 = vpop.f32.mrf.mxu0
        %v4116 = vadd.f32 0.0, %v4115
        %4117 = vmatmul.f32.gmra.mxu0 %v4006
        %v4118 = vpop.f32.mrf.mxu0
        %v4119 = vadd.f32 0.0, %v4118
        %4120 = vmatmul.f32.gmra.mxu0 %v4008
        %v4121 = vpop.f32.mrf.mxu0
        %v4122 = vadd.f32 0.0, %v4121
        %4123 = vmatmul.f32.gmra.mxu0 %v4010
        %v4124 = vpop.f32.mrf.mxu0
        %v4125 = vadd.f32 0.0, %v4124
        %4126 = vmatmul.f32.gmra.mxu0 %v4012
        %v4127 = vpop.f32.mrf.mxu0
        %v4128 = vadd.f32 0.0, %v4127
        %4129 = vdwg.mxu0
        %v4130 = vadd.f32 %v3926, %v4035
        %v4131 = vadd.f32 %v3927, %v4038
        %v4132 = vadd.f32 %v3928, %v4041
        %v4133 = vadd.f32 %v3929, %v4044
        %v4134 = vadd.f32 %v3930, %v4047
        %v4135 = vadd.f32 %v3931, %v4050
        %v4136 = vadd.f32 %v3932, %v4053
        %v4137 = vadd.f32 %v3933, %v4056
        %v4138 = vadd.f32 %v3934, %v4059
        %v4139 = vadd.f32 %v3935, %v4062
        %v4140 = vadd.f32 %v3936, %v4065
        %v4141 = vadd.f32 %v3937, %v4068
        %v4142 = vadd.f32 %v3938, %v4071
        %v4143 = vadd.f32 %v3939, %v4074
        %v4144 = vadd.f32 %v3940, %v4077
        %v4145 = vadd.f32 %v3941, %v4080
        %v4146 = vadd.f32 %v3942, %v4083
        %v4147 = vadd.f32 %v3943, %v4086
        %v4148 = vadd.f32 %v3944, %v4089
        %v4149 = vadd.f32 %v3945, %v4092
        %v4150 = vadd.f32 %v3946, %v4095
        %v4151 = vadd.f32 %v3947, %v4098
        %v4152 = vadd.f32 %v3948, %v4101
        %v4153 = vadd.f32 %v3949, %v4104
        %v4154 = vadd.f32 %v3950, %v4107
        %v4155 = vadd.f32 %v3951, %v4110
        %v4156 = vadd.f32 %v3952, %v4113
        %v4157 = vadd.f32 %v3953, %v4116
        %v4158 = vadd.f32 %v3954, %v4119
        %v4159 = vadd.f32 %v3955, %v4122
        %v4160 = vadd.f32 %v3956, %v4125
        %v4161 = vadd.f32 %v3957, %v4128
        %s4162 = scalar_lea.vmem %s1, 68
        %v4163 = vld [vmem:[%s4162] sm:$0xf]
        %v4165 = vsel %vm473, %v169, 0
        %v4168 = vsel %vm473, %v170, 0
        %v4171 = vsel %vm473, %v174, 0
        %v4174 = vsel %vm473, %v175, 0
        %v4177 = vsel %vm473, %v179, 0
        %v4180 = vsel %vm473, %v180, 0
        %v4182 = vsel %vm473, %v184, 0
        %v4184 = vsel %vm473, %v185, 0
        %v4186 = vsel %vm473, %v189, 0
        %v4188 = vsel %vm473, %v190, 0
        %v4190 = vsel %vm473, %v194, 0
        %v4192 = vsel %vm473, %v195, 0
        %v4194 = vsel %vm473, %v199, 0
        %v4196 = vsel %vm473, %v200, 0
        %v4198 = vsel %vm473, %v204, 0
        %v4200 = vsel %vm473, %v205, 0
        %v4202 = vsel %vm473, %v209, 0
        %v4204 = vsel %vm473, %v210, 0
        %v4206 = vsel %vm473, %v214, 0
        %v4208 = vsel %vm473, %v215, 0
        %v4210 = vsel %vm473, %v219, 0
        %v4212 = vsel %vm473, %v220, 0
        %v4214 = vsel %vm473, %v224, 0
        %v4216 = vsel %vm473, %v225, 0
        %v4218 = vsel %vm473, %v229, 0
        %v4220 = vsel %vm473, %v230, 0
        %v4222 = vsel %vm473, %v234, 0
        %v4224 = vsel %vm473, %v235, 0
        %v4226 = vsel %vm473, %v239, 0
        %v4228 = vsel %vm473, %v240, 0
        %v4230 = vsel %vm473, %v244, 0
        %v4232 = vsel %vm473, %v245, 0
        %v4235 = vsel %vm538, %v4163, 0
        %4237 = vmatpush.msra.mxu0 0.0
        %4238 = vmatpush.msra.mxu0 0.0
        %4239 = vmatpush.msra.mxu0 0.0
        %4240 = vmatpush.msra.mxu0 0.0
        %4241 = vmatpush.msra.mxu0 0.0
        %4242 = vmatpush.msra.mxu0 0.0
        %4243 = vmatpush.msra.mxu0 0.0
        %4244 = vmatpush.msra.mxu0 0.0
        %4245 = vmatpush.msra.mxu0 0.0
        %4246 = vmatpush.msra.mxu0 0.0
        %4247 = vmatpush.msra.mxu0 0.0
        %4248 = vmatpush.msra.mxu0 0.0
        %4249 = vmatpush.msra.mxu0 0.0
        %4250 = vmatpush.msra.mxu0 0.0
        %4251 = vmatpush.msra.mxu0 0.0
        %4252 = vmatpush.msra.mxu0 %v4235
        %4253 = vmatmul.f32.gmra.mxu0 %v4165
        %v4254 = vpop.f32.mrf.mxu0
        %v4255 = vadd.f32 0.0, %v4254
        %4256 = vmatmul.f32.gmra.mxu0 %v4168
        %v4257 = vpop.f32.mrf.mxu0
        %v4258 = vadd.f32 0.0, %v4257
        %4259 = vmatmul.f32.gmra.mxu0 %v4171
        %v4260 = vpop.f32.mrf.mxu0
        %v4261 = vadd.f32 0.0, %v4260
        %4262 = vmatmul.f32.gmra.mxu0 %v4174
        %v4263 = vpop.f32.mrf.mxu0
        %v4264 = vadd.f32 0.0, %v4263
        %4265 = vmatmul.f32.gmra.mxu0 %v4177
        %v4266 = vpop.f32.mrf.mxu0
        %v4267 = vadd.f32 0.0, %v4266
        %4268 = vmatmul.f32.gmra.mxu0 %v4180
        %v4269 = vpop.f32.mrf.mxu0
        %v4270 = vadd.f32 0.0, %v4269
        %4271 = vmatmul.f32.gmra.mxu0 %v4182
        %v4272 = vpop.f32.mrf.mxu0
        %v4273 = vadd.f32 0.0, %v4272
        %4274 = vmatmul.f32.gmra.mxu0 %v4184
        %v4275 = vpop.f32.mrf.mxu0
        %v4276 = vadd.f32 0.0, %v4275
        %4277 = vmatmul.f32.gmra.mxu0 %v4186
        %v4278 = vpop.f32.mrf.mxu0
        %v4279 = vadd.f32 0.0, %v4278
        %4280 = vmatmul.f32.gmra.mxu0 %v4188
        %v4281 = vpop.f32.mrf.mxu0
        %v4282 = vadd.f32 0.0, %v4281
        %4283 = vmatmul.f32.gmra.mxu0 %v4190
        %v4284 = vpop.f32.mrf.mxu0
        %v4285 = vadd.f32 0.0, %v4284
        %4286 = vmatmul.f32.gmra.mxu0 %v4192
        %v4287 = vpop.f32.mrf.mxu0
        %v4288 = vadd.f32 0.0, %v4287
        %4289 = vmatmul.f32.gmra.mxu0 %v4194
        %v4290 = vpop.f32.mrf.mxu0
        %v4291 = vadd.f32 0.0, %v4290
        %4292 = vmatmul.f32.gmra.mxu0 %v4196
        %v4293 = vpop.f32.mrf.mxu0
        %v4294 = vadd.f32 0.0, %v4293
        %4295 = vmatmul.f32.gmra.mxu0 %v4198
        %v4296 = vpop.f32.mrf.mxu0
        %v4297 = vadd.f32 0.0, %v4296
        %4298 = vmatmul.f32.gmra.mxu0 %v4200
        %v4299 = vpop.f32.mrf.mxu0
        %v4300 = vadd.f32 0.0, %v4299
        %4301 = vmatmul.f32.gmra.mxu0 %v4202
        %v4302 = vpop.f32.mrf.mxu0
        %v4303 = vadd.f32 0.0, %v4302
        %4304 = vmatmul.f32.gmra.mxu0 %v4204
        %v4305 = vpop.f32.mrf.mxu0
        %v4306 = vadd.f32 0.0, %v4305
        %4307 = vmatmul.f32.gmra.mxu0 %v4206
        %v4308 = vpop.f32.mrf.mxu0
        %v4309 = vadd.f32 0.0, %v4308
        %4310 = vmatmul.f32.gmra.mxu0 %v4208
        %v4311 = vpop.f32.mrf.mxu0
        %v4312 = vadd.f32 0.0, %v4311
        %4313 = vmatmul.f32.gmra.mxu0 %v4210
        %v4314 = vpop.f32.mrf.mxu0
        %v4315 = vadd.f32 0.0, %v4314
        %4316 = vmatmul.f32.gmra.mxu0 %v4212
        %v4317 = vpop.f32.mrf.mxu0
        %v4318 = vadd.f32 0.0, %v4317
        %4319 = vmatmul.f32.gmra.mxu0 %v4214
        %v4320 = vpop.f32.mrf.mxu0
        %v4321 = vadd.f32 0.0, %v4320
        %4322 = vmatmul.f32.gmra.mxu0 %v4216
        %v4323 = vpop.f32.mrf.mxu0
        %v4324 = vadd.f32 0.0, %v4323
        %4325 = vmatmul.f32.gmra.mxu0 %v4218
        %v4326 = vpop.f32.mrf.mxu0
        %v4327 = vadd.f32 0.0, %v4326
        %4328 = vmatmul.f32.gmra.mxu0 %v4220
        %v4329 = vpop.f32.mrf.mxu0
        %v4330 = vadd.f32 0.0, %v4329
        %4331 = vmatmul.f32.gmra.mxu0 %v4222
        %v4332 = vpop.f32.mrf.mxu0
        %v4333 = vadd.f32 0.0, %v4332
        %4334 = vmatmul.f32.gmra.mxu0 %v4224
        %v4335 = vpop.f32.mrf.mxu0
        %v4336 = vadd.f32 0.0, %v4335
        %4337 = vmatmul.f32.gmra.mxu0 %v4226
        %v4338 = vpop.f32.mrf.mxu0
        %v4339 = vadd.f32 0.0, %v4338
        %4340 = vmatmul.f32.gmra.mxu0 %v4228
        %v4341 = vpop.f32.mrf.mxu0
        %v4342 = vadd.f32 0.0, %v4341
        %4343 = vmatmul.f32.gmra.mxu0 %v4230
        %v4344 = vpop.f32.mrf.mxu0
        %v4345 = vadd.f32 0.0, %v4344
        %4346 = vmatmul.f32.gmra.mxu0 %v4232
        %v4347 = vpop.f32.mrf.mxu0
        %v4348 = vadd.f32 0.0, %v4347
        %4349 = vdwg.mxu0
        %v4350 = vadd.f32 %v4130, %v4255
        %v4351 = vadd.f32 %v4131, %v4258
        %v4352 = vadd.f32 %v4132, %v4261
        %v4353 = vadd.f32 %v4133, %v4264
        %v4354 = vadd.f32 %v4134, %v4267
        %v4355 = vadd.f32 %v4135, %v4270
        %v4356 = vadd.f32 %v4136, %v4273
        %v4357 = vadd.f32 %v4137, %v4276
        %v4358 = vadd.f32 %v4138, %v4279
        %v4359 = vadd.f32 %v4139, %v4282
        %v4360 = vadd.f32 %v4140, %v4285
        %v4361 = vadd.f32 %v4141, %v4288
        %v4362 = vadd.f32 %v4142, %v4291
        %v4363 = vadd.f32 %v4143, %v4294
        %v4364 = vadd.f32 %v4144, %v4297
        %v4365 = vadd.f32 %v4145, %v4300
        %v4366 = vadd.f32 %v4146, %v4303
        %v4367 = vadd.f32 %v4147, %v4306
        %v4368 = vadd.f32 %v4148, %v4309
        %v4369 = vadd.f32 %v4149, %v4312
        %v4370 = vadd.f32 %v4150, %v4315
        %v4371 = vadd.f32 %v4151, %v4318
        %v4372 = vadd.f32 %v4152, %v4321
        %v4373 = vadd.f32 %v4153, %v4324
        %v4374 = vadd.f32 %v4154, %v4327
        %v4375 = vadd.f32 %v4155, %v4330
        %v4376 = vadd.f32 %v4156, %v4333
        %v4377 = vadd.f32 %v4157, %v4336
        %v4378 = vadd.f32 %v4158, %v4339
        %v4379 = vadd.f32 %v4159, %v4342
        %v4380 = vadd.f32 %v4160, %v4345
        %v4381 = vadd.f32 %v4161, %v4348
        %v4388 = vrot.slane %v170, 1
        %v4389 = vrot.slane %v171, 1
        %v4390 = vsel %vm703, %v4388, %v4389
        %v4391 = vrot.slane %v172, 1
        %v4392 = vsel %vm703, %v4389, %v4391
        %v4393 = vrot.slane %v175, 1
        %v4394 = vrot.slane %v176, 1
        %v4395 = vsel %vm703, %v4393, %v4394
        %v4396 = vrot.slane %v177, 1
        %v4397 = vsel %vm703, %v4394, %v4396
        %v4398 = vrot.slane %v180, 1
        %v4399 = vrot.slane %v181, 1
        %v4400 = vsel %vm703, %v4398, %v4399
        %v4401 = vrot.slane %v182, 1
        %v4402 = vsel %vm703, %v4399, %v4401
        %s4403 = scalar_lea.vmem %s1, 72
        %v4404 = vld [vmem:[%s4403] sm:$0xf]
        %v4405 = vsel %vm473, %v4390, 0
        %v4407 = vsel %vm473, %v4392, 0
        %v4409 = vsel %vm473, %v4395, 0
        %v4411 = vsel %vm473, %v4397, 0
        %v4413 = vsel %vm473, %v4400, 0
        %v4415 = vsel %vm473, %v4402, 0
        %v4418 = vsel %vm538, %v4404, 0
        %4420 = vmatpush.msra.mxu0 0.0
        %4421 = vmatpush.msra.mxu0 0.0
        %4422 = vmatpush.msra.mxu0 0.0
        %4423 = vmatpush.msra.mxu0 0.0
        %4424 = vmatpush.msra.mxu0 0.0
        %4425 = vmatpush.msra.mxu0 0.0
        %4426 = vmatpush.msra.mxu0 0.0
        %4427 = vmatpush.msra.mxu0 0.0
        %4428 = vmatpush.msra.mxu0 0.0
        %4429 = vmatpush.msra.mxu0 0.0
        %4430 = vmatpush.msra.mxu0 0.0
        %4431 = vmatpush.msra.mxu0 0.0
        %4432 = vmatpush.msra.mxu0 0.0
        %4433 = vmatpush.msra.mxu0 0.0
        %4434 = vmatpush.msra.mxu0 0.0
        %4435 = vmatpush.msra.mxu0 %v4418
        %4436 = vmatmul.f32.gmra.mxu0 %v4405
        %v4437 = vpop.f32.mrf.mxu0
        %v4438 = vadd.f32 0.0, %v4437
        %4439 = vmatmul.f32.gmra.mxu0 %v4407
        %v4440 = vpop.f32.mrf.mxu0
        %v4441 = vadd.f32 0.0, %v4440
        %4442 = vmatmul.f32.gmra.mxu0 %v4409
        %v4443 = vpop.f32.mrf.mxu0
        %v4444 = vadd.f32 0.0, %v4443
        %4445 = vmatmul.f32.gmra.mxu0 %v4411
        %v4446 = vpop.f32.mrf.mxu0
        %v4447 = vadd.f32 0.0, %v4446
        %4448 = vmatmul.f32.gmra.mxu0 %v4413
        %v4449 = vpop.f32.mrf.mxu0
        %v4450 = vadd.f32 0.0, %v4449
        %4451 = vmatmul.f32.gmra.mxu0 %v4415
        %v4452 = vpop.f32.mrf.mxu0
        %v4453 = vadd.f32 0.0, %v4452
        %4454 = vmatmul.f32.gmra.mxu0 %v2702
        %v4455 = vpop.f32.mrf.mxu0
        %v4456 = vadd.f32 0.0, %v4455
        %4457 = vmatmul.f32.gmra.mxu0 %v2704
        %v4458 = vpop.f32.mrf.mxu0
        %v4459 = vadd.f32 0.0, %v4458
        %4460 = vmatmul.f32.gmra.mxu0 %v2706
        %v4461 = vpop.f32.mrf.mxu0
        %v4462 = vadd.f32 0.0, %v4461
        %4463 = vmatmul.f32.gmra.mxu0 %v2708
        %v4464 = vpop.f32.mrf.mxu0
        %v4465 = vadd.f32 0.0, %v4464
        %4466 = vmatmul.f32.gmra.mxu0 %v2710
        %v4467 = vpop.f32.mrf.mxu0
        %v4468 = vadd.f32 0.0, %v4467
        %4469 = vmatmul.f32.gmra.mxu0 %v2712
        %v4470 = vpop.f32.mrf.mxu0
        %v4471 = vadd.f32 0.0, %v4470
        %4472 = vmatmul.f32.gmra.mxu0 %v786
        %v4473 = vpop.f32.mrf.mxu0
        %v4474 = vadd.f32 0.0, %v4473
        %4475 = vmatmul.f32.gmra.mxu0 %v788
        %v4476 = vpop.f32.mrf.mxu0
        %v4477 = vadd.f32 0.0, %v4476
        %4478 = vmatmul.f32.gmra.mxu0 %v790
        %v4479 = vpop.f32.mrf.mxu0
        %v4480 = vadd.f32 0.0, %v4479
        %4481 = vmatmul.f32.gmra.mxu0 %v792
        %v4482 = vpop.f32.mrf.mxu0
        %v4483 = vadd.f32 0.0, %v4482
        %4484 = vmatmul.f32.gmra.mxu0 %v794
        %v4485 = vpop.f32.mrf.mxu0
        %v4486 = vadd.f32 0.0, %v4485
        %4487 = vmatmul.f32.gmra.mxu0 %v796
        %v4488 = vpop.f32.mrf.mxu0
        %v4489 = vadd.f32 0.0, %v4488
        %4490 = vmatmul.f32.gmra.mxu0 %v798
        %v4491 = vpop.f32.mrf.mxu0
        %v4492 = vadd.f32 0.0, %v4491
        %4493 = vmatmul.f32.gmra.mxu0 %v800
        %v4494 = vpop.f32.mrf.mxu0
        %v4495 = vadd.f32 0.0, %v4494
        %4496 = vmatmul.f32.gmra.mxu0 %v802
        %v4497 = vpop.f32.mrf.mxu0
        %v4498 = vadd.f32 0.0, %v4497
        %4499 = vmatmul.f32.gmra.mxu0 %v804
        %v4500 = vpop.f32.mrf.mxu0
        %v4501 = vadd.f32 0.0, %v4500
        %4502 = vmatmul.f32.gmra.mxu0 %v806
        %v4503 = vpop.f32.mrf.mxu0
        %v4504 = vadd.f32 0.0, %v4503
        %4505 = vmatmul.f32.gmra.mxu0 %v808
        %v4506 = vpop.f32.mrf.mxu0
        %v4507 = vadd.f32 0.0, %v4506
        %4508 = vmatmul.f32.gmra.mxu0 %v810
        %v4509 = vpop.f32.mrf.mxu0
        %v4510 = vadd.f32 0.0, %v4509
        %4511 = vmatmul.f32.gmra.mxu0 %v812
        %v4512 = vpop.f32.mrf.mxu0
        %v4513 = vadd.f32 0.0, %v4512
        %4514 = vmatmul.f32.gmra.mxu0 %v814
        %v4515 = vpop.f32.mrf.mxu0
        %v4516 = vadd.f32 0.0, %v4515
        %4517 = vmatmul.f32.gmra.mxu0 %v816
        %v4518 = vpop.f32.mrf.mxu0
        %v4519 = vadd.f32 0.0, %v4518
        %4520 = vmatmul.f32.gmra.mxu0 %v818
        %v4521 = vpop.f32.mrf.mxu0
        %v4522 = vadd.f32 0.0, %v4521
        %4523 = vmatmul.f32.gmra.mxu0 %v820
        %v4524 = vpop.f32.mrf.mxu0
        %v4525 = vadd.f32 0.0, %v4524
        %4526 = vmatmul.f32.gmra.mxu0 %v822
        %v4527 = vpop.f32.mrf.mxu0
        %v4528 = vadd.f32 0.0, %v4527
        %4529 = vmatmul.f32.gmra.mxu0 %v824
        %v4530 = vpop.f32.mrf.mxu0
        %v4531 = vadd.f32 0.0, %v4530
        %4532 = vdwg.mxu0
        %v4533 = vadd.f32 %v4350, %v4438
        %v4534 = vadd.f32 %v4351, %v4441
        %v4535 = vadd.f32 %v4352, %v4444
        %v4536 = vadd.f32 %v4353, %v4447
        %v4537 = vadd.f32 %v4354, %v4450
        %v4538 = vadd.f32 %v4355, %v4453
        %v4539 = vadd.f32 %v4356, %v4456
        %v4540 = vadd.f32 %v4357, %v4459
        %v4541 = vadd.f32 %v4358, %v4462
        %v4542 = vadd.f32 %v4359, %v4465
        %v4543 = vadd.f32 %v4360, %v4468
        %v4544 = vadd.f32 %v4361, %v4471
        %v4545 = vadd.f32 %v4362, %v4474
        %v4546 = vadd.f32 %v4363, %v4477
        %v4547 = vadd.f32 %v4364, %v4480
        %v4548 = vadd.f32 %v4365, %v4483
        %v4549 = vadd.f32 %v4366, %v4486
        %v4550 = vadd.f32 %v4367, %v4489
        %v4551 = vadd.f32 %v4368, %v4492
        %v4552 = vadd.f32 %v4369, %v4495
        %v4553 = vadd.f32 %v4370, %v4498
        %v4554 = vadd.f32 %v4371, %v4501
        %v4555 = vadd.f32 %v4372, %v4504
        %v4556 = vadd.f32 %v4373, %v4507
        %v4557 = vadd.f32 %v4374, %v4510
        %v4558 = vadd.f32 %v4375, %v4513
        %v4559 = vadd.f32 %v4376, %v4516
        %v4560 = vadd.f32 %v4377, %v4519
        %v4561 = vadd.f32 %v4378, %v4522
        %v4562 = vadd.f32 %v4379, %v4525
        %v4563 = vadd.f32 %v4380, %v4528
        %v4564 = vadd.f32 %v4381, %v4531
        %vm4581 = vcmask 1045504
        %v4582 = vrot.slane %v171, 2
        %v4583 = vrot.slane %v172, 2
        %v4584 = vsel %vm4581, %v4582, %v4583
        %v4585 = vrot.slane %v173, 2
        %v4586 = vsel %vm4581, %v4583, %v4585
        %v4587 = vrot.slane %v176, 2
        %v4588 = vrot.slane %v177, 2
        %v4589 = vsel %vm4581, %v4587, %v4588
        %v4590 = vrot.slane %v178, 2
        %v4591 = vsel %vm4581, %v4588, %v4590
        %v4592 = vrot.slane %v181, 2
        %v4593 = vrot.slane %v182, 2
        %v4594 = vsel %vm4581, %v4592, %v4593
        %v4595 = vrot.slane %v183, 2
        %v4596 = vsel %vm4581, %v4593, %v4595
        %v4597 = vrot.slane %v186, 2
        %v4598 = vrot.slane %v187, 2
        %v4599 = vsel %vm4581, %v4597, %v4598
        %v4600 = vrot.slane %v188, 2
        %v4601 = vsel %vm4581, %v4598, %v4600
        %v4602 = vrot.slane %v191, 2
        %v4603 = vrot.slane %v192, 2
        %v4604 = vsel %vm4581, %v4602, %v4603
        %v4605 = vrot.slane %v193, 2
        %v4606 = vsel %vm4581, %v4603, %v4605
        %v4607 = vrot.slane %v196, 2
        %v4608 = vrot.slane %v197, 2
        %v4609 = vsel %vm4581, %v4607, %v4608
        %v4610 = vrot.slane %v198, 2
        %v4611 = vsel %vm4581, %v4608, %v4610
        %v4612 = vrot.slane %v201, 2
        %v4613 = vrot.slane %v202, 2
        %v4614 = vsel %vm4581, %v4612, %v4613
        %v4615 = vrot.slane %v203, 2
        %v4616 = vsel %vm4581, %v4613, %v4615
        %v4617 = vrot.slane %v206, 2
        %v4618 = vrot.slane %v207, 2
        %v4619 = vsel %vm4581, %v4617, %v4618
        %v4620 = vrot.slane %v208, 2
        %v4621 = vsel %vm4581, %v4618, %v4620
        %v4622 = vrot.slane %v211, 2
        %v4623 = vrot.slane %v212, 2
        %v4624 = vsel %vm4581, %v4622, %v4623
        %v4625 = vrot.slane %v213, 2
        %v4626 = vsel %vm4581, %v4623, %v4625
        %v4627 = vrot.slane %v216, 2
        %v4628 = vrot.slane %v217, 2
        %v4629 = vsel %vm4581, %v4627, %v4628
        %v4630 = vrot.slane %v218, 2
        %v4631 = vsel %vm4581, %v4628, %v4630
        %v4632 = vrot.slane %v221, 2
        %v4633 = vrot.slane %v222, 2
        %v4634 = vsel %vm4581, %v4632, %v4633
        %v4635 = vrot.slane %v223, 2
        %v4636 = vsel %vm4581, %v4633, %v4635
        %v4637 = vrot.slane %v226, 2
        %v4638 = vrot.slane %v227, 2
        %v4639 = vsel %vm4581, %v4637, %v4638
        %v4640 = vrot.slane %v228, 2
        %v4641 = vsel %vm4581, %v4638, %v4640
        %v4642 = vrot.slane %v231, 2
        %v4643 = vrot.slane %v232, 2
        %v4644 = vsel %vm4581, %v4642, %v4643
        %v4645 = vrot.slane %v233, 2
        %v4646 = vsel %vm4581, %v4643, %v4645
        %v4647 = vrot.slane %v236, 2
        %v4648 = vrot.slane %v237, 2
        %v4649 = vsel %vm4581, %v4647, %v4648
        %v4650 = vrot.slane %v238, 2
        %v4651 = vsel %vm4581, %v4648, %v4650
        %v4652 = vrot.slane %v241, 2
        %v4653 = vrot.slane %v242, 2
        %v4654 = vsel %vm4581, %v4652, %v4653
        %v4655 = vrot.slane %v243, 2
        %v4656 = vsel %vm4581, %v4653, %v4655
        %v4657 = vrot.slane %v246, 2
        %v4658 = vrot.slane %v247, 2
        %v4659 = vsel %vm4581, %v4657, %v4658
        %v4660 = vrot.slane %v248, 2
        %v4661 = vsel %vm4581, %v4658, %v4660
        %s4662 = scalar_lea.vmem %s1, 76
        %v4663 = vld [vmem:[%s4662] sm:$0xf]
        %v4664 = vsel %vm473, %v4584, 0
        %v4666 = vsel %vm473, %v4586, 0
        %v4668 = vsel %vm473, %v4589, 0
        %v4670 = vsel %vm473, %v4591, 0
        %v4672 = vsel %vm473, %v4594, 0
        %v4674 = vsel %vm473, %v4596, 0
        %v4676 = vsel %vm473, %v4599, 0
        %v4678 = vsel %vm473, %v4601, 0
        %v4680 = vsel %vm473, %v4604, 0
        %v4682 = vsel %vm473, %v4606, 0
        %v4684 = vsel %vm473, %v4609, 0
        %v4686 = vsel %vm473, %v4611, 0
        %v4688 = vsel %vm473, %v4614, 0
        %v4690 = vsel %vm473, %v4616, 0
        %v4692 = vsel %vm473, %v4619, 0
        %v4694 = vsel %vm473, %v4621, 0
        %v4696 = vsel %vm473, %v4624, 0
        %v4698 = vsel %vm473, %v4626, 0
        %v4700 = vsel %vm473, %v4629, 0
        %v4702 = vsel %vm473, %v4631, 0
        %v4704 = vsel %vm473, %v4634, 0
        %v4706 = vsel %vm473, %v4636, 0
        %v4708 = vsel %vm473, %v4639, 0
        %v4710 = vsel %vm473, %v4641, 0
        %v4712 = vsel %vm473, %v4644, 0
        %v4714 = vsel %vm473, %v4646, 0
        %v4716 = vsel %vm473, %v4649, 0
        %v4718 = vsel %vm473, %v4651, 0
        %v4720 = vsel %vm473, %v4654, 0
        %v4722 = vsel %vm473, %v4656, 0
        %v4724 = vsel %vm473, %v4659, 0
        %v4726 = vsel %vm473, %v4661, 0
        %v4729 = vsel %vm538, %v4663, 0
        %4731 = vmatpush.msra.mxu0 0.0
        %4732 = vmatpush.msra.mxu0 0.0
        %4733 = vmatpush.msra.mxu0 0.0
        %4734 = vmatpush.msra.mxu0 0.0
        %4735 = vmatpush.msra.mxu0 0.0
        %4736 = vmatpush.msra.mxu0 0.0
        %4737 = vmatpush.msra.mxu0 0.0
        %4738 = vmatpush.msra.mxu0 0.0
        %4739 = vmatpush.msra.mxu0 0.0
        %4740 = vmatpush.msra.mxu0 0.0
        %4741 = vmatpush.msra.mxu0 0.0
        %4742 = vmatpush.msra.mxu0 0.0
        %4743 = vmatpush.msra.mxu0 0.0
        %4744 = vmatpush.msra.mxu0 0.0
        %4745 = vmatpush.msra.mxu0 0.0
        %4746 = vmatpush.msra.mxu0 %v4729
        %4747 = vmatmul.f32.gmra.mxu0 %v4664
        %v4748 = vpop.f32.mrf.mxu0
        %v4749 = vadd.f32 0.0, %v4748
        %4750 = vmatmul.f32.gmra.mxu0 %v4666
        %v4751 = vpop.f32.mrf.mxu0
        %v4752 = vadd.f32 0.0, %v4751
        %4753 = vmatmul.f32.gmra.mxu0 %v4668
        %v4754 = vpop.f32.mrf.mxu0
        %v4755 = vadd.f32 0.0, %v4754
        %4756 = vmatmul.f32.gmra.mxu0 %v4670
        %v4757 = vpop.f32.mrf.mxu0
        %v4758 = vadd.f32 0.0, %v4757
        %4759 = vmatmul.f32.gmra.mxu0 %v4672
        %v4760 = vpop.f32.mrf.mxu0
        %v4761 = vadd.f32 0.0, %v4760
        %4762 = vmatmul.f32.gmra.mxu0 %v4674
        %v4763 = vpop.f32.mrf.mxu0
        %v4764 = vadd.f32 0.0, %v4763
        %4765 = vmatmul.f32.gmra.mxu0 %v4676
        %v4766 = vpop.f32.mrf.mxu0
        %v4767 = vadd.f32 0.0, %v4766
        %4768 = vmatmul.f32.gmra.mxu0 %v4678
        %v4769 = vpop.f32.mrf.mxu0
        %v4770 = vadd.f32 0.0, %v4769
        %4771 = vmatmul.f32.gmra.mxu0 %v4680
        %v4772 = vpop.f32.mrf.mxu0
        %v4773 = vadd.f32 0.0, %v4772
        %4774 = vmatmul.f32.gmra.mxu0 %v4682
        %v4775 = vpop.f32.mrf.mxu0
        %v4776 = vadd.f32 0.0, %v4775
        %4777 = vmatmul.f32.gmra.mxu0 %v4684
        %v4778 = vpop.f32.mrf.mxu0
        %v4779 = vadd.f32 0.0, %v4778
        %4780 = vmatmul.f32.gmra.mxu0 %v4686
        %v4781 = vpop.f32.mrf.mxu0
        %v4782 = vadd.f32 0.0, %v4781
        %4783 = vmatmul.f32.gmra.mxu0 %v4688
        %v4784 = vpop.f32.mrf.mxu0
        %v4785 = vadd.f32 0.0, %v4784
        %4786 = vmatmul.f32.gmra.mxu0 %v4690
        %v4787 = vpop.f32.mrf.mxu0
        %v4788 = vadd.f32 0.0, %v4787
        %4789 = vmatmul.f32.gmra.mxu0 %v4692
        %v4790 = vpop.f32.mrf.mxu0
        %v4791 = vadd.f32 0.0, %v4790
        %4792 = vmatmul.f32.gmra.mxu0 %v4694
        %v4793 = vpop.f32.mrf.mxu0
        %v4794 = vadd.f32 0.0, %v4793
        %4795 = vmatmul.f32.gmra.mxu0 %v4696
        %v4796 = vpop.f32.mrf.mxu0
        %v4797 = vadd.f32 0.0, %v4796
        %4798 = vmatmul.f32.gmra.mxu0 %v4698
        %v4799 = vpop.f32.mrf.mxu0
        %v4800 = vadd.f32 0.0, %v4799
        %4801 = vmatmul.f32.gmra.mxu0 %v4700
        %v4802 = vpop.f32.mrf.mxu0
        %v4803 = vadd.f32 0.0, %v4802
        %4804 = vmatmul.f32.gmra.mxu0 %v4702
        %v4805 = vpop.f32.mrf.mxu0
        %v4806 = vadd.f32 0.0, %v4805
        %4807 = vmatmul.f32.gmra.mxu0 %v4704
        %v4808 = vpop.f32.mrf.mxu0
        %v4809 = vadd.f32 0.0, %v4808
        %4810 = vmatmul.f32.gmra.mxu0 %v4706
        %v4811 = vpop.f32.mrf.mxu0
        %v4812 = vadd.f32 0.0, %v4811
        %4813 = vmatmul.f32.gmra.mxu0 %v4708
        %v4814 = vpop.f32.mrf.mxu0
        %v4815 = vadd.f32 0.0, %v4814
        %4816 = vmatmul.f32.gmra.mxu0 %v4710
        %v4817 = vpop.f32.mrf.mxu0
        %v4818 = vadd.f32 0.0, %v4817
        %4819 = vmatmul.f32.gmra.mxu0 %v4712
        %v4820 = vpop.f32.mrf.mxu0
        %v4821 = vadd.f32 0.0, %v4820
        %4822 = vmatmul.f32.gmra.mxu0 %v4714
        %v4823 = vpop.f32.mrf.mxu0
        %v4824 = vadd.f32 0.0, %v4823
        %4825 = vmatmul.f32.gmra.mxu0 %v4716
        %v4826 = vpop.f32.mrf.mxu0
        %v4827 = vadd.f32 0.0, %v4826
        %4828 = vmatmul.f32.gmra.mxu0 %v4718
        %v4829 = vpop.f32.mrf.mxu0
        %v4830 = vadd.f32 0.0, %v4829
        %4831 = vmatmul.f32.gmra.mxu0 %v4720
        %v4832 = vpop.f32.mrf.mxu0
        %v4833 = vadd.f32 0.0, %v4832
        %4834 = vmatmul.f32.gmra.mxu0 %v4722
        %v4835 = vpop.f32.mrf.mxu0
        %v4836 = vadd.f32 0.0, %v4835
        %4837 = vmatmul.f32.gmra.mxu0 %v4724
        %v4838 = vpop.f32.mrf.mxu0
        %v4839 = vadd.f32 0.0, %v4838
        %4840 = vmatmul.f32.gmra.mxu0 %v4726
        %v4841 = vpop.f32.mrf.mxu0
        %v4842 = vadd.f32 0.0, %v4841
        %4843 = vdwg.mxu0
        %v4844 = vadd.f32 %v4533, %v4749
        %v4845 = vadd.f32 %v4534, %v4752
        %v4846 = vadd.f32 %v4535, %v4755
        %v4847 = vadd.f32 %v4536, %v4758
        %v4848 = vadd.f32 %v4537, %v4761
        %v4849 = vadd.f32 %v4538, %v4764
        %v4850 = vadd.f32 %v4539, %v4767
        %v4851 = vadd.f32 %v4540, %v4770
        %v4852 = vadd.f32 %v4541, %v4773
        %v4853 = vadd.f32 %v4542, %v4776
        %v4854 = vadd.f32 %v4543, %v4779
        %v4855 = vadd.f32 %v4544, %v4782
        %v4856 = vadd.f32 %v4545, %v4785
        %v4857 = vadd.f32 %v4546, %v4788
        %v4858 = vadd.f32 %v4547, %v4791
        %v4859 = vadd.f32 %v4548, %v4794
        %v4860 = vadd.f32 %v4549, %v4797
        %v4861 = vadd.f32 %v4550, %v4800
        %v4862 = vadd.f32 %v4551, %v4803
        %v4863 = vadd.f32 %v4552, %v4806
        %v4864 = vadd.f32 %v4553, %v4809
        %v4865 = vadd.f32 %v4554, %v4812
        %v4866 = vadd.f32 %v4555, %v4815
        %v4867 = vadd.f32 %v4556, %v4818
        %v4868 = vadd.f32 %v4557, %v4821
        %v4869 = vadd.f32 %v4558, %v4824
        %v4870 = vadd.f32 %v4559, %v4827
        %v4871 = vadd.f32 %v4560, %v4830
        %v4872 = vadd.f32 %v4561, %v4833
        %v4873 = vadd.f32 %v4562, %v4836
        %v4874 = vadd.f32 %v4563, %v4839
        %v4875 = vadd.f32 %v4564, %v4842
        %s4876 = scalar_lea.vmem %s1, 80
        %v4877 = vld [vmem:[%s4876] sm:$0xf]
        %v4878 = vsel %vm473, %v249, 0
        %v4880 = vsel %vm473, %v250, 0
        %v4882 = vsel %vm473, %v254, 0
        %v4884 = vsel %vm473, %v255, 0
        %v4886 = vsel %vm473, %v259, 0
        %v4888 = vsel %vm473, %v260, 0
        %v4890 = vsel %vm473, %v264, 0
        %v4892 = vsel %vm473, %v265, 0
        %v4894 = vsel %vm473, %v269, 0
        %v4896 = vsel %vm473, %v270, 0
        %v4898 = vsel %vm473, %v274, 0
        %v4900 = vsel %vm473, %v275, 0
        %v4902 = vsel %vm473, %v279, 0
        %v4904 = vsel %vm473, %v280, 0
        %v4906 = vsel %vm473, %v284, 0
        %v4908 = vsel %vm473, %v285, 0
        %v4910 = vsel %vm473, %v289, 0
        %v4912 = vsel %vm473, %v290, 0
        %v4915 = vsel %vm538, %v4877, 0
        %4917 = vmatpush.msra.mxu0 0.0
        %4918 = vmatpush.msra.mxu0 0.0
        %4919 = vmatpush.msra.mxu0 0.0
        %4920 = vmatpush.msra.mxu0 0.0
        %4921 = vmatpush.msra.mxu0 0.0
        %4922 = vmatpush.msra.mxu0 0.0
        %4923 = vmatpush.msra.mxu0 0.0
        %4924 = vmatpush.msra.mxu0 0.0
        %4925 = vmatpush.msra.mxu0 0.0
        %4926 = vmatpush.msra.mxu0 0.0
        %4927 = vmatpush.msra.mxu0 0.0
        %4928 = vmatpush.msra.mxu0 0.0
        %4929 = vmatpush.msra.mxu0 0.0
        %4930 = vmatpush.msra.mxu0 0.0
        %4931 = vmatpush.msra.mxu0 0.0
        %4932 = vmatpush.msra.mxu0 %v4915
        %4933 = vmatmul.f32.gmra.mxu0 %v4206
        %v4934 = vpop.f32.mrf.mxu0
        %v4935 = vadd.f32 0.0, %v4934
        %4936 = vmatmul.f32.gmra.mxu0 %v4208
        %v4937 = vpop.f32.mrf.mxu0
        %v4938 = vadd.f32 0.0, %v4937
        %4939 = vmatmul.f32.gmra.mxu0 %v4210
        %v4940 = vpop.f32.mrf.mxu0
        %v4941 = vadd.f32 0.0, %v4940
        %4942 = vmatmul.f32.gmra.mxu0 %v4212
        %v4943 = vpop.f32.mrf.mxu0
        %v4944 = vadd.f32 0.0, %v4943
        %4945 = vmatmul.f32.gmra.mxu0 %v4214
        %v4946 = vpop.f32.mrf.mxu0
        %v4947 = vadd.f32 0.0, %v4946
        %4948 = vmatmul.f32.gmra.mxu0 %v4216
        %v4949 = vpop.f32.mrf.mxu0
        %v4950 = vadd.f32 0.0, %v4949
        %4951 = vmatmul.f32.gmra.mxu0 %v4218
        %v4952 = vpop.f32.mrf.mxu0
        %v4953 = vadd.f32 0.0, %v4952
        %4954 = vmatmul.f32.gmra.mxu0 %v4220
        %v4955 = vpop.f32.mrf.mxu0
        %v4956 = vadd.f32 0.0, %v4955
        %4957 = vmatmul.f32.gmra.mxu0 %v4222
        %v4958 = vpop.f32.mrf.mxu0
        %v4959 = vadd.f32 0.0, %v4958
        %4960 = vmatmul.f32.gmra.mxu0 %v4224
        %v4961 = vpop.f32.mrf.mxu0
        %v4962 = vadd.f32 0.0, %v4961
        %4963 = vmatmul.f32.gmra.mxu0 %v4226
        %v4964 = vpop.f32.mrf.mxu0
        %v4965 = vadd.f32 0.0, %v4964
        %4966 = vmatmul.f32.gmra.mxu0 %v4228
        %v4967 = vpop.f32.mrf.mxu0
        %v4968 = vadd.f32 0.0, %v4967
        %4969 = vmatmul.f32.gmra.mxu0 %v4230
        %v4970 = vpop.f32.mrf.mxu0
        %v4971 = vadd.f32 0.0, %v4970
        %4972 = vmatmul.f32.gmra.mxu0 %v4232
        %v4973 = vpop.f32.mrf.mxu0
        %v4974 = vadd.f32 0.0, %v4973
        %4975 = vmatmul.f32.gmra.mxu0 %v4878
        %v4976 = vpop.f32.mrf.mxu0
        %v4977 = vadd.f32 0.0, %v4976
        %4978 = vmatmul.f32.gmra.mxu0 %v4880
        %v4979 = vpop.f32.mrf.mxu0
        %v4980 = vadd.f32 0.0, %v4979
        %4981 = vmatmul.f32.gmra.mxu0 %v4882
        %v4982 = vpop.f32.mrf.mxu0
        %v4983 = vadd.f32 0.0, %v4982
        %4984 = vmatmul.f32.gmra.mxu0 %v4884
        %v4985 = vpop.f32.mrf.mxu0
        %v4986 = vadd.f32 0.0, %v4985
        %4987 = vmatmul.f32.gmra.mxu0 %v4886
        %v4988 = vpop.f32.mrf.mxu0
        %v4989 = vadd.f32 0.0, %v4988
        %4990 = vmatmul.f32.gmra.mxu0 %v4888
        %v4991 = vpop.f32.mrf.mxu0
        %v4992 = vadd.f32 0.0, %v4991
        %4993 = vmatmul.f32.gmra.mxu0 %v4890
        %v4994 = vpop.f32.mrf.mxu0
        %v4995 = vadd.f32 0.0, %v4994
        %4996 = vmatmul.f32.gmra.mxu0 %v4892
        %v4997 = vpop.f32.mrf.mxu0
        %v4998 = vadd.f32 0.0, %v4997
        %4999 = vmatmul.f32.gmra.mxu0 %v4894
        %v5000 = vpop.f32.mrf.mxu0
        %v5001 = vadd.f32 0.0, %v5000
        %5002 = vmatmul.f32.gmra.mxu0 %v4896
        %v5003 = vpop.f32.mrf.mxu0
        %v5004 = vadd.f32 0.0, %v5003
        %5005 = vmatmul.f32.gmra.mxu0 %v4898
        %v5006 = vpop.f32.mrf.mxu0
        %v5007 = vadd.f32 0.0, %v5006
        %5008 = vmatmul.f32.gmra.mxu0 %v4900
        %v5009 = vpop.f32.mrf.mxu0
        %v5010 = vadd.f32 0.0, %v5009
        %5011 = vmatmul.f32.gmra.mxu0 %v4902
        %v5012 = vpop.f32.mrf.mxu0
        %v5013 = vadd.f32 0.0, %v5012
        %5014 = vmatmul.f32.gmra.mxu0 %v4904
        %v5015 = vpop.f32.mrf.mxu0
        %v5016 = vadd.f32 0.0, %v5015
        %5017 = vmatmul.f32.gmra.mxu0 %v4906
        %v5018 = vpop.f32.mrf.mxu0
        %v5019 = vadd.f32 0.0, %v5018
        %5020 = vmatmul.f32.gmra.mxu0 %v4908
        %v5021 = vpop.f32.mrf.mxu0
        %v5022 = vadd.f32 0.0, %v5021
        %5023 = vmatmul.f32.gmra.mxu0 %v4910
        %v5024 = vpop.f32.mrf.mxu0
        %v5025 = vadd.f32 0.0, %v5024
        %5026 = vmatmul.f32.gmra.mxu0 %v4912
        %v5027 = vpop.f32.mrf.mxu0
        %v5028 = vadd.f32 0.0, %v5027
        %5029 = vdwg.mxu0
        %v5030 = vadd.f32 %v4844, %v4935
        %v5031 = vadd.f32 %v4845, %v4938
        %v5032 = vadd.f32 %v4846, %v4941
        %v5033 = vadd.f32 %v4847, %v4944
        %v5034 = vadd.f32 %v4848, %v4947
        %v5035 = vadd.f32 %v4849, %v4950
        %v5036 = vadd.f32 %v4850, %v4953
        %v5037 = vadd.f32 %v4851, %v4956
        %v5038 = vadd.f32 %v4852, %v4959
        %v5039 = vadd.f32 %v4853, %v4962
        %v5040 = vadd.f32 %v4854, %v4965
        %v5041 = vadd.f32 %v4855, %v4968
        %v5042 = vadd.f32 %v4856, %v4971
        %v5043 = vadd.f32 %v4857, %v4974
        %v5044 = vadd.f32 %v4858, %v4977
        %v5045 = vadd.f32 %v4859, %v4980
        %v5046 = vadd.f32 %v4860, %v4983
        %v5047 = vadd.f32 %v4861, %v4986
        %v5048 = vadd.f32 %v4862, %v4989
        %v5049 = vadd.f32 %v4863, %v4992
        %v5050 = vadd.f32 %v4864, %v4995
        %v5051 = vadd.f32 %v4865, %v4998
        %v5052 = vadd.f32 %v4866, %v5001
        %v5053 = vadd.f32 %v4867, %v5004
        %v5054 = vadd.f32 %v4868, %v5007
        %v5055 = vadd.f32 %v4869, %v5010
        %v5056 = vadd.f32 %v4870, %v5013
        %v5057 = vadd.f32 %v4871, %v5016
        %v5058 = vadd.f32 %v4872, %v5019
        %v5059 = vadd.f32 %v4873, %v5022
        %v5060 = vadd.f32 %v4874, %v5025
        %v5061 = vadd.f32 %v4875, %v5028
        %v5071 = vrot.slane %v251, 2
        %v5072 = vrot.slane %v252, 2
        %v5073 = vsel %vm4581, %v5071, %v5072
        %v5074 = vrot.slane %v253, 2
        %v5075 = vsel %vm4581, %v5072, %v5074
        %v5076 = vrot.slane %v256, 2
        %v5077 = vrot.slane %v257, 2
        %v5078 = vsel %vm4581, %v5076, %v5077
        %v5079 = vrot.slane %v258, 2
        %v5080 = vsel %vm4581, %v5077, %v5079
        %v5081 = vrot.slane %v261, 2
        %v5082 = vrot.slane %v262, 2
        %v5083 = vsel %vm4581, %v5081, %v5082
        %v5084 = vrot.slane %v263, 2
        %v5085 = vsel %vm4581, %v5082, %v5084
        %v5086 = vrot.slane %v266, 2
        %v5087 = vrot.slane %v267, 2
        %v5088 = vsel %vm4581, %v5086, %v5087
        %v5089 = vrot.slane %v268, 2
        %v5090 = vsel %vm4581, %v5087, %v5089
        %v5091 = vrot.slane %v271, 2
        %v5092 = vrot.slane %v272, 2
        %v5093 = vsel %vm4581, %v5091, %v5092
        %v5094 = vrot.slane %v273, 2
        %v5095 = vsel %vm4581, %v5092, %v5094
        %v5096 = vrot.slane %v276, 2
        %v5097 = vrot.slane %v277, 2
        %v5098 = vsel %vm4581, %v5096, %v5097
        %v5099 = vrot.slane %v278, 2
        %v5100 = vsel %vm4581, %v5097, %v5099
        %v5101 = vrot.slane %v281, 2
        %v5102 = vrot.slane %v282, 2
        %v5103 = vsel %vm4581, %v5101, %v5102
        %v5104 = vrot.slane %v283, 2
        %v5105 = vsel %vm4581, %v5102, %v5104
        %v5106 = vrot.slane %v286, 2
        %v5107 = vrot.slane %v287, 2
        %v5108 = vsel %vm4581, %v5106, %v5107
        %v5109 = vrot.slane %v288, 2
        %v5110 = vsel %vm4581, %v5107, %v5109
        %v5111 = vrot.slane %v291, 2
        %v5112 = vrot.slane %v292, 2
        %v5113 = vsel %vm4581, %v5111, %v5112
        %v5114 = vrot.slane %v293, 2
        %v5115 = vsel %vm4581, %v5112, %v5114
        %s5116 = scalar_lea.vmem %s1, 84
        %v5117 = vld [vmem:[%s5116] sm:$0xf]
        %v5118 = vsel %vm473, %v5073, 0
        %v5120 = vsel %vm473, %v5075, 0
        %v5122 = vsel %vm473, %v5078, 0
        %v5124 = vsel %vm473, %v5080, 0
        %v5126 = vsel %vm473, %v5083, 0
        %v5128 = vsel %vm473, %v5085, 0
        %v5130 = vsel %vm473, %v5088, 0
        %v5132 = vsel %vm473, %v5090, 0
        %v5134 = vsel %vm473, %v5093, 0
        %v5136 = vsel %vm473, %v5095, 0
        %v5138 = vsel %vm473, %v5098, 0
        %v5140 = vsel %vm473, %v5100, 0
        %v5142 = vsel %vm473, %v5103, 0
        %v5144 = vsel %vm473, %v5105, 0
        %v5146 = vsel %vm473, %v5108, 0
        %v5148 = vsel %vm473, %v5110, 0
        %v5150 = vsel %vm473, %v5113, 0
        %v5152 = vsel %vm473, %v5115, 0
        %v5155 = vsel %vm538, %v5117, 0
        %5157 = vmatpush.msra.mxu0 0.0
        %5158 = vmatpush.msra.mxu0 0.0
        %5159 = vmatpush.msra.mxu0 0.0
        %5160 = vmatpush.msra.mxu0 0.0
        %5161 = vmatpush.msra.mxu0 0.0
        %5162 = vmatpush.msra.mxu0 0.0
        %5163 = vmatpush.msra.mxu0 0.0
        %5164 = vmatpush.msra.mxu0 0.0
        %5165 = vmatpush.msra.mxu0 0.0
        %5166 = vmatpush.msra.mxu0 0.0
        %5167 = vmatpush.msra.mxu0 0.0
        %5168 = vmatpush.msra.mxu0 0.0
        %5169 = vmatpush.msra.mxu0 0.0
        %5170 = vmatpush.msra.mxu0 0.0
        %5171 = vmatpush.msra.mxu0 0.0
        %5172 = vmatpush.msra.mxu0 %v5155
        %5173 = vmatmul.f32.gmra.mxu0 %v4700
        %v5174 = vpop.f32.mrf.mxu0
        %v5175 = vadd.f32 0.0, %v5174
        %5176 = vmatmul.f32.gmra.mxu0 %v4702
        %v5177 = vpop.f32.mrf.mxu0
        %v5178 = vadd.f32 0.0, %v5177
        %5179 = vmatmul.f32.gmra.mxu0 %v4704
        %v5180 = vpop.f32.mrf.mxu0
        %v5181 = vadd.f32 0.0, %v5180
        %5182 = vmatmul.f32.gmra.mxu0 %v4706
        %v5183 = vpop.f32.mrf.mxu0
        %v5184 = vadd.f32 0.0, %v5183
        %5185 = vmatmul.f32.gmra.mxu0 %v4708
        %v5186 = vpop.f32.mrf.mxu0
        %v5187 = vadd.f32 0.0, %v5186
        %5188 = vmatmul.f32.gmra.mxu0 %v4710
        %v5189 = vpop.f32.mrf.mxu0
        %v5190 = vadd.f32 0.0, %v5189
        %5191 = vmatmul.f32.gmra.mxu0 %v4712
        %v5192 = vpop.f32.mrf.mxu0
        %v5193 = vadd.f32 0.0, %v5192
        %5194 = vmatmul.f32.gmra.mxu0 %v4714
        %v5195 = vpop.f32.mrf.mxu0
        %v5196 = vadd.f32 0.0, %v5195
        %5197 = vmatmul.f32.gmra.mxu0 %v4716
        %v5198 = vpop.f32.mrf.mxu0
        %v5199 = vadd.f32 0.0, %v5198
        %5200 = vmatmul.f32.gmra.mxu0 %v4718
        %v5201 = vpop.f32.mrf.mxu0
        %v5202 = vadd.f32 0.0, %v5201
        %5203 = vmatmul.f32.gmra.mxu0 %v4720
        %v5204 = vpop.f32.mrf.mxu0
        %v5205 = vadd.f32 0.0, %v5204
        %5206 = vmatmul.f32.gmra.mxu0 %v4722
        %v5207 = vpop.f32.mrf.mxu0
        %v5208 = vadd.f32 0.0, %v5207
        %5209 = vmatmul.f32.gmra.mxu0 %v4724
        %v5210 = vpop.f32.mrf.mxu0
        %v5211 = vadd.f32 0.0, %v5210
        %5212 = vmatmul.f32.gmra.mxu0 %v4726
        %v5213 = vpop.f32.mrf.mxu0
        %v5214 = vadd.f32 0.0, %v5213
        %5215 = vmatmul.f32.gmra.mxu0 %v5118
        %v5216 = vpop.f32.mrf.mxu0
        %v5217 = vadd.f32 0.0, %v5216
        %5218 = vmatmul.f32.gmra.mxu0 %v5120
        %v5219 = vpop.f32.mrf.mxu0
        %v5220 = vadd.f32 0.0, %v5219
        %5221 = vmatmul.f32.gmra.mxu0 %v5122
        %v5222 = vpop.f32.mrf.mxu0
        %v5223 = vadd.f32 0.0, %v5222
        %5224 = vmatmul.f32.gmra.mxu0 %v5124
        %v5225 = vpop.f32.mrf.mxu0
        %v5226 = vadd.f32 0.0, %v5225
        %5227 = vmatmul.f32.gmra.mxu0 %v5126
        %v5228 = vpop.f32.mrf.mxu0
        %v5229 = vadd.f32 0.0, %v5228
        %5230 = vmatmul.f32.gmra.mxu0 %v5128
        %v5231 = vpop.f32.mrf.mxu0
        %v5232 = vadd.f32 0.0, %v5231
        %5233 = vmatmul.f32.gmra.mxu0 %v5130
        %v5234 = vpop.f32.mrf.mxu0
        %v5235 = vadd.f32 0.0, %v5234
        %5236 = vmatmul.f32.gmra.mxu0 %v5132
        %v5237 = vpop.f32.mrf.mxu0
        %v5238 = vadd.f32 0.0, %v5237
        %5239 = vmatmul.f32.gmra.mxu0 %v5134
        %v5240 = vpop.f32.mrf.mxu0
        %v5241 = vadd.f32 0.0, %v5240
        %5242 = vmatmul.f32.gmra.mxu0 %v5136
        %v5243 = vpop.f32.mrf.mxu0
        %v5244 = vadd.f32 0.0, %v5243
        %5245 = vmatmul.f32.gmra.mxu0 %v5138
        %v5246 = vpop.f32.mrf.mxu0
        %v5247 = vadd.f32 0.0, %v5246
        %5248 = vmatmul.f32.gmra.mxu0 %v5140
        %v5249 = vpop.f32.mrf.mxu0
        %v5250 = vadd.f32 0.0, %v5249
        %5251 = vmatmul.f32.gmra.mxu0 %v5142
        %v5252 = vpop.f32.mrf.mxu0
        %v5253 = vadd.f32 0.0, %v5252
        %5254 = vmatmul.f32.gmra.mxu0 %v5144
        %v5255 = vpop.f32.mrf.mxu0
        %v5256 = vadd.f32 0.0, %v5255
        %5257 = vmatmul.f32.gmra.mxu0 %v5146
        %v5258 = vpop.f32.mrf.mxu0
        %v5259 = vadd.f32 0.0, %v5258
        %5260 = vmatmul.f32.gmra.mxu0 %v5148
        %v5261 = vpop.f32.mrf.mxu0
        %v5262 = vadd.f32 0.0, %v5261
        %5263 = vmatmul.f32.gmra.mxu0 %v5150
        %v5264 = vpop.f32.mrf.mxu0
        %v5265 = vadd.f32 0.0, %v5264
        %5266 = vmatmul.f32.gmra.mxu0 %v5152
        %v5267 = vpop.f32.mrf.mxu0
        %v5268 = vadd.f32 0.0, %v5267
        %5269 = vdwg.mxu0
        %v5270 = vadd.f32 %v5030, %v5175
        %v5271 = vadd.f32 %v5031, %v5178
        %v5272 = vadd.f32 %v5032, %v5181
        %v5273 = vadd.f32 %v5033, %v5184
        %v5274 = vadd.f32 %v5034, %v5187
        %v5275 = vadd.f32 %v5035, %v5190
        %v5276 = vadd.f32 %v5036, %v5193
        %v5277 = vadd.f32 %v5037, %v5196
        %v5278 = vadd.f32 %v5038, %v5199
        %v5279 = vadd.f32 %v5039, %v5202
        %v5280 = vadd.f32 %v5040, %v5205
        %v5281 = vadd.f32 %v5041, %v5208
        %v5282 = vadd.f32 %v5042, %v5211
        %v5283 = vadd.f32 %v5043, %v5214
        %v5284 = vadd.f32 %v5044, %v5217
        %v5285 = vadd.f32 %v5045, %v5220
        %v5286 = vadd.f32 %v5046, %v5223
        %v5287 = vadd.f32 %v5047, %v5226
        %v5288 = vadd.f32 %v5048, %v5229
        %v5289 = vadd.f32 %v5049, %v5232
        %v5290 = vadd.f32 %v5050, %v5235
        %v5291 = vadd.f32 %v5051, %v5238
        %v5292 = vadd.f32 %v5052, %v5241
        %v5293 = vadd.f32 %v5053, %v5244
        %v5294 = vadd.f32 %v5054, %v5247
        %v5295 = vadd.f32 %v5055, %v5250
        %v5296 = vadd.f32 %v5056, %v5253
        %v5297 = vadd.f32 %v5057, %v5256
        %v5298 = vadd.f32 %v5058, %v5259
        %v5299 = vadd.f32 %v5059, %v5262
        %v5300 = vadd.f32 %v5060, %v5265
        %v5301 = vadd.f32 %v5061, %v5268
        %s5302 = scalar_lea.vmem %s1, 88
        %v5303 = vld [vmem:[%s5302] sm:$0xf]
        %v5304 = vsel %vm473, %v294, 0
        %v5306 = vsel %vm473, %v295, 0
        %v5308 = vsel %vm473, %v299, 0
        %v5310 = vsel %vm473, %v300, 0
        %v5312 = vsel %vm473, %v304, 0
        %v5314 = vsel %vm473, %v305, 0
        %v5316 = vsel %vm473, %v309, 0
        %v5318 = vsel %vm473, %v310, 0
        %v5320 = vsel %vm473, %v314, 0
        %v5322 = vsel %vm473, %v315, 0
        %v5324 = vsel %vm473, %v319, 0
        %v5326 = vsel %vm473, %v320, 0
        %v5329 = vsel %vm473, %v324, 0
        %v5332 = vsel %vm473, %v325, 0
        %v5335 = vsel %vm473, %v329, 0
        %v5338 = vsel %vm473, %v330, 0
        %v5341 = vsel %vm473, %v334, 0
        %v5344 = vsel %vm473, %v335, 0
        %v5347 = vsel %vm538, %v5303, 0
        %5349 = vmatpush.msra.mxu0 0.0
        %5350 = vmatpush.msra.mxu0 0.0
        %5351 = vmatpush.msra.mxu0 0.0
        %5352 = vmatpush.msra.mxu0 0.0
        %5353 = vmatpush.msra.mxu0 0.0
        %5354 = vmatpush.msra.mxu0 0.0
        %5355 = vmatpush.msra.mxu0 0.0
        %5356 = vmatpush.msra.mxu0 0.0
        %5357 = vmatpush.msra.mxu0 0.0
        %5358 = vmatpush.msra.mxu0 0.0
        %5359 = vmatpush.msra.mxu0 0.0
        %5360 = vmatpush.msra.mxu0 0.0
        %5361 = vmatpush.msra.mxu0 0.0
        %5362 = vmatpush.msra.mxu0 0.0
        %5363 = vmatpush.msra.mxu0 0.0
        %5364 = vmatpush.msra.mxu0 %v5347
        %5365 = vmatmul.f32.gmra.mxu0 %v4886
        %v5366 = vpop.f32.mrf.mxu0
        %v5367 = vadd.f32 0.0, %v5366
        %5368 = vmatmul.f32.gmra.mxu0 %v4888
        %v5369 = vpop.f32.mrf.mxu0
        %v5370 = vadd.f32 0.0, %v5369
        %5371 = vmatmul.f32.gmra.mxu0 %v4890
        %v5372 = vpop.f32.mrf.mxu0
        %v5373 = vadd.f32 0.0, %v5372
        %5374 = vmatmul.f32.gmra.mxu0 %v4892
        %v5375 = vpop.f32.mrf.mxu0
        %v5376 = vadd.f32 0.0, %v5375
        %5377 = vmatmul.f32.gmra.mxu0 %v4894
        %v5378 = vpop.f32.mrf.mxu0
        %v5379 = vadd.f32 0.0, %v5378
        %5380 = vmatmul.f32.gmra.mxu0 %v4896
        %v5381 = vpop.f32.mrf.mxu0
        %v5382 = vadd.f32 0.0, %v5381
        %5383 = vmatmul.f32.gmra.mxu0 %v4898
        %v5384 = vpop.f32.mrf.mxu0
        %v5385 = vadd.f32 0.0, %v5384
        %5386 = vmatmul.f32.gmra.mxu0 %v4900
        %v5387 = vpop.f32.mrf.mxu0
        %v5388 = vadd.f32 0.0, %v5387
        %5389 = vmatmul.f32.gmra.mxu0 %v4902
        %v5390 = vpop.f32.mrf.mxu0
        %v5391 = vadd.f32 0.0, %v5390
        %5392 = vmatmul.f32.gmra.mxu0 %v4904
        %v5393 = vpop.f32.mrf.mxu0
        %v5394 = vadd.f32 0.0, %v5393
        %5395 = vmatmul.f32.gmra.mxu0 %v4906
        %v5396 = vpop.f32.mrf.mxu0
        %v5397 = vadd.f32 0.0, %v5396
        %5398 = vmatmul.f32.gmra.mxu0 %v4908
        %v5399 = vpop.f32.mrf.mxu0
        %v5400 = vadd.f32 0.0, %v5399
        %5401 = vmatmul.f32.gmra.mxu0 %v4910
        %v5402 = vpop.f32.mrf.mxu0
        %v5403 = vadd.f32 0.0, %v5402
        %5404 = vmatmul.f32.gmra.mxu0 %v4912
        %v5405 = vpop.f32.mrf.mxu0
        %v5406 = vadd.f32 0.0, %v5405
        %5407 = vmatmul.f32.gmra.mxu0 %v5304
        %v5408 = vpop.f32.mrf.mxu0
        %v5409 = vadd.f32 0.0, %v5408
        %5410 = vmatmul.f32.gmra.mxu0 %v5306
        %v5411 = vpop.f32.mrf.mxu0
        %v5412 = vadd.f32 0.0, %v5411
        %5413 = vmatmul.f32.gmra.mxu0 %v5308
        %v5414 = vpop.f32.mrf.mxu0
        %v5415 = vadd.f32 0.0, %v5414
        %5416 = vmatmul.f32.gmra.mxu0 %v5310
        %v5417 = vpop.f32.mrf.mxu0
        %v5418 = vadd.f32 0.0, %v5417
        %5419 = vmatmul.f32.gmra.mxu0 %v5312
        %v5420 = vpop.f32.mrf.mxu0
        %v5421 = vadd.f32 0.0, %v5420
        %5422 = vmatmul.f32.gmra.mxu0 %v5314
        %v5423 = vpop.f32.mrf.mxu0
        %v5424 = vadd.f32 0.0, %v5423
        %5425 = vmatmul.f32.gmra.mxu0 %v5316
        %v5426 = vpop.f32.mrf.mxu0
        %v5427 = vadd.f32 0.0, %v5426
        %5428 = vmatmul.f32.gmra.mxu0 %v5318
        %v5429 = vpop.f32.mrf.mxu0
        %v5430 = vadd.f32 0.0, %v5429
        %5431 = vmatmul.f32.gmra.mxu0 %v5320
        %v5432 = vpop.f32.mrf.mxu0
        %v5433 = vadd.f32 0.0, %v5432
        %5434 = vmatmul.f32.gmra.mxu0 %v5322
        %v5435 = vpop.f32.mrf.mxu0
        %v5436 = vadd.f32 0.0, %v5435
        %5437 = vmatmul.f32.gmra.mxu0 %v5324
        %v5438 = vpop.f32.mrf.mxu0
        %v5439 = vadd.f32 0.0, %v5438
        %5440 = vmatmul.f32.gmra.mxu0 %v5326
        %v5441 = vpop.f32.mrf.mxu0
        %v5442 = vadd.f32 0.0, %v5441
        %5443 = vmatmul.f32.gmra.mxu0 %v5329
        %v5444 = vpop.f32.mrf.mxu0
        %v5445 = vadd.f32 0.0, %v5444
        %5446 = vmatmul.f32.gmra.mxu0 %v5332
        %v5447 = vpop.f32.mrf.mxu0
        %v5448 = vadd.f32 0.0, %v5447
        %5449 = vmatmul.f32.gmra.mxu0 %v5335
        %v5450 = vpop.f32.mrf.mxu0
        %v5451 = vadd.f32 0.0, %v5450
        %5452 = vmatmul.f32.gmra.mxu0 %v5338
        %v5453 = vpop.f32.mrf.mxu0
        %v5454 = vadd.f32 0.0, %v5453
        %5455 = vmatmul.f32.gmra.mxu0 %v5341
        %v5456 = vpop.f32.mrf.mxu0
        %v5457 = vadd.f32 0.0, %v5456
        %5458 = vmatmul.f32.gmra.mxu0 %v5344
        %v5459 = vpop.f32.mrf.mxu0
        %v5460 = vadd.f32 0.0, %v5459
        %5461 = vdwg.mxu0
        %v5462 = vadd.f32 %v5270, %v5367
        %v5463 = vadd.f32 %v5271, %v5370
        %v5464 = vadd.f32 %v5272, %v5373
        %v5465 = vadd.f32 %v5273, %v5376
        %v5466 = vadd.f32 %v5274, %v5379
        %v5467 = vadd.f32 %v5275, %v5382
        %v5468 = vadd.f32 %v5276, %v5385
        %v5469 = vadd.f32 %v5277, %v5388
        %v5470 = vadd.f32 %v5278, %v5391
        %v5471 = vadd.f32 %v5279, %v5394
        %v5472 = vadd.f32 %v5280, %v5397
        %v5473 = vadd.f32 %v5281, %v5400
        %v5474 = vadd.f32 %v5282, %v5403
        %v5475 = vadd.f32 %v5283, %v5406
        %v5476 = vadd.f32 %v5284, %v5409
        %v5477 = vadd.f32 %v5285, %v5412
        %v5478 = vadd.f32 %v5286, %v5415
        %v5479 = vadd.f32 %v5287, %v5418
        %v5480 = vadd.f32 %v5288, %v5421
        %v5481 = vadd.f32 %v5289, %v5424
        %v5482 = vadd.f32 %v5290, %v5427
        %v5483 = vadd.f32 %v5291, %v5430
        %v5484 = vadd.f32 %v5292, %v5433
        %v5485 = vadd.f32 %v5293, %v5436
        %v5486 = vadd.f32 %v5294, %v5439
        %v5487 = vadd.f32 %v5295, %v5442
        %v5488 = vadd.f32 %v5296, %v5445
        %v5489 = vadd.f32 %v5297, %v5448
        %v5490 = vadd.f32 %v5298, %v5451
        %v5491 = vadd.f32 %v5299, %v5454
        %v5492 = vadd.f32 %v5300, %v5457
        %v5493 = vadd.f32 %v5301, %v5460
        %v5500 = vrot.slane %v325, 1
        %v5501 = vrot.slane %v326, 1
        %v5502 = vsel %vm703, %v5500, %v5501
        %v5503 = vrot.slane %v327, 1
        %v5504 = vsel %vm703, %v5501, %v5503
        %v5505 = vrot.slane %v330, 1
        %v5506 = vrot.slane %v331, 1
        %v5507 = vsel %vm703, %v5505, %v5506
        %v5508 = vrot.slane %v332, 1
        %v5509 = vsel %vm703, %v5506, %v5508
        %v5510 = vrot.slane %v335, 1
        %v5511 = vrot.slane %v336, 1
        %v5512 = vsel %vm703, %v5510, %v5511
        %v5513 = vrot.slane %v337, 1
        %v5514 = vsel %vm703, %v5511, %v5513
        %s5515 = scalar_lea.vmem %s1, 92
        %v5516 = vld [vmem:[%s5515] sm:$0xf]
        %v5517 = vsel %vm473, %v5502, 0
        %v5519 = vsel %vm473, %v5504, 0
        %v5521 = vsel %vm473, %v5507, 0
        %v5523 = vsel %vm473, %v5509, 0
        %v5525 = vsel %vm473, %v5512, 0
        %v5527 = vsel %vm473, %v5514, 0
        %v5530 = vsel %vm538, %v5516, 0
        %5532 = vmatpush.msra.mxu0 0.0
        %5533 = vmatpush.msra.mxu0 0.0
        %5534 = vmatpush.msra.mxu0 0.0
        %5535 = vmatpush.msra.mxu0 0.0
        %5536 = vmatpush.msra.mxu0 0.0
        %5537 = vmatpush.msra.mxu0 0.0
        %5538 = vmatpush.msra.mxu0 0.0
        %5539 = vmatpush.msra.mxu0 0.0
        %5540 = vmatpush.msra.mxu0 0.0
        %5541 = vmatpush.msra.mxu0 0.0
        %5542 = vmatpush.msra.mxu0 0.0
        %5543 = vmatpush.msra.mxu0 0.0
        %5544 = vmatpush.msra.mxu0 0.0
        %5545 = vmatpush.msra.mxu0 0.0
        %5546 = vmatpush.msra.mxu0 0.0
        %5547 = vmatpush.msra.mxu0 %v5530
        %5548 = vmatmul.f32.gmra.mxu0 %v834
        %v5549 = vpop.f32.mrf.mxu0
        %v5550 = vadd.f32 0.0, %v5549
        %5551 = vmatmul.f32.gmra.mxu0 %v836
        %v5552 = vpop.f32.mrf.mxu0
        %v5553 = vadd.f32 0.0, %v5552
        %5554 = vmatmul.f32.gmra.mxu0 %v838
        %v5555 = vpop.f32.mrf.mxu0
        %v5556 = vadd.f32 0.0, %v5555
        %5557 = vmatmul.f32.gmra.mxu0 %v840
        %v5558 = vpop.f32.mrf.mxu0
        %v5559 = vadd.f32 0.0, %v5558
        %5560 = vmatmul.f32.gmra.mxu0 %v842
        %v5561 = vpop.f32.mrf.mxu0
        %v5562 = vadd.f32 0.0, %v5561
        %5563 = vmatmul.f32.gmra.mxu0 %v844
        %v5564 = vpop.f32.mrf.mxu0
        %v5565 = vadd.f32 0.0, %v5564
        %5566 = vmatmul.f32.gmra.mxu0 %v846
        %v5567 = vpop.f32.mrf.mxu0
        %v5568 = vadd.f32 0.0, %v5567
        %5569 = vmatmul.f32.gmra.mxu0 %v848
        %v5570 = vpop.f32.mrf.mxu0
        %v5571 = vadd.f32 0.0, %v5570
        %5572 = vmatmul.f32.gmra.mxu0 %v1498
        %v5573 = vpop.f32.mrf.mxu0
        %v5574 = vadd.f32 0.0, %v5573
        %5575 = vmatmul.f32.gmra.mxu0 %v1500
        %v5576 = vpop.f32.mrf.mxu0
        %v5577 = vadd.f32 0.0, %v5576
        %5578 = vmatmul.f32.gmra.mxu0 %v1502
        %v5579 = vpop.f32.mrf.mxu0
        %v5580 = vadd.f32 0.0, %v5579
        %5581 = vmatmul.f32.gmra.mxu0 %v1504
        %v5582 = vpop.f32.mrf.mxu0
        %v5583 = vadd.f32 0.0, %v5582
        %5584 = vmatmul.f32.gmra.mxu0 %v1506
        %v5585 = vpop.f32.mrf.mxu0
        %v5586 = vadd.f32 0.0, %v5585
        %5587 = vmatmul.f32.gmra.mxu0 %v1508
        %v5588 = vpop.f32.mrf.mxu0
        %v5589 = vadd.f32 0.0, %v5588
        %5590 = vmatmul.f32.gmra.mxu0 %v2041
        %v5591 = vpop.f32.mrf.mxu0
        %v5592 = vadd.f32 0.0, %v5591
        %5593 = vmatmul.f32.gmra.mxu0 %v2043
        %v5594 = vpop.f32.mrf.mxu0
        %v5595 = vadd.f32 0.0, %v5594
        %5596 = vmatmul.f32.gmra.mxu0 %v2045
        %v5597 = vpop.f32.mrf.mxu0
        %v5598 = vadd.f32 0.0, %v5597
        %5599 = vmatmul.f32.gmra.mxu0 %v2047
        %v5600 = vpop.f32.mrf.mxu0
        %v5601 = vadd.f32 0.0, %v5600
        %5602 = vmatmul.f32.gmra.mxu0 %v2049
        %v5603 = vpop.f32.mrf.mxu0
        %v5604 = vadd.f32 0.0, %v5603
        %5605 = vmatmul.f32.gmra.mxu0 %v2051
        %v5606 = vpop.f32.mrf.mxu0
        %v5607 = vadd.f32 0.0, %v5606
        %5608 = vmatmul.f32.gmra.mxu0 %v3798
        %v5609 = vpop.f32.mrf.mxu0
        %v5610 = vadd.f32 0.0, %v5609
        %5611 = vmatmul.f32.gmra.mxu0 %v3800
        %v5612 = vpop.f32.mrf.mxu0
        %v5613 = vadd.f32 0.0, %v5612
        %5614 = vmatmul.f32.gmra.mxu0 %v3802
        %v5615 = vpop.f32.mrf.mxu0
        %v5616 = vadd.f32 0.0, %v5615
        %5617 = vmatmul.f32.gmra.mxu0 %v3804
        %v5618 = vpop.f32.mrf.mxu0
        %v5619 = vadd.f32 0.0, %v5618
        %5620 = vmatmul.f32.gmra.mxu0 %v3806
        %v5621 = vpop.f32.mrf.mxu0
        %v5622 = vadd.f32 0.0, %v5621
        %5623 = vmatmul.f32.gmra.mxu0 %v3808
        %v5624 = vpop.f32.mrf.mxu0
        %v5625 = vadd.f32 0.0, %v5624
        %5626 = vmatmul.f32.gmra.mxu0 %v5517
        %v5627 = vpop.f32.mrf.mxu0
        %v5628 = vadd.f32 0.0, %v5627
        %5629 = vmatmul.f32.gmra.mxu0 %v5519
        %v5630 = vpop.f32.mrf.mxu0
        %v5631 = vadd.f32 0.0, %v5630
        %5632 = vmatmul.f32.gmra.mxu0 %v5521
        %v5633 = vpop.f32.mrf.mxu0
        %v5634 = vadd.f32 0.0, %v5633
        %5635 = vmatmul.f32.gmra.mxu0 %v5523
        %v5636 = vpop.f32.mrf.mxu0
        %v5637 = vadd.f32 0.0, %v5636
        %5638 = vmatmul.f32.gmra.mxu0 %v5525
        %v5639 = vpop.f32.mrf.mxu0
        %v5640 = vadd.f32 0.0, %v5639
        %5641 = vmatmul.f32.gmra.mxu0 %v5527
        %v5642 = vpop.f32.mrf.mxu0
        %v5643 = vadd.f32 0.0, %v5642
        %5644 = vdwg.mxu0
        %v5645 = vadd.f32 %v5462, %v5550
        %v5646 = vadd.f32 %v5463, %v5553
        %v5647 = vadd.f32 %v5464, %v5556
        %v5648 = vadd.f32 %v5465, %v5559
        %v5649 = vadd.f32 %v5466, %v5562
        %v5650 = vadd.f32 %v5467, %v5565
        %v5651 = vadd.f32 %v5468, %v5568
        %v5652 = vadd.f32 %v5469, %v5571
        %v5653 = vadd.f32 %v5470, %v5574
        %v5654 = vadd.f32 %v5471, %v5577
        %v5655 = vadd.f32 %v5472, %v5580
        %v5656 = vadd.f32 %v5473, %v5583
        %v5657 = vadd.f32 %v5474, %v5586
        %v5658 = vadd.f32 %v5475, %v5589
        %v5659 = vadd.f32 %v5476, %v5592
        %v5660 = vadd.f32 %v5477, %v5595
        %v5661 = vadd.f32 %v5478, %v5598
        %v5662 = vadd.f32 %v5479, %v5601
        %v5663 = vadd.f32 %v5480, %v5604
        %v5664 = vadd.f32 %v5481, %v5607
        %v5665 = vadd.f32 %v5482, %v5610
        %v5666 = vadd.f32 %v5483, %v5613
        %v5667 = vadd.f32 %v5484, %v5616
        %v5668 = vadd.f32 %v5485, %v5619
        %v5669 = vadd.f32 %v5486, %v5622
        %v5670 = vadd.f32 %v5487, %v5625
        %v5671 = vadd.f32 %v5488, %v5628
        %v5672 = vadd.f32 %v5489, %v5631
        %v5673 = vadd.f32 %v5490, %v5634
        %v5674 = vadd.f32 %v5491, %v5637
        %v5675 = vadd.f32 %v5492, %v5640
        %v5676 = vadd.f32 %v5493, %v5643
        %v5686 = vrot.slane %v296, 2
        %v5687 = vrot.slane %v297, 2
        %v5688 = vsel %vm4581, %v5686, %v5687
        %v5689 = vrot.slane %v298, 2
        %v5690 = vsel %vm4581, %v5687, %v5689
        %v5691 = vrot.slane %v301, 2
        %v5692 = vrot.slane %v302, 2
        %v5693 = vsel %vm4581, %v5691, %v5692
        %v5694 = vrot.slane %v303, 2
        %v5695 = vsel %vm4581, %v5692, %v5694
        %v5696 = vrot.slane %v306, 2
        %v5697 = vrot.slane %v307, 2
        %v5698 = vsel %vm4581, %v5696, %v5697
        %v5699 = vrot.slane %v308, 2
        %v5700 = vsel %vm4581, %v5697, %v5699
        %v5701 = vrot.slane %v311, 2
        %v5702 = vrot.slane %v312, 2
        %v5703 = vsel %vm4581, %v5701, %v5702
        %v5704 = vrot.slane %v313, 2
        %v5705 = vsel %vm4581, %v5702, %v5704
        %v5706 = vrot.slane %v316, 2
        %v5707 = vrot.slane %v317, 2
        %v5708 = vsel %vm4581, %v5706, %v5707
        %v5709 = vrot.slane %v318, 2
        %v5710 = vsel %vm4581, %v5707, %v5709
        %v5711 = vrot.slane %v321, 2
        %v5712 = vrot.slane %v322, 2
        %v5713 = vsel %vm4581, %v5711, %v5712
        %v5714 = vrot.slane %v323, 2
        %v5715 = vsel %vm4581, %v5712, %v5714
        %v5716 = vrot.slane %v326, 2
        %v5717 = vrot.slane %v327, 2
        %v5718 = vsel %vm4581, %v5716, %v5717
        %v5719 = vrot.slane %v328, 2
        %v5720 = vsel %vm4581, %v5717, %v5719
        %v5721 = vrot.slane %v331, 2
        %v5722 = vrot.slane %v332, 2
        %v5723 = vsel %vm4581, %v5721, %v5722
        %v5724 = vrot.slane %v333, 2
        %v5725 = vsel %vm4581, %v5722, %v5724
        %v5726 = vrot.slane %v336, 2
        %v5727 = vrot.slane %v337, 2
        %v5728 = vsel %vm4581, %v5726, %v5727
        %v5729 = vrot.slane %v338, 2
        %v5730 = vsel %vm4581, %v5727, %v5729
        %s5731 = scalar_lea.vmem %s1, 96
        %v5732 = vld [vmem:[%s5731] sm:$0xf]
        %v5733 = vsel %vm473, %v5688, 0
        %v5735 = vsel %vm473, %v5690, 0
        %v5737 = vsel %vm473, %v5693, 0
        %v5739 = vsel %vm473, %v5695, 0
        %v5741 = vsel %vm473, %v5698, 0
        %v5743 = vsel %vm473, %v5700, 0
        %v5745 = vsel %vm473, %v5703, 0
        %v5747 = vsel %vm473, %v5705, 0
        %v5749 = vsel %vm473, %v5708, 0
        %v5751 = vsel %vm473, %v5710, 0
        %v5753 = vsel %vm473, %v5713, 0
        %v5755 = vsel %vm473, %v5715, 0
        %v5757 = vsel %vm473, %v5718, 0
        %v5759 = vsel %vm473, %v5720, 0
        %v5761 = vsel %vm473, %v5723, 0
        %v5763 = vsel %vm473, %v5725, 0
        %v5765 = vsel %vm473, %v5728, 0
        %v5767 = vsel %vm473, %v5730, 0
        %v5770 = vsel %vm538, %v5732, 0
        %5772 = vmatpush.msra.mxu0 0.0
        %5773 = vmatpush.msra.mxu0 0.0
        %5774 = vmatpush.msra.mxu0 0.0
        %5775 = vmatpush.msra.mxu0 0.0
        %5776 = vmatpush.msra.mxu0 0.0
        %5777 = vmatpush.msra.mxu0 0.0
        %5778 = vmatpush.msra.mxu0 0.0
        %5779 = vmatpush.msra.mxu0 0.0
        %5780 = vmatpush.msra.mxu0 0.0
        %5781 = vmatpush.msra.mxu0 0.0
        %5782 = vmatpush.msra.mxu0 0.0
        %5783 = vmatpush.msra.mxu0 0.0
        %5784 = vmatpush.msra.mxu0 0.0
        %5785 = vmatpush.msra.mxu0 0.0
        %5786 = vmatpush.msra.mxu0 0.0
        %5787 = vmatpush.msra.mxu0 %v5770
        %5788 = vmatmul.f32.gmra.mxu0 %v5126
        %v5789 = vpop.f32.mrf.mxu0
        %v5790 = vadd.f32 0.0, %v5789
        %5791 = vmatmul.f32.gmra.mxu0 %v5128
        %v5792 = vpop.f32.mrf.mxu0
        %v5793 = vadd.f32 0.0, %v5792
        %5794 = vmatmul.f32.gmra.mxu0 %v5130
        %v5795 = vpop.f32.mrf.mxu0
        %v5796 = vadd.f32 0.0, %v5795
        %5797 = vmatmul.f32.gmra.mxu0 %v5132
        %v5798 = vpop.f32.mrf.mxu0
        %v5799 = vadd.f32 0.0, %v5798
        %5800 = vmatmul.f32.gmra.mxu0 %v5134
        %v5801 = vpop.f32.mrf.mxu0
        %v5802 = vadd.f32 0.0, %v5801
        %5803 = vmatmul.f32.gmra.mxu0 %v5136
        %v5804 = vpop.f32.mrf.mxu0
        %v5805 = vadd.f32 0.0, %v5804
        %5806 = vmatmul.f32.gmra.mxu0 %v5138
        %v5807 = vpop.f32.mrf.mxu0
        %v5808 = vadd.f32 0.0, %v5807
        %5809 = vmatmul.f32.gmra.mxu0 %v5140
        %v5810 = vpop.f32.mrf.mxu0
        %v5811 = vadd.f32 0.0, %v5810
        %5812 = vmatmul.f32.gmra.mxu0 %v5142
        %v5813 = vpop.f32.mrf.mxu0
        %v5814 = vadd.f32 0.0, %v5813
        %5815 = vmatmul.f32.gmra.mxu0 %v5144
        %v5816 = vpop.f32.mrf.mxu0
        %v5817 = vadd.f32 0.0, %v5816
        %5818 = vmatmul.f32.gmra.mxu0 %v5146
        %v5819 = vpop.f32.mrf.mxu0
        %v5820 = vadd.f32 0.0, %v5819
        %5821 = vmatmul.f32.gmra.mxu0 %v5148
        %v5822 = vpop.f32.mrf.mxu0
        %v5823 = vadd.f32 0.0, %v5822
        %5824 = vmatmul.f32.gmra.mxu0 %v5150
        %v5825 = vpop.f32.mrf.mxu0
        %v5826 = vadd.f32 0.0, %v5825
        %5827 = vmatmul.f32.gmra.mxu0 %v5152
        %v5828 = vpop.f32.mrf.mxu0
        %v5829 = vadd.f32 0.0, %v5828
        %5830 = vmatmul.f32.gmra.mxu0 %v5733
        %v5831 = vpop.f32.mrf.mxu0
        %v5832 = vadd.f32 0.0, %v5831
        %5833 = vmatmul.f32.gmra.mxu0 %v5735
        %v5834 = vpop.f32.mrf.mxu0
        %v5835 = vadd.f32 0.0, %v5834
        %5836 = vmatmul.f32.gmra.mxu0 %v5737
        %v5837 = vpop.f32.mrf.mxu0
        %v5838 = vadd.f32 0.0, %v5837
        %5839 = vmatmul.f32.gmra.mxu0 %v5739
        %v5840 = vpop.f32.mrf.mxu0
        %v5841 = vadd.f32 0.0, %v5840
        %5842 = vmatmul.f32.gmra.mxu0 %v5741
        %v5843 = vpop.f32.mrf.mxu0
        %v5844 = vadd.f32 0.0, %v5843
        %5845 = vmatmul.f32.gmra.mxu0 %v5743
        %v5846 = vpop.f32.mrf.mxu0
        %v5847 = vadd.f32 0.0, %v5846
        %5848 = vmatmul.f32.gmra.mxu0 %v5745
        %v5849 = vpop.f32.mrf.mxu0
        %v5850 = vadd.f32 0.0, %v5849
        %5851 = vmatmul.f32.gmra.mxu0 %v5747
        %v5852 = vpop.f32.mrf.mxu0
        %v5853 = vadd.f32 0.0, %v5852
        %5854 = vmatmul.f32.gmra.mxu0 %v5749
        %v5855 = vpop.f32.mrf.mxu0
        %v5856 = vadd.f32 0.0, %v5855
        %5857 = vmatmul.f32.gmra.mxu0 %v5751
        %v5858 = vpop.f32.mrf.mxu0
        %v5859 = vadd.f32 0.0, %v5858
        %5860 = vmatmul.f32.gmra.mxu0 %v5753
        %v5861 = vpop.f32.mrf.mxu0
        %v5862 = vadd.f32 0.0, %v5861
        %5863 = vmatmul.f32.gmra.mxu0 %v5755
        %v5864 = vpop.f32.mrf.mxu0
        %v5865 = vadd.f32 0.0, %v5864
        %5866 = vmatmul.f32.gmra.mxu0 %v5757
        %v5867 = vpop.f32.mrf.mxu0
        %v5868 = vadd.f32 0.0, %v5867
        %5869 = vmatmul.f32.gmra.mxu0 %v5759
        %v5870 = vpop.f32.mrf.mxu0
        %v5871 = vadd.f32 0.0, %v5870
        %5872 = vmatmul.f32.gmra.mxu0 %v5761
        %v5873 = vpop.f32.mrf.mxu0
        %v5874 = vadd.f32 0.0, %v5873
        %5875 = vmatmul.f32.gmra.mxu0 %v5763
        %v5876 = vpop.f32.mrf.mxu0
        %v5877 = vadd.f32 0.0, %v5876
        %5878 = vmatmul.f32.gmra.mxu0 %v5765
        %v5879 = vpop.f32.mrf.mxu0
        %v5880 = vadd.f32 0.0, %v5879
        %5881 = vmatmul.f32.gmra.mxu0 %v5767
        %v5882 = vpop.f32.mrf.mxu0
        %v5883 = vadd.f32 0.0, %v5882
        %5884 = vdwg.mxu0
        %v5885 = vadd.f32 %v5645, %v5790
        %v5886 = vadd.f32 %v5646, %v5793
        %v5887 = vadd.f32 %v5647, %v5796
        %v5888 = vadd.f32 %v5648, %v5799
        %v5889 = vadd.f32 %v5649, %v5802
        %v5890 = vadd.f32 %v5650, %v5805
        %v5891 = vadd.f32 %v5651, %v5808
        %v5892 = vadd.f32 %v5652, %v5811
        %v5893 = vadd.f32 %v5653, %v5814
        %v5894 = vadd.f32 %v5654, %v5817
        %v5895 = vadd.f32 %v5655, %v5820
        %v5896 = vadd.f32 %v5656, %v5823
        %v5897 = vadd.f32 %v5657, %v5826
        %v5898 = vadd.f32 %v5658, %v5829
        %v5899 = vadd.f32 %v5659, %v5832
        %v5900 = vadd.f32 %v5660, %v5835
        %v5901 = vadd.f32 %v5661, %v5838
        %v5902 = vadd.f32 %v5662, %v5841
        %v5903 = vadd.f32 %v5663, %v5844
        %v5904 = vadd.f32 %v5664, %v5847
        %v5905 = vadd.f32 %v5665, %v5850
        %v5906 = vadd.f32 %v5666, %v5853
        %v5907 = vadd.f32 %v5667, %v5856
        %v5908 = vadd.f32 %v5668, %v5859
        %v5909 = vadd.f32 %v5669, %v5862
        %v5910 = vadd.f32 %v5670, %v5865
        %v5911 = vadd.f32 %v5671, %v5868
        %v5912 = vadd.f32 %v5672, %v5871
        %v5913 = vadd.f32 %v5673, %v5874
        %v5914 = vadd.f32 %v5674, %v5877
        %v5915 = vadd.f32 %v5675, %v5880
        %v5916 = vadd.f32 %v5676, %v5883
        %v5917 = vmax.f32 %v5885, 0.0
        %v5918 = vmax.f32 %v5886, 0.0
        %v5919 = vmax.f32 %v5887, 0.0
        %v5920 = vmax.f32 %v5888, 0.0
        %v5921 = vmax.f32 %v5889, 0.0
        %v5922 = vmax.f32 %v5890, 0.0
        %v5923 = vmax.f32 %v5891, 0.0
        %v5924 = vmax.f32 %v5892, 0.0
        %v5925 = vmax.f32 %v5893, 0.0
        %v5926 = vmax.f32 %v5894, 0.0
        %v5927 = vmax.f32 %v5895, 0.0
        %v5928 = vmax.f32 %v5896, 0.0
        %v5929 = vmax.f32 %v5897, 0.0
        %v5930 = vmax.f32 %v5898, 0.0
        %v5931 = vmax.f32 %v5899, 0.0
        %v5932 = vmax.f32 %v5900, 0.0
        %v5933 = vmax.f32 %v5901, 0.0
        %v5934 = vmax.f32 %v5902, 0.0
        %v5935 = vmax.f32 %v5903, 0.0
        %v5936 = vmax.f32 %v5904, 0.0
        %v5937 = vmax.f32 %v5905, 0.0
        %v5938 = vmax.f32 %v5906, 0.0
        %v5939 = vmax.f32 %v5907, 0.0
        %v5940 = vmax.f32 %v5908, 0.0
        %v5941 = vmax.f32 %v5909, 0.0
        %v5942 = vmax.f32 %v5910, 0.0
        %v5943 = vmax.f32 %v5911, 0.0
        %v5944 = vmax.f32 %v5912, 0.0
        %v5945 = vmax.f32 %v5913, 0.0
        %v5946 = vmax.f32 %v5914, 0.0
        %v5947 = vmax.f32 %v5915, 0.0
        %v5948 = vmax.f32 %v5916, 0.0
        %5949 = vst [vmem:[%s163] sm:$0xff] %v5917
        %5950 = vst [vmem:[%s163 + $0x8] sm:$0xff] %v5918
        %5951 = vst [vmem:[%s163 + $0x10] sm:$0xff] %v5919
        %5952 = vst [vmem:[%s163 + $0x18] sm:$0xff] %v5920
        %5953 = vst [vmem:[%s163 + $0x20] sm:$0xff] %v5921
        %5954 = vst [vmem:[%s163 + $0x28] sm:$0xff] %v5922
        %5955 = vst [vmem:[%s163 + $0x30] sm:$0xff] %v5923
        %5956 = vst [vmem:[%s163 + $0x38] sm:$0xff] %v5924
        %5957 = vst [vmem:[%s163 + $0x40] sm:$0xff] %v5925
        %5958 = vst [vmem:[%s163 + $0x48] sm:$0xff] %v5926
        %5959 = vst [vmem:[%s163 + $0x50] sm:$0xff] %v5927
        %5960 = vst [vmem:[%s163 + $0x58] sm:$0xff] %v5928
        %5961 = vst [vmem:[%s163 + $0x60] sm:$0xff] %v5929
        %5962 = vst [vmem:[%s163 + $0x68] sm:$0xff] %v5930
        %5963 = vst [vmem:[%s163 + $0x70] sm:$0xff] %v5931
        %5964 = vst [vmem:[%s163 + $0x78] sm:$0xff] %v5932
        %5965 = vst [vmem:[%s163 + $0x80] sm:$0xff] %v5933
        %5966 = vst [vmem:[%s163 + $0x88] sm:$0xff] %v5934
        %5967 = vst [vmem:[%s163 + $0x90] sm:$0xff] %v5935
        %5968 = vst [vmem:[%s163 + $0x98] sm:$0xff] %v5936
        %5969 = vst [vmem:[%s163 + $0xa0] sm:$0xff] %v5937
        %5970 = vst [vmem:[%s163 + $0xa8] sm:$0xff] %v5938
        %5971 = vst [vmem:[%s163 + $0xb0] sm:$0xff] %v5939
        %5972 = vst [vmem:[%s163 + $0xb8] sm:$0xff] %v5940
        %5973 = vst [vmem:[%s163 + $0xc0] sm:$0xff] %v5941
        %5974 = vst [vmem:[%s163 + $0xc8] sm:$0xff] %v5942
        %5975 = vst [vmem:[%s163 + $0xd0] sm:$0xff] %v5943
        %5976 = vst [vmem:[%s163 + $0xd8] sm:$0xff] %v5944
        %5977 = vst [vmem:[%s163 + $0xe0] sm:$0xff] %v5945
        %5978 = vst [vmem:[%s163 + $0xe8] sm:$0xff] %v5946
        %5979 = vst [vmem:[%s163 + $0xf0] sm:$0xff] %v5947
        %5980 = vst [vmem:[%s163 + $0xf8] sm:$0xff] %v5948
        %s5981 = sand.u32 %s93, 1
        %s5982 = scalar_lea.sflag [#allocation3], %s5981
        %s5983 = sand.u32 %s93, 1
        %s5984 = smul.addr %s5983, 256
        %s5985 = scalar_lea.vmem [#allocation2], %s5984
        // Predicated region
        $region33: #{tpu_custom_call.1} parent=31 // pred_check
          %p5986 = pneg %p103
        $region34: #{tpu_custom_call.1} parent=31 // pred_check_branch
          %5988 = sbr.rel (%p5986) target = $region36
        $region35: #{tpu_custom_call.1} parent=31 // pred_region
          %5990 = vsyncadd %s5982, 0
          %s5991 = smul.addr %s17, 32
          %s5992 = smul.addr %s5991, 8
          %s5993 = scalar_lea.hbm %s3, %s5992
          %s5994 = sshll.u32 %s5985, 4
          %s5995 = int_to_ptr.vmem [resolvable:$true] %s5994
          %s5996 = sshll.u32 %s5993, 4
          %s5997 = int_to_ptr.hbm [resolvable:$true] %s5996
          %6002 = dma.vmem_to_hbm [thread:$0]  %s5995, 4096, %s5997, %s5982, 128, 128, 8
        $region36: #{tpu_custom_call.1} parent=31 // pred_fallthru
          _
      $region32: #{tpu_custom_call.1} parent=5 // pred_fallthru
        _
      %p6003 = scmp.le.s32.totalorder 2, %s12
      // Predicated region
      $region37: #{tpu_custom_call.1} parent=5 // pred_check
        %p6004 = pneg %p6003
      $region38: #{tpu_custom_call.1} parent=5 // pred_check_branch
        %6006 = sbr.rel (%p6004) target = $region40
      $region39: #{tpu_custom_call.1} parent=5 // pred_region
        %s6007 = ssub.s32 %s12, 2
        // Predicated region
        $region41: #{tpu_custom_call.1} parent=39 // pred_check
          %p6008 = pneg %p109
        $region42: #{tpu_custom_call.1} parent=39 // pred_check_branch
          %6010 = sbr.rel (%p6008) target = $region44
        $region43: #{tpu_custom_call.1} parent=39 // pred_region
          %s6011 = sand.u32 %s94, 1
          %s6012 = scalar_lea.sflag [#allocation3], %s6011
          %s6013 = sand.u32 %s94, 1
          %s6014 = smul.addr %s6013, 256
          %s6015 = scalar_lea.vmem [#allocation2], %s6014
          %6017 = dma.done %s6012, 4096
        $region44: #{tpu_custom_call.1} parent=39 // pred_fallthru
          _
      $region40: #{tpu_custom_call.1} parent=5 // pred_fallthru
        _
    $region6: #{tpu_custom_call.1} parent=1 // loop_footer
      %s16 = sadd.s32 1, %s12
    $region7: #{tpu_custom_call.1} parent=1 // loop_footer_branch
      %11 = sbr.rel target = $region3
    $region8: #{tpu_custom_call.1} parent=1 // loop_exit
      _
    %6018 = vsyncpa [#allocation3], 1
    %s6019 = scalar_lea.sflag [#allocation3], 1
    %6020 = vsyncpa %s6019, 1

</llo_original>
